<compile_context>
chip_gen: v7x
topology: tpu7x:2x2x1
jax: 0.10.0
libtpu: 0.0.40
codegen_flags: <defaults>
</compile_context>

<pallas_src>
import jax
import jax.numpy as jnp
from jax import lax
from jax.experimental import pallas as pl
from jax.experimental.pallas import tpu as pltpu

# ---- model hyper-parameters (constructor params; shrunk for the small demo) ----
HIDDEN = 32          # hidden_dim  (4H = 128 -> one full lane-width of fused gates)
TEXT_EMB = 64        # text_input_dim  (default would be larger; it is a ctor param)
TOPIC_EMB = 64       # topic_input_dim
NUM_LABELS = 3       # num_labels=3 -> output_dim=3 -> softmax


# --------------------------------------------------------------------------------------
# Single fused kernel: topic BiLSTM -> text BiLSTM (conditioned) -> dense -> softmax
# --------------------------------------------------------------------------------------
def _bicond_kernel(txt_ref, top_ref, txt_len_ref, top_len_ref,
                   wx_top_ref, wh_top_ref, b_top_ref,
                   wx_txt_ref, wh_txt_ref, b_txt_ref,
                   wp_ref, bp_ref,
                   out_ref,
                   xw_top_sc, xw_txt_sc):
    H = wh_top_ref.shape[1]
    B = txt_len_ref.shape[0]
    S_top = top_ref.shape[0] // B
    S_txt = txt_ref.shape[0] // B

    # ---- hoisted input projections: one lane-dense matmul per LSTM; both directions and
    #      all four gates fused on the lane axis (E, 8H); biases (b_ih + b_hh) folded in.
    xw_top_sc[...] = (jnp.dot(top_ref[...], wx_top_ref[...],
                              preferred_element_type=jnp.float32) + b_top_ref[...])
    xw_txt_sc[...] = (jnp.dot(txt_ref[...], wx_txt_ref[...],
                              preferred_element_type=jnp.float32) + b_txt_ref[...])

    top_len = top_len_ref[...]          # (B, 1) int32
    txt_len = txt_len_ref[...]          # (B, 1) int32

    def gate_step(xg, h, c, wh, mask):
        # xg: (B, 4H) precomputed x@Wx + b for this direction/timestep
        g = xg + jnp.dot(h, wh, preferred_element_type=jnp.float32)
        i = jax.nn.sigmoid(g[:, 0 * H:1 * H])
        f = jax.nn.sigmoid(g[:, 1 * H:2 * H])
        gg = jnp.tanh(g[:, 2 * H:3 * H])
        o = jax.nn.sigmoid(g[:, 3 * H:4 * H])
        c_new = f * c + i * gg
        h_new = o * jnp.tanh(c_new)
        # pack_padded_sequence semantics: state only advances while t < length,
        # so the loop-final state equals the state at each example's true last token.
        h = jnp.where(mask, h_new, h)
        c = jnp.where(mask, c_new, c)
        return h, c

    def run_bilstm(S, xw_ref, lens, wh_ref, init):
        def body(t, carry):
            hf, cf, hb, cb = carry
            # forward direction: timestep t
            xf = xw_ref[pl.ds(t * B, B), 0:4 * H]
            hf, cf = gate_step(xf, hf, cf, wh_ref[0], t < lens)
            # backward direction: timestep S-1-t
            tb = S - 1 - t
            xb = xw_ref[pl.ds(tb * B, B), 4 * H:8 * H]
            hb, cb = gate_step(xb, hb, cb, wh_ref[1], tb < lens)
            return hf, cf, hb, cb
        return lax.fori_loop(0, S, body, init, unroll=True)

    zeros = jnp.zeros((B, H), jnp.float32)
    thf, tcf, thb, tcb = run_bilstm(S_top, xw_top_sc, top_len, wh_top_ref,
                                    (zeros, zeros, zeros, zeros))
    # conditional encoding: text LSTM starts from the topic encoder's final (h, c)
    hf, _, hb, _ = run_bilstm(S_txt, xw_txt_sc, txt_len, wh_txt_ref,
                              (thf, tcf, thb, tcb))

    # combo_fb_hm = torch.cat((hn_fwd, hn_bwd), dim=1); dropout(p=0) -> identity.
    # Implemented as split matmuls (== concat(hf, hb) @ Wp) to keep everything lane-dense.
    # TODO(synk): ml.PredictionLayer internals are non-public; reconstructed from the
    # docstring as softmax(tanh(Linear(2*hidden -> num_labels))).
    logits = (jnp.dot(hf, wp_ref[0:H, :], preferred_element_type=jnp.float32)
              + jnp.dot(hb, wp_ref[H:2 * H, :], preferred_element_type=jnp.float32)
              + bp_ref[...])
    z = jnp.tanh(logits)
    z = z - jnp.max(z, axis=-1, keepdims=True)
    e = jnp.exp(z)
    out_ref[...] = e * pl.reciprocal(jnp.sum(e, axis=-1, keepdims=True), approx=True)


# --------------------------------------------------------------------------------------
# Parameters (deterministic synthetic init, PyTorch-like uniform scaling)
# Packed layout: lane axis = [fwd | bwd], each half = [i | f | g | o] blocks of width H.
# --------------------------------------------------------------------------------------
def init_params(key, hid=HIDDEN, e_txt=TEXT_EMB, e_top=TOPIC_EMB, n_out=NUM_LABELS):
    keys = iter(jax.random.split(key, 8))

    def u(shape, scale):
        return jax.random.uniform(next(keys), shape, jnp.float32, -scale, scale)

    k = 1.0 / (hid ** 0.5)
    p = {
        'wx_top': u((e_top, 8 * hid), k),      # topic LSTM: fused input weights, both dirs
        'wh_top': u((2, hid, 4 * hid), k),     # per-direction recurrent weights
        'b_top': u((1, 8 * hid), k),           # b_ih + b_hh folded, both dirs
        'wx_txt': u((e_txt, 8 * hid), k),      # text LSTM
        'wh_txt': u((2, hid, 4 * hid), k),
        'b_txt': u((1, 8 * hid), k),
    }
    kp = 1.0 / ((2 * hid) ** 0.5)
    p['wp'] = u((2 * hid, n_out), kp)          # PredictionLayer dense (2H -> num_labels)
    p['bp'] = u((1, n_out), kp)
    return p


# --------------------------------------------------------------------------------------
# Full forward (mirrors BiCondLSTMModel.forward, eval mode / drop_prob=0)
# --------------------------------------------------------------------------------------
def bicond_lstm_model(text_embeddings, topic_embeddings, text_length, topic_length, params):
    # text_embeddings: (B, S_x, E_x), topic_embeddings: (B, S_t, E_t), lengths: (B,) int
    B, S_txt, E_txt = text_embeddings.shape
    _, S_top, E_top = topic_embeddings.shape
    H = params['wh_top'].shape[1]

    # torch .transpose(0, 1): (B,S,E) -> (S,B,E); flattened time-major so the kernel can do
    # a single (S*B, E) @ (E, 8H) projection per LSTM.
    txt2d = jnp.transpose(text_embeddings, (1, 0, 2)).reshape(S_txt * B, E_txt)
    top2d = jnp.transpose(topic_embeddings, (1, 0, 2)).reshape(S_top * B, E_top)
    txt_len = text_length.astype(jnp.int32).reshape(B, 1)
    top_len = topic_length.astype(jnp.int32).reshape(B, 1)

    ins = (txt2d, top2d, txt_len, top_len,
           params['wx_top'], params['wh_top'], params['b_top'],
           params['wx_txt'], params['wh_txt'], params['b_txt'],
           params['wp'], params['bp'])

    return pl.pallas_call(
        _bicond_kernel,
        out_shape=jax.ShapeDtypeStruct((B, NUM_LABELS), jnp.float32),
        in_specs=[pl.BlockSpec(memory_space=pltpu.MemorySpace.VMEM) for _ in ins],
        out_specs=pl.BlockSpec(memory_space=pltpu.MemorySpace.VMEM),
        scratch_shapes=[pltpu.VMEM((S_top * B, 8 * H), jnp.float32),   # hoisted topic x@Wx+b
                        pltpu.VMEM((S_txt * B, 8 * H), jnp.float32)],  # hoisted text  x@Wx+b
    )(*ins)


if __name__ == "__main__":
    key = jax.random.PRNGKey(0)
    pkey, xkey, tkey = jax.random.split(key, 3)
    params = init_params(pkey)

    B, S_TXT, S_TOP = 2, 8, 4
    text_embeddings = jax.random.normal(xkey, (B, S_TXT, TEXT_EMB), jnp.float32)
    topic_embeddings = jax.random.normal(tkey, (B, S_TOP, TOPIC_EMB), jnp.float32)
    text_length = jnp.array([S_TXT, S_TXT - 2], dtype=jnp.int32)    # ragged batch
    topic_length = jnp.array([S_TOP, S_TOP - 1], dtype=jnp.int32)

    y = bicond_lstm_model(text_embeddings, topic_embeddings,
                          text_length, topic_length, params)
    y = jax.block_until_ready(y)

    assert y.shape == (B, NUM_LABELS)
    assert bool(jnp.all(y >= 0.0)) and bool(jnp.all(y <= 1.0))
    # softmax rows sum to 1 (loose tol: approx reciprocal on the EUP)
    assert bool(jnp.all(jnp.abs(jnp.sum(y, axis=-1) - 1.0) < 1e-2))
    print("KERNEL_OK")
</pallas_src>

<mosaic_0001>
module attributes {stable_mosaic.version = 11 : i64} {
  func.func @_bicond_kernel(%arg0: memref<16x64xf32, #tpu.memory_space<vmem>>, %arg1: memref<8x64xf32, #tpu.memory_space<vmem>>, %arg2: memref<2x1xi32, #tpu.memory_space<vmem>>, %arg3: memref<2x1xi32, #tpu.memory_space<vmem>>, %arg4: memref<64x256xf32, #tpu.memory_space<vmem>>, %arg5: memref<2x32x128xf32, #tpu.memory_space<vmem>>, %arg6: memref<1x256xf32, #tpu.memory_space<vmem>>, %arg7: memref<64x256xf32, #tpu.memory_space<vmem>>, %arg8: memref<2x32x128xf32, #tpu.memory_space<vmem>>, %arg9: memref<1x256xf32, #tpu.memory_space<vmem>>, %arg10: memref<64x3xf32, #tpu.memory_space<vmem>>, %arg11: memref<1x3xf32, #tpu.memory_space<vmem>>, %arg12: memref<2x3xf32, #tpu.memory_space<vmem>>, %arg13: memref<8x256xf32, #tpu.memory_space<vmem>>, %arg14: memref<16x256xf32, #tpu.memory_space<vmem>>) attributes {dimension_semantics = [], scalar_prefetch = 0 : i64, scratch_operands = 2 : i64, tpu.core_type = #tpu.core_type<tc>} {
    %c0 = arith.constant 0 : index
    %c0_0 = arith.constant 0 : index
    %0 = vector.load %arg1[%c0, %c0_0] : memref<8x64xf32, #tpu.memory_space<vmem>>, vector<8x64xf32>
    %c0_1 = arith.constant 0 : index
    %c0_2 = arith.constant 0 : index
    %1 = vector.load %arg4[%c0_1, %c0_2] : memref<64x256xf32, #tpu.memory_space<vmem>>, vector<64x256xf32>
    %cst = arith.constant dense<0.000000e+00> : vector<8x256xf32>
    %2 = tpu.matmul %0, %1, %cst {dimension_numbers = #tpu.dot_dimension_numbers<[1], [0], [0], [1], [0, 0, 1, 1], [], []>} : vector<8x64xf32>, vector<64x256xf32>, vector<8x256xf32> -> vector<8x256xf32>
    %c0_3 = arith.constant 0 : index
    %c0_4 = arith.constant 0 : index
    %3 = vector.load %arg6[%c0_3, %c0_4] : memref<1x256xf32, #tpu.memory_space<vmem>>, vector<1x256xf32>
    %4 = vector.broadcast %3 : vector<1x256xf32> to vector<8x256xf32>
    %5 = arith.addf %2, %4 : vector<8x256xf32>
    %c0_5 = arith.constant 0 : index
    %c0_6 = arith.constant 0 : index
    %6 = vector.load %arg13[%c0_5, %c0_6] : memref<8x256xf32, #tpu.memory_space<vmem>>, vector<8x256xf32>
    tpu.vector_store %arg13[%c0_5, %c0_6], %5 {strides = array<i32>} : memref<8x256xf32, #tpu.memory_space<vmem>>, vector<8x256xf32>,
    %c0_7 = arith.constant 0 : index
    %c0_8 = arith.constant 0 : index
    %7 = vector.load %arg0[%c0_7, %c0_8] : memref<16x64xf32, #tpu.memory_space<vmem>>, vector<16x64xf32>
    %c0_9 = arith.constant 0 : index
    %c0_10 = arith.constant 0 : index
    %8 = vector.load %arg7[%c0_9, %c0_10] : memref<64x256xf32, #tpu.memory_space<vmem>>, vector<64x256xf32>
    %cst_11 = arith.constant dense<0.000000e+00> : vector<16x256xf32>
    %9 = tpu.matmul %7, %8, %cst_11 {dimension_numbers = #tpu.dot_dimension_numbers<[1], [0], [0], [1], [0, 0, 1, 1], [], []>} : vector<16x64xf32>, vector<64x256xf32>, vector<16x256xf32> -> vector<16x256xf32>
    %c0_12 = arith.constant 0 : index
    %c0_13 = arith.constant 0 : index
    %10 = vector.load %arg9[%c0_12, %c0_13] : memref<1x256xf32, #tpu.memory_space<vmem>>, vector<1x256xf32>
    %11 = vector.broadcast %10 : vector<1x256xf32> to vector<16x256xf32>
    %12 = arith.addf %9, %11 : vector<16x256xf32>
    %c0_14 = arith.constant 0 : index
    %c0_15 = arith.constant 0 : index
    %13 = vector.load %arg14[%c0_14, %c0_15] : memref<16x256xf32, #tpu.memory_space<vmem>>, vector<16x256xf32>
    tpu.vector_store %arg14[%c0_14, %c0_15], %12 {strides = array<i32>} : memref<16x256xf32, #tpu.memory_space<vmem>>, vector<16x256xf32>,
    %c0_16 = arith.constant 0 : index
    %c0_17 = arith.constant 0 : index
    %14 = vector.load %arg3[%c0_16, %c0_17] : memref<2x1xi32, #tpu.memory_space<vmem>>, vector<2x1xi32>
    %c0_18 = arith.constant 0 : index
    %c0_19 = arith.constant 0 : index
    %15 = vector.load %arg2[%c0_18, %c0_19] : memref<2x1xi32, #tpu.memory_space<vmem>>, vector<2x1xi32>
    %cst_20 = arith.constant 0.000000e+00 : f32
    %16 = vector.broadcast %cst_20 : f32 to vector<2x32xf32>
    %c0_i32 = arith.constant 0 : i32
    %c2_i32 = arith.constant 2 : i32
    %17 = arith.muli %c0_i32, %c2_i32 : i32
    %18 = arith.index_cast %17 : i32 to index
    %c0_21 = arith.constant 0 : index
    %19 = vector.load %arg13[%18, %c0_21] : memref<8x256xf32, #tpu.memory_space<vmem>>, vector<2x128xf32>
    %c0_22 = arith.constant 0 : index
    %c0_23 = arith.constant 0 : index
    %c0_24 = arith.constant 0 : index
    %20 = vector.load %arg5[%c0_22, %c0_23, %c0_24] : memref<2x32x128xf32, #tpu.memory_space<vmem>>, vector<1x32x128xf32>
    %21 = vector.shape_cast %20 : vector<1x32x128xf32> to vector<32x128xf32>
    %22 = vector.broadcast %c0_i32 : i32 to vector<2x1xi32>
    %23 = arith.cmpi slt, %22, %14 : vector<2x1xi32>
    %cst_25 = arith.constant dense<0.000000e+00> : vector<2x128xf32>
    %24 = tpu.matmul %16, %21, %cst_25 {dimension_numbers = #tpu.dot_dimension_numbers<[1], [0], [0], [1], [0, 0, 1, 1], [], []>} : vector<2x32xf32>, vector<32x128xf32>, vector<2x128xf32> -> vector<2x128xf32>
    %25 = arith.addf %19, %24 : vector<2x128xf32>
    %26 = vector.extract_strided_slice %25 {offsets = [0, 0], sizes = [2, 32], strides = [1, 1]} : vector<2x128xf32> to vector<2x32xf32>
    %27 = arith.negf %26 : vector<2x32xf32>
    %28 = math.exp %27 : vector<2x32xf32>
    %cst_26 = arith.constant 1.000000e+00 : f32
    %29 = vector.broadcast %cst_26 : f32 to vector<2x32xf32>
    %30 = arith.addf %29, %28 : vector<2x32xf32>
    %31 = arith.divf %29, %30 : vector<2x32xf32>
    %32 = vector.extract_strided_slice %25 {offsets = [0, 32], sizes = [2, 32], strides = [1, 1]} : vector<2x128xf32> to vector<2x32xf32>
    %33 = arith.negf %32 : vector<2x32xf32>
    %34 = math.exp %33 : vector<2x32xf32>
    %cst_27 = arith.constant 1.000000e+00 : f32
    %35 = vector.broadcast %cst_27 : f32 to vector<2x32xf32>
    %36 = arith.addf %35, %34 : vector<2x32xf32>
    %37 = arith.divf %35, %36 : vector<2x32xf32>
    %38 = vector.extract_strided_slice %25 {offsets = [0, 64], sizes = [2, 32], strides = [1, 1]} : vector<2x128xf32> to vector<2x32xf32>
    %39 = math.tanh %38 : vector<2x32xf32>
    %40 = vector.extract_strided_slice %25 {offsets = [0, 96], sizes = [2, 32], strides = [1, 1]} : vector<2x128xf32> to vector<2x32xf32>
    %41 = arith.negf %40 : vector<2x32xf32>
    %42 = math.exp %41 : vector<2x32xf32>
    %cst_28 = arith.constant 1.000000e+00 : f32
    %43 = vector.broadcast %cst_28 : f32 to vector<2x32xf32>
    %44 = arith.addf %43, %42 : vector<2x32xf32>
    %45 = arith.divf %43, %44 : vector<2x32xf32>
    %46 = arith.mulf %37, %16 : vector<2x32xf32>
    %47 = arith.mulf %31, %39 : vector<2x32xf32>
    %48 = arith.addf %46, %47 : vector<2x32xf32>
    %49 = math.tanh %48 : vector<2x32xf32>
    %50 = arith.mulf %45, %49 : vector<2x32xf32>
    %51 = vector.shape_cast %23 : vector<2x1xi1> to vector<2x1xi1>
    %52 = vector.broadcast %51 : vector<2x1xi1> to vector<2x32xi1>
    %53 = arith.select %52, %50, %16 : vector<2x32xi1>, vector<2x32xf32>
    %54 = vector.shape_cast %23 : vector<2x1xi1> to vector<2x1xi1>
    %55 = vector.broadcast %54 : vector<2x1xi1> to vector<2x32xi1>
    %56 = arith.select %55, %48, %16 : vector<2x32xi1>, vector<2x32xf32>
    %c3_i32 = arith.constant 3 : i32
    %57 = arith.subi %c3_i32, %c0_i32 : i32
    %c2_i32_29 = arith.constant 2 : i32
    %58 = arith.muli %57, %c2_i32_29 : i32
    %59 = arith.index_cast %58 : i32 to index
    %c128 = arith.constant 128 : index
    %60 = vector.load %arg13[%59, %c128] : memref<8x256xf32, #tpu.memory_space<vmem>>, vector<2x128xf32>
    %c1 = arith.constant 1 : index
    %c0_30 = arith.constant 0 : index
    %c0_31 = arith.constant 0 : index
    %61 = vector.load %arg5[%c1, %c0_30, %c0_31] : memref<2x32x128xf32, #tpu.memory_space<vmem>>, vector<1x32x128xf32>
    %62 = vector.shape_cast %61 : vector<1x32x128xf32> to vector<32x128xf32>
    %63 = vector.broadcast %57 : i32 to vector<2x1xi32>
    %64 = arith.cmpi slt, %63, %14 : vector<2x1xi32>
    %cst_32 = arith.constant dense<0.000000e+00> : vector<2x128xf32>
    %65 = tpu.matmul %16, %62, %cst_32 {dimension_numbers = #tpu.dot_dimension_numbers<[1], [0], [0], [1], [0, 0, 1, 1], [], []>} : vector<2x32xf32>, vector<32x128xf32>, vector<2x128xf32> -> vector<2x128xf32>
    %66 = arith.addf %60, %65 : vector<2x128xf32>
    %67 = vector.extract_strided_slice %66 {offsets = [0, 0], sizes = [2, 32], strides = [1, 1]} : vector<2x128xf32> to vector<2x32xf32>
    %68 = arith.negf %67 : vector<2x32xf32>
    %69 = math.exp %68 : vector<2x32xf32>
    %cst_33 = arith.constant 1.000000e+00 : f32
    %70 = vector.broadcast %cst_33 : f32 to vector<2x32xf32>
    %71 = arith.addf %70, %69 : vector<2x32xf32>
    %72 = arith.divf %70, %71 : vector<2x32xf32>
    %73 = vector.extract_strided_slice %66 {offsets = [0, 32], sizes = [2, 32], strides = [1, 1]} : vector<2x128xf32> to vector<2x32xf32>
    %74 = arith.negf %73 : vector<2x32xf32>
    %75 = math.exp %74 : vector<2x32xf32>
    %cst_34 = arith.constant 1.000000e+00 : f32
    %76 = vector.broadcast %cst_34 : f32 to vector<2x32xf32>
    %77 = arith.addf %76, %75 : vector<2x32xf32>
    %78 = arith.divf %76, %77 : vector<2x32xf32>
    %79 = vector.extract_strided_slice %66 {offsets = [0, 64], sizes = [2, 32], strides = [1, 1]} : vector<2x128xf32> to vector<2x32xf32>
    %80 = math.tanh %79 : vector<2x32xf32>
    %81 = vector.extract_strided_slice %66 {offsets = [0, 96], sizes = [2, 32], strides = [1, 1]} : vector<2x128xf32> to vector<2x32xf32>
    %82 = arith.negf %81 : vector<2x32xf32>
    %83 = math.exp %82 : vector<2x32xf32>
    %cst_35 = arith.constant 1.000000e+00 : f32
    %84 = vector.broadcast %cst_35 : f32 to vector<2x32xf32>
    %85 = arith.addf %84, %83 : vector<2x32xf32>
    %86 = arith.divf %84, %85 : vector<2x32xf32>
    %87 = arith.mulf %78, %16 : vector<2x32xf32>
    %88 = arith.mulf %72, %80 : vector<2x32xf32>
    %89 = arith.addf %87, %88 : vector<2x32xf32>
    %90 = math.tanh %89 : vector<2x32xf32>
    %91 = arith.mulf %86, %90 : vector<2x32xf32>
    %92 = vector.shape_cast %64 : vector<2x1xi1> to vector<2x1xi1>
    %93 = vector.broadcast %92 : vector<2x1xi1> to vector<2x32xi1>
    %94 = arith.select %93, %91, %16 : vector<2x32xi1>, vector<2x32xf32>
    %95 = vector.shape_cast %64 : vector<2x1xi1> to vector<2x1xi1>
    %96 = vector.broadcast %95 : vector<2x1xi1> to vector<2x32xi1>
    %97 = arith.select %96, %89, %16 : vector<2x32xi1>, vector<2x32xf32>
    %c1_i32 = arith.constant 1 : i32
    %c2_i32_36 = arith.constant 2 : i32
    %98 = arith.muli %c1_i32, %c2_i32_36 : i32
    %99 = arith.index_cast %98 : i32 to index
    %c0_37 = arith.constant 0 : index
    %100 = vector.load %arg13[%99, %c0_37] : memref<8x256xf32, #tpu.memory_space<vmem>>, vector<2x128xf32>
    %c0_38 = arith.constant 0 : index
    %c0_39 = arith.constant 0 : index
    %c0_40 = arith.constant 0 : index
    %101 = vector.load %arg5[%c0_38, %c0_39, %c0_40] : memref<2x32x128xf32, #tpu.memory_space<vmem>>, vector<1x32x128xf32>
    %102 = vector.shape_cast %101 : vector<1x32x128xf32> to vector<32x128xf32>
    %103 = vector.broadcast %c1_i32 : i32 to vector<2x1xi32>
    %104 = arith.cmpi slt, %103, %14 : vector<2x1xi32>
    %cst_41 = arith.constant dense<0.000000e+00> : vector<2x128xf32>
    %105 = tpu.matmul %53, %102, %cst_41 {dimension_numbers = #tpu.dot_dimension_numbers<[1], [0], [0], [1], [0, 0, 1, 1], [], []>} : vector<2x32xf32>, vector<32x128xf32>, vector<2x128xf32> -> vector<2x128xf32>
    %106 = arith.addf %100, %105 : vector<2x128xf32>
    %107 = vector.extract_strided_slice %106 {offsets = [0, 0], sizes = [2, 32], strides = [1, 1]} : vector<2x128xf32> to vector<2x32xf32>
    %108 = arith.negf %107 : vector<2x32xf32>
    %109 = math.exp %108 : vector<2x32xf32>
    %cst_42 = arith.constant 1.000000e+00 : f32
    %110 = vector.broadcast %cst_42 : f32 to vector<2x32xf32>
    %111 = arith.addf %110, %109 : vector<2x32xf32>
    %112 = arith.divf %110, %111 : vector<2x32xf32>
    %113 = vector.extract_strided_slice %106 {offsets = [0, 32], sizes = [2, 32], strides = [1, 1]} : vector<2x128xf32> to vector<2x32xf32>
    %114 = arith.negf %113 : vector<2x32xf32>
    %115 = math.exp %114 : vector<2x32xf32>
    %cst_43 = arith.constant 1.000000e+00 : f32
    %116 = vector.broadcast %cst_43 : f32 to vector<2x32xf32>
    %117 = arith.addf %116, %115 : vector<2x32xf32>
    %118 = arith.divf %116, %117 : vector<2x32xf32>
    %119 = vector.extract_strided_slice %106 {offsets = [0, 64], sizes = [2, 32], strides = [1, 1]} : vector<2x128xf32> to vector<2x32xf32>
    %120 = math.tanh %119 : vector<2x32xf32>
    %121 = vector.extract_strided_slice %106 {offsets = [0, 96], sizes = [2, 32], strides = [1, 1]} : vector<2x128xf32> to vector<2x32xf32>
    %122 = arith.negf %121 : vector<2x32xf32>
    %123 = math.exp %122 : vector<2x32xf32>
    %cst_44 = arith.constant 1.000000e+00 : f32
    %124 = vector.broadcast %cst_44 : f32 to vector<2x32xf32>
    %125 = arith.addf %124, %123 : vector<2x32xf32>
    %126 = arith.divf %124, %125 : vector<2x32xf32>
    %127 = arith.mulf %118, %56 : vector<2x32xf32>
    %128 = arith.mulf %112, %120 : vector<2x32xf32>
    %129 = arith.addf %127, %128 : vector<2x32xf32>
    %130 = math.tanh %129 : vector<2x32xf32>
    %131 = arith.mulf %126, %130 : vector<2x32xf32>
    %132 = vector.shape_cast %104 : vector<2x1xi1> to vector<2x1xi1>
    %133 = vector.broadcast %132 : vector<2x1xi1> to vector<2x32xi1>
    %134 = arith.select %133, %131, %53 : vector<2x32xi1>, vector<2x32xf32>
    %135 = vector.shape_cast %104 : vector<2x1xi1> to vector<2x1xi1>
    %136 = vector.broadcast %135 : vector<2x1xi1> to vector<2x32xi1>
    %137 = arith.select %136, %129, %56 : vector<2x32xi1>, vector<2x32xf32>
    %c3_i32_45 = arith.constant 3 : i32
    %138 = arith.subi %c3_i32_45, %c1_i32 : i32
    %c2_i32_46 = arith.constant 2 : i32
    %139 = arith.muli %138, %c2_i32_46 : i32
    %140 = arith.index_cast %139 : i32 to index
    %c128_47 = arith.constant 128 : index
    %141 = vector.load %arg13[%140, %c128_47] : memref<8x256xf32, #tpu.memory_space<vmem>>, vector<2x128xf32>
    %c1_48 = arith.constant 1 : index
    %c0_49 = arith.constant 0 : index
    %c0_50 = arith.constant 0 : index
    %142 = vector.load %arg5[%c1_48, %c0_49, %c0_50] : memref<2x32x128xf32, #tpu.memory_space<vmem>>, vector<1x32x128xf32>
    %143 = vector.shape_cast %142 : vector<1x32x128xf32> to vector<32x128xf32>
    %144 = vector.broadcast %138 : i32 to vector<2x1xi32>
    %145 = arith.cmpi slt, %144, %14 : vector<2x1xi32>
    %cst_51 = arith.constant dense<0.000000e+00> : vector<2x128xf32>
    %146 = tpu.matmul %94, %143, %cst_51 {dimension_numbers = #tpu.dot_dimension_numbers<[1], [0], [0], [1], [0, 0, 1, 1], [], []>} : vector<2x32xf32>, vector<32x128xf32>, vector<2x128xf32> -> vector<2x128xf32>
    %147 = arith.addf %141, %146 : vector<2x128xf32>
    %148 = vector.extract_strided_slice %147 {offsets = [0, 0], sizes = [2, 32], strides = [1, 1]} : vector<2x128xf32> to vector<2x32xf32>
    %149 = arith.negf %148 : vector<2x32xf32>
    %150 = math.exp %149 : vector<2x32xf32>
    %cst_52 = arith.constant 1.000000e+00 : f32
    %151 = vector.broadcast %cst_52 : f32 to vector<2x32xf32>
    %152 = arith.addf %151, %150 : vector<2x32xf32>
    %153 = arith.divf %151, %152 : vector<2x32xf32>
    %154 = vector.extract_strided_slice %147 {offsets = [0, 32], sizes = [2, 32], strides = [1, 1]} : vector<2x128xf32> to vector<2x32xf32>
    %155 = arith.negf %154 : vector<2x32xf32>
    %156 = math.exp %155 : vector<2x32xf32>
    %cst_53 = arith.constant 1.000000e+00 : f32
    %157 = vector.broadcast %cst_53 : f32 to vector<2x32xf32>
    %158 = arith.addf %157, %156 : vector<2x32xf32>
    %159 = arith.divf %157, %158 : vector<2x32xf32>
    %160 = vector.extract_strided_slice %147 {offsets = [0, 64], sizes = [2, 32], strides = [1, 1]} : vector<2x128xf32> to vector<2x32xf32>
    %161 = math.tanh %160 : vector<2x32xf32>
    %162 = vector.extract_strided_slice %147 {offsets = [0, 96], sizes = [2, 32], strides = [1, 1]} : vector<2x128xf32> to vector<2x32xf32>
    %163 = arith.negf %162 : vector<2x32xf32>
    %164 = math.exp %163 : vector<2x32xf32>
    %cst_54 = arith.constant 1.000000e+00 : f32
    %165 = vector.broadcast %cst_54 : f32 to vector<2x32xf32>
    %166 = arith.addf %165, %164 : vector<2x32xf32>
    %167 = arith.divf %165, %166 : vector<2x32xf32>
    %168 = arith.mulf %159, %97 : vector<2x32xf32>
    %169 = arith.mulf %153, %161 : vector<2x32xf32>
    %170 = arith.addf %168, %169 : vector<2x32xf32>
    %171 = math.tanh %170 : vector<2x32xf32>
    %172 = arith.mulf %167, %171 : vector<2x32xf32>
    %173 = vector.shape_cast %145 : vector<2x1xi1> to vector<2x1xi1>
    %174 = vector.broadcast %173 : vector<2x1xi1> to vector<2x32xi1>
    %175 = arith.select %174, %172, %94 : vector<2x32xi1>, vector<2x32xf32>
    %176 = vector.shape_cast %145 : vector<2x1xi1> to vector<2x1xi1>
    %177 = vector.broadcast %176 : vector<2x1xi1> to vector<2x32xi1>
    %178 = arith.select %177, %170, %97 : vector<2x32xi1>, vector<2x32xf32>
    %c2_i32_55 = arith.constant 2 : i32
    %c2_i32_56 = arith.constant 2 : i32
    %179 = arith.muli %c2_i32_55, %c2_i32_56 : i32
    %180 = arith.index_cast %179 : i32 to index
    %c0_57 = arith.constant 0 : index
    %181 = vector.load %arg13[%180, %c0_57] : memref<8x256xf32, #tpu.memory_space<vmem>>, vector<2x128xf32>
    %c0_58 = arith.constant 0 : index
    %c0_59 = arith.constant 0 : index
    %c0_60 = arith.constant 0 : index
    %182 = vector.load %arg5[%c0_58, %c0_59, %c0_60] : memref<2x32x128xf32, #tpu.memory_space<vmem>>, vector<1x32x128xf32>
    %183 = vector.shape_cast %182 : vector<1x32x128xf32> to vector<32x128xf32>
    %184 = vector.broadcast %c2_i32_55 : i32 to vector<2x1xi32>
    %185 = arith.cmpi slt, %184, %14 : vector<2x1xi32>
    %cst_61 = arith.constant dense<0.000000e+00> : vector<2x128xf32>
    %186 = tpu.matmul %134, %183, %cst_61 {dimension_numbers = #tpu.dot_dimension_numbers<[1], [0], [0], [1], [0, 0, 1, 1], [], []>} : vector<2x32xf32>, vector<32x128xf32>, vector<2x128xf32> -> vector<2x128xf32>
    %187 = arith.addf %181, %186 : vector<2x128xf32>
    %188 = vector.extract_strided_slice %187 {offsets = [0, 0], sizes = [2, 32], strides = [1, 1]} : vector<2x128xf32> to vector<2x32xf32>
    %189 = arith.negf %188 : vector<2x32xf32>
    %190 = math.exp %189 : vector<2x32xf32>
    %cst_62 = arith.constant 1.000000e+00 : f32
    %191 = vector.broadcast %cst_62 : f32 to vector<2x32xf32>
    %192 = arith.addf %191, %190 : vector<2x32xf32>
    %193 = arith.divf %191, %192 : vector<2x32xf32>
    %194 = vector.extract_strided_slice %187 {offsets = [0, 32], sizes = [2, 32], strides = [1, 1]} : vector<2x128xf32> to vector<2x32xf32>
    %195 = arith.negf %194 : vector<2x32xf32>
    %196 = math.exp %195 : vector<2x32xf32>
    %cst_63 = arith.constant 1.000000e+00 : f32
    %197 = vector.broadcast %cst_63 : f32 to vector<2x32xf32>
    %198 = arith.addf %197, %196 : vector<2x32xf32>
    %199 = arith.divf %197, %198 : vector<2x32xf32>
    %200 = vector.extract_strided_slice %187 {offsets = [0, 64], sizes = [2, 32], strides = [1, 1]} : vector<2x128xf32> to vector<2x32xf32>
    %201 = math.tanh %200 : vector<2x32xf32>
    %202 = vector.extract_strided_slice %187 {offsets = [0, 96], sizes = [2, 32], strides = [1, 1]} : vector<2x128xf32> to vector<2x32xf32>
    %203 = arith.negf %202 : vector<2x32xf32>
    %204 = math.exp %203 : vector<2x32xf32>
    %cst_64 = arith.constant 1.000000e+00 : f32
    %205 = vector.broadcast %cst_64 : f32 to vector<2x32xf32>
    %206 = arith.addf %205, %204 : vector<2x32xf32>
    %207 = arith.divf %205, %206 : vector<2x32xf32>
    %208 = arith.mulf %199, %137 : vector<2x32xf32>
    %209 = arith.mulf %193, %201 : vector<2x32xf32>
    %210 = arith.addf %208, %209 : vector<2x32xf32>
    %211 = math.tanh %210 : vector<2x32xf32>
    %212 = arith.mulf %207, %211 : vector<2x32xf32>
    %213 = vector.shape_cast %185 : vector<2x1xi1> to vector<2x1xi1>
    %214 = vector.broadcast %213 : vector<2x1xi1> to vector<2x32xi1>
    %215 = arith.select %214, %212, %134 : vector<2x32xi1>, vector<2x32xf32>
    %216 = vector.shape_cast %185 : vector<2x1xi1> to vector<2x1xi1>
    %217 = vector.broadcast %216 : vector<2x1xi1> to vector<2x32xi1>
    %218 = arith.select %217, %210, %137 : vector<2x32xi1>, vector<2x32xf32>
    %c3_i32_65 = arith.constant 3 : i32
    %219 = arith.subi %c3_i32_65, %c2_i32_55 : i32
    %c2_i32_66 = arith.constant 2 : i32
    %220 = arith.muli %219, %c2_i32_66 : i32
    %221 = arith.index_cast %220 : i32 to index
    %c128_67 = arith.constant 128 : index
    %222 = vector.load %arg13[%221, %c128_67] : memref<8x256xf32, #tpu.memory_space<vmem>>, vector<2x128xf32>
    %c1_68 = arith.constant 1 : index
    %c0_69 = arith.constant 0 : index
    %c0_70 = arith.constant 0 : index
    %223 = vector.load %arg5[%c1_68, %c0_69, %c0_70] : memref<2x32x128xf32, #tpu.memory_space<vmem>>, vector<1x32x128xf32>
    %224 = vector.shape_cast %223 : vector<1x32x128xf32> to vector<32x128xf32>
    %225 = vector.broadcast %219 : i32 to vector<2x1xi32>
    %226 = arith.cmpi slt, %225, %14 : vector<2x1xi32>
    %cst_71 = arith.constant dense<0.000000e+00> : vector<2x128xf32>
    %227 = tpu.matmul %175, %224, %cst_71 {dimension_numbers = #tpu.dot_dimension_numbers<[1], [0], [0], [1], [0, 0, 1, 1], [], []>} : vector<2x32xf32>, vector<32x128xf32>, vector<2x128xf32> -> vector<2x128xf32>
    %228 = arith.addf %222, %227 : vector<2x128xf32>
    %229 = vector.extract_strided_slice %228 {offsets = [0, 0], sizes = [2, 32], strides = [1, 1]} : vector<2x128xf32> to vector<2x32xf32>
    %230 = arith.negf %229 : vector<2x32xf32>
    %231 = math.exp %230 : vector<2x32xf32>
    %cst_72 = arith.constant 1.000000e+00 : f32
    %232 = vector.broadcast %cst_72 : f32 to vector<2x32xf32>
    %233 = arith.addf %232, %231 : vector<2x32xf32>
    %234 = arith.divf %232, %233 : vector<2x32xf32>
    %235 = vector.extract_strided_slice %228 {offsets = [0, 32], sizes = [2, 32], strides = [1, 1]} : vector<2x128xf32> to vector<2x32xf32>
    %236 = arith.negf %235 : vector<2x32xf32>
    %237 = math.exp %236 : vector<2x32xf32>
    %cst_73 = arith.constant 1.000000e+00 : f32
    %238 = vector.broadcast %cst_73 : f32 to vector<2x32xf32>
    %239 = arith.addf %238, %237 : vector<2x32xf32>
    %240 = arith.divf %238, %239 : vector<2x32xf32>
    %241 = vector.extract_strided_slice %228 {offsets = [0, 64], sizes = [2, 32], strides = [1, 1]} : vector<2x128xf32> to vector<2x32xf32>
    %242 = math.tanh %241 : vector<2x32xf32>
    %243 = vector.extract_strided_slice %228 {offsets = [0, 96], sizes = [2, 32], strides = [1, 1]} : vector<2x128xf32> to vector<2x32xf32>
    %244 = arith.negf %243 : vector<2x32xf32>
    %245 = math.exp %244 : vector<2x32xf32>
    %cst_74 = arith.constant 1.000000e+00 : f32
    %246 = vector.broadcast %cst_74 : f32 to vector<2x32xf32>
    %247 = arith.addf %246, %245 : vector<2x32xf32>
    %248 = arith.divf %246, %247 : vector<2x32xf32>
    %249 = arith.mulf %240, %178 : vector<2x32xf32>
    %250 = arith.mulf %234, %242 : vector<2x32xf32>
    %251 = arith.addf %249, %250 : vector<2x32xf32>
    %252 = math.tanh %251 : vector<2x32xf32>
    %253 = arith.mulf %248, %252 : vector<2x32xf32>
    %254 = vector.shape_cast %226 : vector<2x1xi1> to vector<2x1xi1>
    %255 = vector.broadcast %254 : vector<2x1xi1> to vector<2x32xi1>
    %256 = arith.select %255, %253, %175 : vector<2x32xi1>, vector<2x32xf32>
    %257 = vector.shape_cast %226 : vector<2x1xi1> to vector<2x1xi1>
    %258 = vector.broadcast %257 : vector<2x1xi1> to vector<2x32xi1>
    %259 = arith.select %258, %251, %178 : vector<2x32xi1>, vector<2x32xf32>
    %c3_i32_75 = arith.constant 3 : i32
    %c2_i32_76 = arith.constant 2 : i32
    %260 = arith.muli %c3_i32_75, %c2_i32_76 : i32
    %261 = arith.index_cast %260 : i32 to index
    %c0_77 = arith.constant 0 : index
    %262 = vector.load %arg13[%261, %c0_77] : memref<8x256xf32, #tpu.memory_space<vmem>>, vector<2x128xf32>
    %c0_78 = arith.constant 0 : index
    %c0_79 = arith.constant 0 : index
    %c0_80 = arith.constant 0 : index
    %263 = vector.load %arg5[%c0_78, %c0_79, %c0_80] : memref<2x32x128xf32, #tpu.memory_space<vmem>>, vector<1x32x128xf32>
    %264 = vector.shape_cast %263 : vector<1x32x128xf32> to vector<32x128xf32>
    %265 = vector.broadcast %c3_i32_75 : i32 to vector<2x1xi32>
    %266 = arith.cmpi slt, %265, %14 : vector<2x1xi32>
    %cst_81 = arith.constant dense<0.000000e+00> : vector<2x128xf32>
    %267 = tpu.matmul %215, %264, %cst_81 {dimension_numbers = #tpu.dot_dimension_numbers<[1], [0], [0], [1], [0, 0, 1, 1], [], []>} : vector<2x32xf32>, vector<32x128xf32>, vector<2x128xf32> -> vector<2x128xf32>
    %268 = arith.addf %262, %267 : vector<2x128xf32>
    %269 = vector.extract_strided_slice %268 {offsets = [0, 0], sizes = [2, 32], strides = [1, 1]} : vector<2x128xf32> to vector<2x32xf32>
    %270 = arith.negf %269 : vector<2x32xf32>
    %271 = math.exp %270 : vector<2x32xf32>
    %cst_82 = arith.constant 1.000000e+00 : f32
    %272 = vector.broadcast %cst_82 : f32 to vector<2x32xf32>
    %273 = arith.addf %272, %271 : vector<2x32xf32>
    %274 = arith.divf %272, %273 : vector<2x32xf32>
    %275 = vector.extract_strided_slice %268 {offsets = [0, 32], sizes = [2, 32], strides = [1, 1]} : vector<2x128xf32> to vector<2x32xf32>
    %276 = arith.negf %275 : vector<2x32xf32>
    %277 = math.exp %276 : vector<2x32xf32>
    %cst_83 = arith.constant 1.000000e+00 : f32
    %278 = vector.broadcast %cst_83 : f32 to vector<2x32xf32>
    %279 = arith.addf %278, %277 : vector<2x32xf32>
    %280 = arith.divf %278, %279 : vector<2x32xf32>
    %281 = vector.extract_strided_slice %268 {offsets = [0, 64], sizes = [2, 32], strides = [1, 1]} : vector<2x128xf32> to vector<2x32xf32>
    %282 = math.tanh %281 : vector<2x32xf32>
    %283 = vector.extract_strided_slice %268 {offsets = [0, 96], sizes = [2, 32], strides = [1, 1]} : vector<2x128xf32> to vector<2x32xf32>
    %284 = arith.negf %283 : vector<2x32xf32>
    %285 = math.exp %284 : vector<2x32xf32>
    %cst_84 = arith.constant 1.000000e+00 : f32
    %286 = vector.broadcast %cst_84 : f32 to vector<2x32xf32>
    %287 = arith.addf %286, %285 : vector<2x32xf32>
    %288 = arith.divf %286, %287 : vector<2x32xf32>
    %289 = arith.mulf %280, %218 : vector<2x32xf32>
    %290 = arith.mulf %274, %282 : vector<2x32xf32>
    %291 = arith.addf %289, %290 : vector<2x32xf32>
    %292 = math.tanh %291 : vector<2x32xf32>
    %293 = arith.mulf %288, %292 : vector<2x32xf32>
    %294 = vector.shape_cast %266 : vector<2x1xi1> to vector<2x1xi1>
    %295 = vector.broadcast %294 : vector<2x1xi1> to vector<2x32xi1>
    %296 = arith.select %295, %293, %215 : vector<2x32xi1>, vector<2x32xf32>
    %297 = vector.shape_cast %266 : vector<2x1xi1> to vector<2x1xi1>
    %298 = vector.broadcast %297 : vector<2x1xi1> to vector<2x32xi1>
    %299 = arith.select %298, %291, %218 : vector<2x32xi1>, vector<2x32xf32>
    %c3_i32_85 = arith.constant 3 : i32
    %300 = arith.subi %c3_i32_85, %c3_i32_75 : i32
    %c2_i32_86 = arith.constant 2 : i32
    %301 = arith.muli %300, %c2_i32_86 : i32
    %302 = arith.index_cast %301 : i32 to index
    %c128_87 = arith.constant 128 : index
    %303 = vector.load %arg13[%302, %c128_87] : memref<8x256xf32, #tpu.memory_space<vmem>>, vector<2x128xf32>
    %c1_88 = arith.constant 1 : index
    %c0_89 = arith.constant 0 : index
    %c0_90 = arith.constant 0 : index
    %304 = vector.load %arg5[%c1_88, %c0_89, %c0_90] : memref<2x32x128xf32, #tpu.memory_space<vmem>>, vector<1x32x128xf32>
    %305 = vector.shape_cast %304 : vector<1x32x128xf32> to vector<32x128xf32>
    %306 = vector.broadcast %300 : i32 to vector<2x1xi32>
    %307 = arith.cmpi slt, %306, %14 : vector<2x1xi32>
    %cst_91 = arith.constant dense<0.000000e+00> : vector<2x128xf32>
    %308 = tpu.matmul %256, %305, %cst_91 {dimension_numbers = #tpu.dot_dimension_numbers<[1], [0], [0], [1], [0, 0, 1, 1], [], []>} : vector<2x32xf32>, vector<32x128xf32>, vector<2x128xf32> -> vector<2x128xf32>
    %309 = arith.addf %303, %308 : vector<2x128xf32>
    %310 = vector.extract_strided_slice %309 {offsets = [0, 0], sizes = [2, 32], strides = [1, 1]} : vector<2x128xf32> to vector<2x32xf32>
    %311 = arith.negf %310 : vector<2x32xf32>
    %312 = math.exp %311 : vector<2x32xf32>
    %cst_92 = arith.constant 1.000000e+00 : f32
    %313 = vector.broadcast %cst_92 : f32 to vector<2x32xf32>
    %314 = arith.addf %313, %312 : vector<2x32xf32>
    %315 = arith.divf %313, %314 : vector<2x32xf32>
    %316 = vector.extract_strided_slice %309 {offsets = [0, 32], sizes = [2, 32], strides = [1, 1]} : vector<2x128xf32> to vector<2x32xf32>
    %317 = arith.negf %316 : vector<2x32xf32>
    %318 = math.exp %317 : vector<2x32xf32>
    %cst_93 = arith.constant 1.000000e+00 : f32
    %319 = vector.broadcast %cst_93 : f32 to vector<2x32xf32>
    %320 = arith.addf %319, %318 : vector<2x32xf32>
    %321 = arith.divf %319, %320 : vector<2x32xf32>
    %322 = vector.extract_strided_slice %309 {offsets = [0, 64], sizes = [2, 32], strides = [1, 1]} : vector<2x128xf32> to vector<2x32xf32>
    %323 = math.tanh %322 : vector<2x32xf32>
    %324 = vector.extract_strided_slice %309 {offsets = [0, 96], sizes = [2, 32], strides = [1, 1]} : vector<2x128xf32> to vector<2x32xf32>
    %325 = arith.negf %324 : vector<2x32xf32>
    %326 = math.exp %325 : vector<2x32xf32>
    %cst_94 = arith.constant 1.000000e+00 : f32
    %327 = vector.broadcast %cst_94 : f32 to vector<2x32xf32>
    %328 = arith.addf %327, %326 : vector<2x32xf32>
    %329 = arith.divf %327, %328 : vector<2x32xf32>
    %330 = arith.mulf %321, %259 : vector<2x32xf32>
    %331 = arith.mulf %315, %323 : vector<2x32xf32>
    %332 = arith.addf %330, %331 : vector<2x32xf32>
    %333 = math.tanh %332 : vector<2x32xf32>
    %334 = arith.mulf %329, %333 : vector<2x32xf32>
    %335 = vector.shape_cast %307 : vector<2x1xi1> to vector<2x1xi1>
    %336 = vector.broadcast %335 : vector<2x1xi1> to vector<2x32xi1>
    %337 = arith.select %336, %334, %256 : vector<2x32xi1>, vector<2x32xf32>
    %338 = vector.shape_cast %307 : vector<2x1xi1> to vector<2x1xi1>
    %339 = vector.broadcast %338 : vector<2x1xi1> to vector<2x32xi1>
    %340 = arith.select %339, %332, %259 : vector<2x32xi1>, vector<2x32xf32>
    %c4_i32 = arith.constant 4 : i32
    %c0_i32_95 = arith.constant 0 : i32
    %c2_i32_96 = arith.constant 2 : i32
    %341 = arith.muli %c0_i32_95, %c2_i32_96 : i32
    %342 = arith.index_cast %341 : i32 to index
    %c0_97 = arith.constant 0 : index
    %343 = vector.load %arg14[%342, %c0_97] : memref<16x256xf32, #tpu.memory_space<vmem>>, vector<2x128xf32>
    %c0_98 = arith.constant 0 : index
    %c0_99 = arith.constant 0 : index
    %c0_100 = arith.constant 0 : index
    %344 = vector.load %arg8[%c0_98, %c0_99, %c0_100] : memref<2x32x128xf32, #tpu.memory_space<vmem>>, vector<1x32x128xf32>
    %345 = vector.shape_cast %344 : vector<1x32x128xf32> to vector<32x128xf32>
    %346 = vector.broadcast %c0_i32_95 : i32 to vector<2x1xi32>
    %347 = arith.cmpi slt, %346, %15 : vector<2x1xi32>
    %cst_101 = arith.constant dense<0.000000e+00> : vector<2x128xf32>
    %348 = tpu.matmul %296, %345, %cst_101 {dimension_numbers = #tpu.dot_dimension_numbers<[1], [0], [0], [1], [0, 0, 1, 1], [], []>} : vector<2x32xf32>, vector<32x128xf32>, vector<2x128xf32> -> vector<2x128xf32>
    %349 = arith.addf %343, %348 : vector<2x128xf32>
    %350 = vector.extract_strided_slice %349 {offsets = [0, 0], sizes = [2, 32], strides = [1, 1]} : vector<2x128xf32> to vector<2x32xf32>
    %351 = arith.negf %350 : vector<2x32xf32>
    %352 = math.exp %351 : vector<2x32xf32>
    %cst_102 = arith.constant 1.000000e+00 : f32
    %353 = vector.broadcast %cst_102 : f32 to vector<2x32xf32>
    %354 = arith.addf %353, %352 : vector<2x32xf32>
    %355 = arith.divf %353, %354 : vector<2x32xf32>
    %356 = vector.extract_strided_slice %349 {offsets = [0, 32], sizes = [2, 32], strides = [1, 1]} : vector<2x128xf32> to vector<2x32xf32>
    %357 = arith.negf %356 : vector<2x32xf32>
    %358 = math.exp %357 : vector<2x32xf32>
    %cst_103 = arith.constant 1.000000e+00 : f32
    %359 = vector.broadcast %cst_103 : f32 to vector<2x32xf32>
    %360 = arith.addf %359, %358 : vector<2x32xf32>
    %361 = arith.divf %359, %360 : vector<2x32xf32>
    %362 = vector.extract_strided_slice %349 {offsets = [0, 64], sizes = [2, 32], strides = [1, 1]} : vector<2x128xf32> to vector<2x32xf32>
    %363 = math.tanh %362 : vector<2x32xf32>
    %364 = vector.extract_strided_slice %349 {offsets = [0, 96], sizes = [2, 32], strides = [1, 1]} : vector<2x128xf32> to vector<2x32xf32>
    %365 = arith.negf %364 : vector<2x32xf32>
    %366 = math.exp %365 : vector<2x32xf32>
    %cst_104 = arith.constant 1.000000e+00 : f32
    %367 = vector.broadcast %cst_104 : f32 to vector<2x32xf32>
    %368 = arith.addf %367, %366 : vector<2x32xf32>
    %369 = arith.divf %367, %368 : vector<2x32xf32>
    %370 = arith.mulf %361, %299 : vector<2x32xf32>
    %371 = arith.mulf %355, %363 : vector<2x32xf32>
    %372 = arith.addf %370, %371 : vector<2x32xf32>
    %373 = math.tanh %372 : vector<2x32xf32>
    %374 = arith.mulf %369, %373 : vector<2x32xf32>
    %375 = vector.shape_cast %347 : vector<2x1xi1> to vector<2x1xi1>
    %376 = vector.broadcast %375 : vector<2x1xi1> to vector<2x32xi1>
    %377 = arith.select %376, %374, %296 : vector<2x32xi1>, vector<2x32xf32>
    %378 = vector.shape_cast %347 : vector<2x1xi1> to vector<2x1xi1>
    %379 = vector.broadcast %378 : vector<2x1xi1> to vector<2x32xi1>
    %380 = arith.select %379, %372, %299 : vector<2x32xi1>, vector<2x32xf32>
    %c7_i32 = arith.constant 7 : i32
    %381 = arith.subi %c7_i32, %c0_i32_95 : i32
    %c2_i32_105 = arith.constant 2 : i32
    %382 = arith.muli %381, %c2_i32_105 : i32
    %383 = arith.index_cast %382 : i32 to index
    %c128_106 = arith.constant 128 : index
    %384 = vector.load %arg14[%383, %c128_106] : memref<16x256xf32, #tpu.memory_space<vmem>>, vector<2x128xf32>
    %c1_107 = arith.constant 1 : index
    %c0_108 = arith.constant 0 : index
    %c0_109 = arith.constant 0 : index
    %385 = vector.load %arg8[%c1_107, %c0_108, %c0_109] : memref<2x32x128xf32, #tpu.memory_space<vmem>>, vector<1x32x128xf32>
    %386 = vector.shape_cast %385 : vector<1x32x128xf32> to vector<32x128xf32>
    %387 = vector.broadcast %381 : i32 to vector<2x1xi32>
    %388 = arith.cmpi slt, %387, %15 : vector<2x1xi32>
    %cst_110 = arith.constant dense<0.000000e+00> : vector<2x128xf32>
    %389 = tpu.matmul %337, %386, %cst_110 {dimension_numbers = #tpu.dot_dimension_numbers<[1], [0], [0], [1], [0, 0, 1, 1], [], []>} : vector<2x32xf32>, vector<32x128xf32>, vector<2x128xf32> -> vector<2x128xf32>
    %390 = arith.addf %384, %389 : vector<2x128xf32>
    %391 = vector.extract_strided_slice %390 {offsets = [0, 0], sizes = [2, 32], strides = [1, 1]} : vector<2x128xf32> to vector<2x32xf32>
    %392 = arith.negf %391 : vector<2x32xf32>
    %393 = math.exp %392 : vector<2x32xf32>
    %cst_111 = arith.constant 1.000000e+00 : f32
    %394 = vector.broadcast %cst_111 : f32 to vector<2x32xf32>
    %395 = arith.addf %394, %393 : vector<2x32xf32>
    %396 = arith.divf %394, %395 : vector<2x32xf32>
    %397 = vector.extract_strided_slice %390 {offsets = [0, 32], sizes = [2, 32], strides = [1, 1]} : vector<2x128xf32> to vector<2x32xf32>
    %398 = arith.negf %397 : vector<2x32xf32>
    %399 = math.exp %398 : vector<2x32xf32>
    %cst_112 = arith.constant 1.000000e+00 : f32
    %400 = vector.broadcast %cst_112 : f32 to vector<2x32xf32>
    %401 = arith.addf %400, %399 : vector<2x32xf32>
    %402 = arith.divf %400, %401 : vector<2x32xf32>
    %403 = vector.extract_strided_slice %390 {offsets = [0, 64], sizes = [2, 32], strides = [1, 1]} : vector<2x128xf32> to vector<2x32xf32>
    %404 = math.tanh %403 : vector<2x32xf32>
    %405 = vector.extract_strided_slice %390 {offsets = [0, 96], sizes = [2, 32], strides = [1, 1]} : vector<2x128xf32> to vector<2x32xf32>
    %406 = arith.negf %405 : vector<2x32xf32>
    %407 = math.exp %406 : vector<2x32xf32>
    %cst_113 = arith.constant 1.000000e+00 : f32
    %408 = vector.broadcast %cst_113 : f32 to vector<2x32xf32>
    %409 = arith.addf %408, %407 : vector<2x32xf32>
    %410 = arith.divf %408, %409 : vector<2x32xf32>
    %411 = arith.mulf %402, %340 : vector<2x32xf32>
    %412 = arith.mulf %396, %404 : vector<2x32xf32>
    %413 = arith.addf %411, %412 : vector<2x32xf32>
    %414 = math.tanh %413 : vector<2x32xf32>
    %415 = arith.mulf %410, %414 : vector<2x32xf32>
    %416 = vector.shape_cast %388 : vector<2x1xi1> to vector<2x1xi1>
    %417 = vector.broadcast %416 : vector<2x1xi1> to vector<2x32xi1>
    %418 = arith.select %417, %415, %337 : vector<2x32xi1>, vector<2x32xf32>
    %419 = vector.shape_cast %388 : vector<2x1xi1> to vector<2x1xi1>
    %420 = vector.broadcast %419 : vector<2x1xi1> to vector<2x32xi1>
    %421 = arith.select %420, %413, %340 : vector<2x32xi1>, vector<2x32xf32>
    %c1_i32_114 = arith.constant 1 : i32
    %c2_i32_115 = arith.constant 2 : i32
    %422 = arith.muli %c1_i32_114, %c2_i32_115 : i32
    %423 = arith.index_cast %422 : i32 to index
    %c0_116 = arith.constant 0 : index
    %424 = vector.load %arg14[%423, %c0_116] : memref<16x256xf32, #tpu.memory_space<vmem>>, vector<2x128xf32>
    %c0_117 = arith.constant 0 : index
    %c0_118 = arith.constant 0 : index
    %c0_119 = arith.constant 0 : index
    %425 = vector.load %arg8[%c0_117, %c0_118, %c0_119] : memref<2x32x128xf32, #tpu.memory_space<vmem>>, vector<1x32x128xf32>
    %426 = vector.shape_cast %425 : vector<1x32x128xf32> to vector<32x128xf32>
    %427 = vector.broadcast %c1_i32_114 : i32 to vector<2x1xi32>
    %428 = arith.cmpi slt, %427, %15 : vector<2x1xi32>
    %cst_120 = arith.constant dense<0.000000e+00> : vector<2x128xf32>
    %429 = tpu.matmul %377, %426, %cst_120 {dimension_numbers = #tpu.dot_dimension_numbers<[1], [0], [0], [1], [0, 0, 1, 1], [], []>} : vector<2x32xf32>, vector<32x128xf32>, vector<2x128xf32> -> vector<2x128xf32>
    %430 = arith.addf %424, %429 : vector<2x128xf32>
    %431 = vector.extract_strided_slice %430 {offsets = [0, 0], sizes = [2, 32], strides = [1, 1]} : vector<2x128xf32> to vector<2x32xf32>
    %432 = arith.negf %431 : vector<2x32xf32>
    %433 = math.exp %432 : vector<2x32xf32>
    %cst_121 = arith.constant 1.000000e+00 : f32
    %434 = vector.broadcast %cst_121 : f32 to vector<2x32xf32>
    %435 = arith.addf %434, %433 : vector<2x32xf32>
    %436 = arith.divf %434, %435 : vector<2x32xf32>
    %437 = vector.extract_strided_slice %430 {offsets = [0, 32], sizes = [2, 32], strides = [1, 1]} : vector<2x128xf32> to vector<2x32xf32>
    %438 = arith.negf %437 : vector<2x32xf32>
    %439 = math.exp %438 : vector<2x32xf32>
    %cst_122 = arith.constant 1.000000e+00 : f32
    %440 = vector.broadcast %cst_122 : f32 to vector<2x32xf32>
    %441 = arith.addf %440, %439 : vector<2x32xf32>
    %442 = arith.divf %440, %441 : vector<2x32xf32>
    %443 = vector.extract_strided_slice %430 {offsets = [0, 64], sizes = [2, 32], strides = [1, 1]} : vector<2x128xf32> to vector<2x32xf32>
    %444 = math.tanh %443 : vector<2x32xf32>
    %445 = vector.extract_strided_slice %430 {offsets = [0, 96], sizes = [2, 32], strides = [1, 1]} : vector<2x128xf32> to vector<2x32xf32>
    %446 = arith.negf %445 : vector<2x32xf32>
    %447 = math.exp %446 : vector<2x32xf32>
    %cst_123 = arith.constant 1.000000e+00 : f32
    %448 = vector.broadcast %cst_123 : f32 to vector<2x32xf32>
    %449 = arith.addf %448, %447 : vector<2x32xf32>
    %450 = arith.divf %448, %449 : vector<2x32xf32>
    %451 = arith.mulf %442, %380 : vector<2x32xf32>
    %452 = arith.mulf %436, %444 : vector<2x32xf32>
    %453 = arith.addf %451, %452 : vector<2x32xf32>
    %454 = math.tanh %453 : vector<2x32xf32>
    %455 = arith.mulf %450, %454 : vector<2x32xf32>
    %456 = vector.shape_cast %428 : vector<2x1xi1> to vector<2x1xi1>
    %457 = vector.broadcast %456 : vector<2x1xi1> to vector<2x32xi1>
    %458 = arith.select %457, %455, %377 : vector<2x32xi1>, vector<2x32xf32>
    %459 = vector.shape_cast %428 : vector<2x1xi1> to vector<2x1xi1>
    %460 = vector.broadcast %459 : vector<2x1xi1> to vector<2x32xi1>
    %461 = arith.select %460, %453, %380 : vector<2x32xi1>, vector<2x32xf32>
    %c7_i32_124 = arith.constant 7 : i32
    %462 = arith.subi %c7_i32_124, %c1_i32_114 : i32
    %c2_i32_125 = arith.constant 2 : i32
    %463 = arith.muli %462, %c2_i32_125 : i32
    %464 = arith.index_cast %463 : i32 to index
    %c128_126 = arith.constant 128 : index
    %465 = vector.load %arg14[%464, %c128_126] : memref<16x256xf32, #tpu.memory_space<vmem>>, vector<2x128xf32>
    %c1_127 = arith.constant 1 : index
    %c0_128 = arith.constant 0 : index
    %c0_129 = arith.constant 0 : index
    %466 = vector.load %arg8[%c1_127, %c0_128, %c0_129] : memref<2x32x128xf32, #tpu.memory_space<vmem>>, vector<1x32x128xf32>
    %467 = vector.shape_cast %466 : vector<1x32x128xf32> to vector<32x128xf32>
    %468 = vector.broadcast %462 : i32 to vector<2x1xi32>
    %469 = arith.cmpi slt, %468, %15 : vector<2x1xi32>
    %cst_130 = arith.constant dense<0.000000e+00> : vector<2x128xf32>
    %470 = tpu.matmul %418, %467, %cst_130 {dimension_numbers = #tpu.dot_dimension_numbers<[1], [0], [0], [1], [0, 0, 1, 1], [], []>} : vector<2x32xf32>, vector<32x128xf32>, vector<2x128xf32> -> vector<2x128xf32>
    %471 = arith.addf %465, %470 : vector<2x128xf32>
    %472 = vector.extract_strided_slice %471 {offsets = [0, 0], sizes = [2, 32], strides = [1, 1]} : vector<2x128xf32> to vector<2x32xf32>
    %473 = arith.negf %472 : vector<2x32xf32>
    %474 = math.exp %473 : vector<2x32xf32>
    %cst_131 = arith.constant 1.000000e+00 : f32
    %475 = vector.broadcast %cst_131 : f32 to vector<2x32xf32>
    %476 = arith.addf %475, %474 : vector<2x32xf32>
    %477 = arith.divf %475, %476 : vector<2x32xf32>
    %478 = vector.extract_strided_slice %471 {offsets = [0, 32], sizes = [2, 32], strides = [1, 1]} : vector<2x128xf32> to vector<2x32xf32>
    %479 = arith.negf %478 : vector<2x32xf32>
    %480 = math.exp %479 : vector<2x32xf32>
    %cst_132 = arith.constant 1.000000e+00 : f32
    %481 = vector.broadcast %cst_132 : f32 to vector<2x32xf32>
    %482 = arith.addf %481, %480 : vector<2x32xf32>
    %483 = arith.divf %481, %482 : vector<2x32xf32>
    %484 = vector.extract_strided_slice %471 {offsets = [0, 64], sizes = [2, 32], strides = [1, 1]} : vector<2x128xf32> to vector<2x32xf32>
    %485 = math.tanh %484 : vector<2x32xf32>
    %486 = vector.extract_strided_slice %471 {offsets = [0, 96], sizes = [2, 32], strides = [1, 1]} : vector<2x128xf32> to vector<2x32xf32>
    %487 = arith.negf %486 : vector<2x32xf32>
    %488 = math.exp %487 : vector<2x32xf32>
    %cst_133 = arith.constant 1.000000e+00 : f32
    %489 = vector.broadcast %cst_133 : f32 to vector<2x32xf32>
    %490 = arith.addf %489, %488 : vector<2x32xf32>
    %491 = arith.divf %489, %490 : vector<2x32xf32>
    %492 = arith.mulf %483, %421 : vector<2x32xf32>
    %493 = arith.mulf %477, %485 : vector<2x32xf32>
    %494 = arith.addf %492, %493 : vector<2x32xf32>
    %495 = math.tanh %494 : vector<2x32xf32>
    %496 = arith.mulf %491, %495 : vector<2x32xf32>
    %497 = vector.shape_cast %469 : vector<2x1xi1> to vector<2x1xi1>
    %498 = vector.broadcast %497 : vector<2x1xi1> to vector<2x32xi1>
    %499 = arith.select %498, %496, %418 : vector<2x32xi1>, vector<2x32xf32>
    %500 = vector.shape_cast %469 : vector<2x1xi1> to vector<2x1xi1>
    %501 = vector.broadcast %500 : vector<2x1xi1> to vector<2x32xi1>
    %502 = arith.select %501, %494, %421 : vector<2x32xi1>, vector<2x32xf32>
    %c2_i32_134 = arith.constant 2 : i32
    %c2_i32_135 = arith.constant 2 : i32
    %503 = arith.muli %c2_i32_134, %c2_i32_135 : i32
    %504 = arith.index_cast %503 : i32 to index
    %c0_136 = arith.constant 0 : index
    %505 = vector.load %arg14[%504, %c0_136] : memref<16x256xf32, #tpu.memory_space<vmem>>, vector<2x128xf32>
    %c0_137 = arith.constant 0 : index
    %c0_138 = arith.constant 0 : index
    %c0_139 = arith.constant 0 : index
    %506 = vector.load %arg8[%c0_137, %c0_138, %c0_139] : memref<2x32x128xf32, #tpu.memory_space<vmem>>, vector<1x32x128xf32>
    %507 = vector.shape_cast %506 : vector<1x32x128xf32> to vector<32x128xf32>
    %508 = vector.broadcast %c2_i32_134 : i32 to vector<2x1xi32>
    %509 = arith.cmpi slt, %508, %15 : vector<2x1xi32>
    %cst_140 = arith.constant dense<0.000000e+00> : vector<2x128xf32>
    %510 = tpu.matmul %458, %507, %cst_140 {dimension_numbers = #tpu.dot_dimension_numbers<[1], [0], [0], [1], [0, 0, 1, 1], [], []>} : vector<2x32xf32>, vector<32x128xf32>, vector<2x128xf32> -> vector<2x128xf32>
    %511 = arith.addf %505, %510 : vector<2x128xf32>
    %512 = vector.extract_strided_slice %511 {offsets = [0, 0], sizes = [2, 32], strides = [1, 1]} : vector<2x128xf32> to vector<2x32xf32>
    %513 = arith.negf %512 : vector<2x32xf32>
    %514 = math.exp %513 : vector<2x32xf32>
    %cst_141 = arith.constant 1.000000e+00 : f32
    %515 = vector.broadcast %cst_141 : f32 to vector<2x32xf32>
    %516 = arith.addf %515, %514 : vector<2x32xf32>
    %517 = arith.divf %515, %516 : vector<2x32xf32>
    %518 = vector.extract_strided_slice %511 {offsets = [0, 32], sizes = [2, 32], strides = [1, 1]} : vector<2x128xf32> to vector<2x32xf32>
    %519 = arith.negf %518 : vector<2x32xf32>
    %520 = math.exp %519 : vector<2x32xf32>
    %cst_142 = arith.constant 1.000000e+00 : f32
    %521 = vector.broadcast %cst_142 : f32 to vector<2x32xf32>
    %522 = arith.addf %521, %520 : vector<2x32xf32>
    %523 = arith.divf %521, %522 : vector<2x32xf32>
    %524 = vector.extract_strided_slice %511 {offsets = [0, 64], sizes = [2, 32], strides = [1, 1]} : vector<2x128xf32> to vector<2x32xf32>
    %525 = math.tanh %524 : vector<2x32xf32>
    %526 = vector.extract_strided_slice %511 {offsets = [0, 96], sizes = [2, 32], strides = [1, 1]} : vector<2x128xf32> to vector<2x32xf32>
    %527 = arith.negf %526 : vector<2x32xf32>
    %528 = math.exp %527 : vector<2x32xf32>
    %cst_143 = arith.constant 1.000000e+00 : f32
    %529 = vector.broadcast %cst_143 : f32 to vector<2x32xf32>
    %530 = arith.addf %529, %528 : vector<2x32xf32>
    %531 = arith.divf %529, %530 : vector<2x32xf32>
    %532 = arith.mulf %523, %461 : vector<2x32xf32>
    %533 = arith.mulf %517, %525 : vector<2x32xf32>
    %534 = arith.addf %532, %533 : vector<2x32xf32>
    %535 = math.tanh %534 : vector<2x32xf32>
    %536 = arith.mulf %531, %535 : vector<2x32xf32>
    %537 = vector.shape_cast %509 : vector<2x1xi1> to vector<2x1xi1>
    %538 = vector.broadcast %537 : vector<2x1xi1> to vector<2x32xi1>
    %539 = arith.select %538, %536, %458 : vector<2x32xi1>, vector<2x32xf32>
    %540 = vector.shape_cast %509 : vector<2x1xi1> to vector<2x1xi1>
    %541 = vector.broadcast %540 : vector<2x1xi1> to vector<2x32xi1>
    %542 = arith.select %541, %534, %461 : vector<2x32xi1>, vector<2x32xf32>
    %c7_i32_144 = arith.constant 7 : i32
    %543 = arith.subi %c7_i32_144, %c2_i32_134 : i32
    %c2_i32_145 = arith.constant 2 : i32
    %544 = arith.muli %543, %c2_i32_145 : i32
    %545 = arith.index_cast %544 : i32 to index
    %c128_146 = arith.constant 128 : index
    %546 = vector.load %arg14[%545, %c128_146] : memref<16x256xf32, #tpu.memory_space<vmem>>, vector<2x128xf32>
    %c1_147 = arith.constant 1 : index
    %c0_148 = arith.constant 0 : index
    %c0_149 = arith.constant 0 : index
    %547 = vector.load %arg8[%c1_147, %c0_148, %c0_149] : memref<2x32x128xf32, #tpu.memory_space<vmem>>, vector<1x32x128xf32>
    %548 = vector.shape_cast %547 : vector<1x32x128xf32> to vector<32x128xf32>
    %549 = vector.broadcast %543 : i32 to vector<2x1xi32>
    %550 = arith.cmpi slt, %549, %15 : vector<2x1xi32>
    %cst_150 = arith.constant dense<0.000000e+00> : vector<2x128xf32>
    %551 = tpu.matmul %499, %548, %cst_150 {dimension_numbers = #tpu.dot_dimension_numbers<[1], [0], [0], [1], [0, 0, 1, 1], [], []>} : vector<2x32xf32>, vector<32x128xf32>, vector<2x128xf32> -> vector<2x128xf32>
    %552 = arith.addf %546, %551 : vector<2x128xf32>
    %553 = vector.extract_strided_slice %552 {offsets = [0, 0], sizes = [2, 32], strides = [1, 1]} : vector<2x128xf32> to vector<2x32xf32>
    %554 = arith.negf %553 : vector<2x32xf32>
    %555 = math.exp %554 : vector<2x32xf32>
    %cst_151 = arith.constant 1.000000e+00 : f32
    %556 = vector.broadcast %cst_151 : f32 to vector<2x32xf32>
    %557 = arith.addf %556, %555 : vector<2x32xf32>
    %558 = arith.divf %556, %557 : vector<2x32xf32>
    %559 = vector.extract_strided_slice %552 {offsets = [0, 32], sizes = [2, 32], strides = [1, 1]} : vector<2x128xf32> to vector<2x32xf32>
    %560 = arith.negf %559 : vector<2x32xf32>
    %561 = math.exp %560 : vector<2x32xf32>
    %cst_152 = arith.constant 1.000000e+00 : f32
    %562 = vector.broadcast %cst_152 : f32 to vector<2x32xf32>
    %563 = arith.addf %562, %561 : vector<2x32xf32>
    %564 = arith.divf %562, %563 : vector<2x32xf32>
    %565 = vector.extract_strided_slice %552 {offsets = [0, 64], sizes = [2, 32], strides = [1, 1]} : vector<2x128xf32> to vector<2x32xf32>
    %566 = math.tanh %565 : vector<2x32xf32>
    %567 = vector.extract_strided_slice %552 {offsets = [0, 96], sizes = [2, 32], strides = [1, 1]} : vector<2x128xf32> to vector<2x32xf32>
    %568 = arith.negf %567 : vector<2x32xf32>
    %569 = math.exp %568 : vector<2x32xf32>
    %cst_153 = arith.constant 1.000000e+00 : f32
    %570 = vector.broadcast %cst_153 : f32 to vector<2x32xf32>
    %571 = arith.addf %570, %569 : vector<2x32xf32>
    %572 = arith.divf %570, %571 : vector<2x32xf32>
    %573 = arith.mulf %564, %502 : vector<2x32xf32>
    %574 = arith.mulf %558, %566 : vector<2x32xf32>
    %575 = arith.addf %573, %574 : vector<2x32xf32>
    %576 = math.tanh %575 : vector<2x32xf32>
    %577 = arith.mulf %572, %576 : vector<2x32xf32>
    %578 = vector.shape_cast %550 : vector<2x1xi1> to vector<2x1xi1>
    %579 = vector.broadcast %578 : vector<2x1xi1> to vector<2x32xi1>
    %580 = arith.select %579, %577, %499 : vector<2x32xi1>, vector<2x32xf32>
    %581 = vector.shape_cast %550 : vector<2x1xi1> to vector<2x1xi1>
    %582 = vector.broadcast %581 : vector<2x1xi1> to vector<2x32xi1>
    %583 = arith.select %582, %575, %502 : vector<2x32xi1>, vector<2x32xf32>
    %c3_i32_154 = arith.constant 3 : i32
    %c2_i32_155 = arith.constant 2 : i32
    %584 = arith.muli %c3_i32_154, %c2_i32_155 : i32
    %585 = arith.index_cast %584 : i32 to index
    %c0_156 = arith.constant 0 : index
    %586 = vector.load %arg14[%585, %c0_156] : memref<16x256xf32, #tpu.memory_space<vmem>>, vector<2x128xf32>
    %c0_157 = arith.constant 0 : index
    %c0_158 = arith.constant 0 : index
    %c0_159 = arith.constant 0 : index
    %587 = vector.load %arg8[%c0_157, %c0_158, %c0_159] : memref<2x32x128xf32, #tpu.memory_space<vmem>>, vector<1x32x128xf32>
    %588 = vector.shape_cast %587 : vector<1x32x128xf32> to vector<32x128xf32>
    %589 = vector.broadcast %c3_i32_154 : i32 to vector<2x1xi32>
    %590 = arith.cmpi slt, %589, %15 : vector<2x1xi32>
    %cst_160 = arith.constant dense<0.000000e+00> : vector<2x128xf32>
    %591 = tpu.matmul %539, %588, %cst_160 {dimension_numbers = #tpu.dot_dimension_numbers<[1], [0], [0], [1], [0, 0, 1, 1], [], []>} : vector<2x32xf32>, vector<32x128xf32>, vector<2x128xf32> -> vector<2x128xf32>
    %592 = arith.addf %586, %591 : vector<2x128xf32>
    %593 = vector.extract_strided_slice %592 {offsets = [0, 0], sizes = [2, 32], strides = [1, 1]} : vector<2x128xf32> to vector<2x32xf32>
    %594 = arith.negf %593 : vector<2x32xf32>
    %595 = math.exp %594 : vector<2x32xf32>
    %cst_161 = arith.constant 1.000000e+00 : f32
    %596 = vector.broadcast %cst_161 : f32 to vector<2x32xf32>
    %597 = arith.addf %596, %595 : vector<2x32xf32>
    %598 = arith.divf %596, %597 : vector<2x32xf32>
    %599 = vector.extract_strided_slice %592 {offsets = [0, 32], sizes = [2, 32], strides = [1, 1]} : vector<2x128xf32> to vector<2x32xf32>
    %600 = arith.negf %599 : vector<2x32xf32>
    %601 = math.exp %600 : vector<2x32xf32>
    %cst_162 = arith.constant 1.000000e+00 : f32
    %602 = vector.broadcast %cst_162 : f32 to vector<2x32xf32>
    %603 = arith.addf %602, %601 : vector<2x32xf32>
    %604 = arith.divf %602, %603 : vector<2x32xf32>
    %605 = vector.extract_strided_slice %592 {offsets = [0, 64], sizes = [2, 32], strides = [1, 1]} : vector<2x128xf32> to vector<2x32xf32>
    %606 = math.tanh %605 : vector<2x32xf32>
    %607 = vector.extract_strided_slice %592 {offsets = [0, 96], sizes = [2, 32], strides = [1, 1]} : vector<2x128xf32> to vector<2x32xf32>
    %608 = arith.negf %607 : vector<2x32xf32>
    %609 = math.exp %608 : vector<2x32xf32>
    %cst_163 = arith.constant 1.000000e+00 : f32
    %610 = vector.broadcast %cst_163 : f32 to vector<2x32xf32>
    %611 = arith.addf %610, %609 : vector<2x32xf32>
    %612 = arith.divf %610, %611 : vector<2x32xf32>
    %613 = arith.mulf %604, %542 : vector<2x32xf32>
    %614 = arith.mulf %598, %606 : vector<2x32xf32>
    %615 = arith.addf %613, %614 : vector<2x32xf32>
    %616 = math.tanh %615 : vector<2x32xf32>
    %617 = arith.mulf %612, %616 : vector<2x32xf32>
    %618 = vector.shape_cast %590 : vector<2x1xi1> to vector<2x1xi1>
    %619 = vector.broadcast %618 : vector<2x1xi1> to vector<2x32xi1>
    %620 = arith.select %619, %617, %539 : vector<2x32xi1>, vector<2x32xf32>
    %621 = vector.shape_cast %590 : vector<2x1xi1> to vector<2x1xi1>
    %622 = vector.broadcast %621 : vector<2x1xi1> to vector<2x32xi1>
    %623 = arith.select %622, %615, %542 : vector<2x32xi1>, vector<2x32xf32>
    %c7_i32_164 = arith.constant 7 : i32
    %624 = arith.subi %c7_i32_164, %c3_i32_154 : i32
    %c2_i32_165 = arith.constant 2 : i32
    %625 = arith.muli %624, %c2_i32_165 : i32
    %626 = arith.index_cast %625 : i32 to index
    %c128_166 = arith.constant 128 : index
    %627 = vector.load %arg14[%626, %c128_166] : memref<16x256xf32, #tpu.memory_space<vmem>>, vector<2x128xf32>
    %c1_167 = arith.constant 1 : index
    %c0_168 = arith.constant 0 : index
    %c0_169 = arith.constant 0 : index
    %628 = vector.load %arg8[%c1_167, %c0_168, %c0_169] : memref<2x32x128xf32, #tpu.memory_space<vmem>>, vector<1x32x128xf32>
    %629 = vector.shape_cast %628 : vector<1x32x128xf32> to vector<32x128xf32>
    %630 = vector.broadcast %624 : i32 to vector<2x1xi32>
    %631 = arith.cmpi slt, %630, %15 : vector<2x1xi32>
    %cst_170 = arith.constant dense<0.000000e+00> : vector<2x128xf32>
    %632 = tpu.matmul %580, %629, %cst_170 {dimension_numbers = #tpu.dot_dimension_numbers<[1], [0], [0], [1], [0, 0, 1, 1], [], []>} : vector<2x32xf32>, vector<32x128xf32>, vector<2x128xf32> -> vector<2x128xf32>
    %633 = arith.addf %627, %632 : vector<2x128xf32>
    %634 = vector.extract_strided_slice %633 {offsets = [0, 0], sizes = [2, 32], strides = [1, 1]} : vector<2x128xf32> to vector<2x32xf32>
    %635 = arith.negf %634 : vector<2x32xf32>
    %636 = math.exp %635 : vector<2x32xf32>
    %cst_171 = arith.constant 1.000000e+00 : f32
    %637 = vector.broadcast %cst_171 : f32 to vector<2x32xf32>
    %638 = arith.addf %637, %636 : vector<2x32xf32>
    %639 = arith.divf %637, %638 : vector<2x32xf32>
    %640 = vector.extract_strided_slice %633 {offsets = [0, 32], sizes = [2, 32], strides = [1, 1]} : vector<2x128xf32> to vector<2x32xf32>
    %641 = arith.negf %640 : vector<2x32xf32>
    %642 = math.exp %641 : vector<2x32xf32>
    %cst_172 = arith.constant 1.000000e+00 : f32
    %643 = vector.broadcast %cst_172 : f32 to vector<2x32xf32>
    %644 = arith.addf %643, %642 : vector<2x32xf32>
    %645 = arith.divf %643, %644 : vector<2x32xf32>
    %646 = vector.extract_strided_slice %633 {offsets = [0, 64], sizes = [2, 32], strides = [1, 1]} : vector<2x128xf32> to vector<2x32xf32>
    %647 = math.tanh %646 : vector<2x32xf32>
    %648 = vector.extract_strided_slice %633 {offsets = [0, 96], sizes = [2, 32], strides = [1, 1]} : vector<2x128xf32> to vector<2x32xf32>
    %649 = arith.negf %648 : vector<2x32xf32>
    %650 = math.exp %649 : vector<2x32xf32>
    %cst_173 = arith.constant 1.000000e+00 : f32
    %651 = vector.broadcast %cst_173 : f32 to vector<2x32xf32>
    %652 = arith.addf %651, %650 : vector<2x32xf32>
    %653 = arith.divf %651, %652 : vector<2x32xf32>
    %654 = arith.mulf %645, %583 : vector<2x32xf32>
    %655 = arith.mulf %639, %647 : vector<2x32xf32>
    %656 = arith.addf %654, %655 : vector<2x32xf32>
    %657 = math.tanh %656 : vector<2x32xf32>
    %658 = arith.mulf %653, %657 : vector<2x32xf32>
    %659 = vector.shape_cast %631 : vector<2x1xi1> to vector<2x1xi1>
    %660 = vector.broadcast %659 : vector<2x1xi1> to vector<2x32xi1>
    %661 = arith.select %660, %658, %580 : vector<2x32xi1>, vector<2x32xf32>
    %662 = vector.shape_cast %631 : vector<2x1xi1> to vector<2x1xi1>
    %663 = vector.broadcast %662 : vector<2x1xi1> to vector<2x32xi1>
    %664 = arith.select %663, %656, %583 : vector<2x32xi1>, vector<2x32xf32>
    %c4_i32_174 = arith.constant 4 : i32
    %c2_i32_175 = arith.constant 2 : i32
    %665 = arith.muli %c4_i32_174, %c2_i32_175 : i32
    %666 = arith.index_cast %665 : i32 to index
    %c0_176 = arith.constant 0 : index
    %667 = vector.load %arg14[%666, %c0_176] : memref<16x256xf32, #tpu.memory_space<vmem>>, vector<2x128xf32>
    %c0_177 = arith.constant 0 : index
    %c0_178 = arith.constant 0 : index
    %c0_179 = arith.constant 0 : index
    %668 = vector.load %arg8[%c0_177, %c0_178, %c0_179] : memref<2x32x128xf32, #tpu.memory_space<vmem>>, vector<1x32x128xf32>
    %669 = vector.shape_cast %668 : vector<1x32x128xf32> to vector<32x128xf32>
    %670 = vector.broadcast %c4_i32_174 : i32 to vector<2x1xi32>
    %671 = arith.cmpi slt, %670, %15 : vector<2x1xi32>
    %cst_180 = arith.constant dense<0.000000e+00> : vector<2x128xf32>
    %672 = tpu.matmul %620, %669, %cst_180 {dimension_numbers = #tpu.dot_dimension_numbers<[1], [0], [0], [1], [0, 0, 1, 1], [], []>} : vector<2x32xf32>, vector<32x128xf32>, vector<2x128xf32> -> vector<2x128xf32>
    %673 = arith.addf %667, %672 : vector<2x128xf32>
    %674 = vector.extract_strided_slice %673 {offsets = [0, 0], sizes = [2, 32], strides = [1, 1]} : vector<2x128xf32> to vector<2x32xf32>
    %675 = arith.negf %674 : vector<2x32xf32>
    %676 = math.exp %675 : vector<2x32xf32>
    %cst_181 = arith.constant 1.000000e+00 : f32
    %677 = vector.broadcast %cst_181 : f32 to vector<2x32xf32>
    %678 = arith.addf %677, %676 : vector<2x32xf32>
    %679 = arith.divf %677, %678 : vector<2x32xf32>
    %680 = vector.extract_strided_slice %673 {offsets = [0, 32], sizes = [2, 32], strides = [1, 1]} : vector<2x128xf32> to vector<2x32xf32>
    %681 = arith.negf %680 : vector<2x32xf32>
    %682 = math.exp %681 : vector<2x32xf32>
    %cst_182 = arith.constant 1.000000e+00 : f32
    %683 = vector.broadcast %cst_182 : f32 to vector<2x32xf32>
    %684 = arith.addf %683, %682 : vector<2x32xf32>
    %685 = arith.divf %683, %684 : vector<2x32xf32>
    %686 = vector.extract_strided_slice %673 {offsets = [0, 64], sizes = [2, 32], strides = [1, 1]} : vector<2x128xf32> to vector<2x32xf32>
    %687 = math.tanh %686 : vector<2x32xf32>
    %688 = vector.extract_strided_slice %673 {offsets = [0, 96], sizes = [2, 32], strides = [1, 1]} : vector<2x128xf32> to vector<2x32xf32>
    %689 = arith.negf %688 : vector<2x32xf32>
    %690 = math.exp %689 : vector<2x32xf32>
    %cst_183 = arith.constant 1.000000e+00 : f32
    %691 = vector.broadcast %cst_183 : f32 to vector<2x32xf32>
    %692 = arith.addf %691, %690 : vector<2x32xf32>
    %693 = arith.divf %691, %692 : vector<2x32xf32>
    %694 = arith.mulf %685, %623 : vector<2x32xf32>
    %695 = arith.mulf %679, %687 : vector<2x32xf32>
    %696 = arith.addf %694, %695 : vector<2x32xf32>
    %697 = math.tanh %696 : vector<2x32xf32>
    %698 = arith.mulf %693, %697 : vector<2x32xf32>
    %699 = vector.shape_cast %671 : vector<2x1xi1> to vector<2x1xi1>
    %700 = vector.broadcast %699 : vector<2x1xi1> to vector<2x32xi1>
    %701 = arith.select %700, %698, %620 : vector<2x32xi1>, vector<2x32xf32>
    %702 = vector.shape_cast %671 : vector<2x1xi1> to vector<2x1xi1>
    %703 = vector.broadcast %702 : vector<2x1xi1> to vector<2x32xi1>
    %704 = arith.select %703, %696, %623 : vector<2x32xi1>, vector<2x32xf32>
    %c7_i32_184 = arith.constant 7 : i32
    %705 = arith.subi %c7_i32_184, %c4_i32_174 : i32
    %c2_i32_185 = arith.constant 2 : i32
    %706 = arith.muli %705, %c2_i32_185 : i32
    %707 = arith.index_cast %706 : i32 to index
    %c128_186 = arith.constant 128 : index
    %708 = vector.load %arg14[%707, %c128_186] : memref<16x256xf32, #tpu.memory_space<vmem>>, vector<2x128xf32>
    %c1_187 = arith.constant 1 : index
    %c0_188 = arith.constant 0 : index
    %c0_189 = arith.constant 0 : index
    %709 = vector.load %arg8[%c1_187, %c0_188, %c0_189] : memref<2x32x128xf32, #tpu.memory_space<vmem>>, vector<1x32x128xf32>
    %710 = vector.shape_cast %709 : vector<1x32x128xf32> to vector<32x128xf32>
    %711 = vector.broadcast %705 : i32 to vector<2x1xi32>
    %712 = arith.cmpi slt, %711, %15 : vector<2x1xi32>
    %cst_190 = arith.constant dense<0.000000e+00> : vector<2x128xf32>
    %713 = tpu.matmul %661, %710, %cst_190 {dimension_numbers = #tpu.dot_dimension_numbers<[1], [0], [0], [1], [0, 0, 1, 1], [], []>} : vector<2x32xf32>, vector<32x128xf32>, vector<2x128xf32> -> vector<2x128xf32>
    %714 = arith.addf %708, %713 : vector<2x128xf32>
    %715 = vector.extract_strided_slice %714 {offsets = [0, 0], sizes = [2, 32], strides = [1, 1]} : vector<2x128xf32> to vector<2x32xf32>
    %716 = arith.negf %715 : vector<2x32xf32>
    %717 = math.exp %716 : vector<2x32xf32>
    %cst_191 = arith.constant 1.000000e+00 : f32
    %718 = vector.broadcast %cst_191 : f32 to vector<2x32xf32>
    %719 = arith.addf %718, %717 : vector<2x32xf32>
    %720 = arith.divf %718, %719 : vector<2x32xf32>
    %721 = vector.extract_strided_slice %714 {offsets = [0, 32], sizes = [2, 32], strides = [1, 1]} : vector<2x128xf32> to vector<2x32xf32>
    %722 = arith.negf %721 : vector<2x32xf32>
    %723 = math.exp %722 : vector<2x32xf32>
    %cst_192 = arith.constant 1.000000e+00 : f32
    %724 = vector.broadcast %cst_192 : f32 to vector<2x32xf32>
    %725 = arith.addf %724, %723 : vector<2x32xf32>
    %726 = arith.divf %724, %725 : vector<2x32xf32>
    %727 = vector.extract_strided_slice %714 {offsets = [0, 64], sizes = [2, 32], strides = [1, 1]} : vector<2x128xf32> to vector<2x32xf32>
    %728 = math.tanh %727 : vector<2x32xf32>
    %729 = vector.extract_strided_slice %714 {offsets = [0, 96], sizes = [2, 32], strides = [1, 1]} : vector<2x128xf32> to vector<2x32xf32>
    %730 = arith.negf %729 : vector<2x32xf32>
    %731 = math.exp %730 : vector<2x32xf32>
    %cst_193 = arith.constant 1.000000e+00 : f32
    %732 = vector.broadcast %cst_193 : f32 to vector<2x32xf32>
    %733 = arith.addf %732, %731 : vector<2x32xf32>
    %734 = arith.divf %732, %733 : vector<2x32xf32>
    %735 = arith.mulf %726, %664 : vector<2x32xf32>
    %736 = arith.mulf %720, %728 : vector<2x32xf32>
    %737 = arith.addf %735, %736 : vector<2x32xf32>
    %738 = math.tanh %737 : vector<2x32xf32>
    %739 = arith.mulf %734, %738 : vector<2x32xf32>
    %740 = vector.shape_cast %712 : vector<2x1xi1> to vector<2x1xi1>
    %741 = vector.broadcast %740 : vector<2x1xi1> to vector<2x32xi1>
    %742 = arith.select %741, %739, %661 : vector<2x32xi1>, vector<2x32xf32>
    %743 = vector.shape_cast %712 : vector<2x1xi1> to vector<2x1xi1>
    %744 = vector.broadcast %743 : vector<2x1xi1> to vector<2x32xi1>
    %745 = arith.select %744, %737, %664 : vector<2x32xi1>, vector<2x32xf32>
    %c5_i32 = arith.constant 5 : i32
    %c2_i32_194 = arith.constant 2 : i32
    %746 = arith.muli %c5_i32, %c2_i32_194 : i32
    %747 = arith.index_cast %746 : i32 to index
    %c0_195 = arith.constant 0 : index
    %748 = vector.load %arg14[%747, %c0_195] : memref<16x256xf32, #tpu.memory_space<vmem>>, vector<2x128xf32>
    %c0_196 = arith.constant 0 : index
    %c0_197 = arith.constant 0 : index
    %c0_198 = arith.constant 0 : index
    %749 = vector.load %arg8[%c0_196, %c0_197, %c0_198] : memref<2x32x128xf32, #tpu.memory_space<vmem>>, vector<1x32x128xf32>
    %750 = vector.shape_cast %749 : vector<1x32x128xf32> to vector<32x128xf32>
    %751 = vector.broadcast %c5_i32 : i32 to vector<2x1xi32>
    %752 = arith.cmpi slt, %751, %15 : vector<2x1xi32>
    %cst_199 = arith.constant dense<0.000000e+00> : vector<2x128xf32>
    %753 = tpu.matmul %701, %750, %cst_199 {dimension_numbers = #tpu.dot_dimension_numbers<[1], [0], [0], [1], [0, 0, 1, 1], [], []>} : vector<2x32xf32>, vector<32x128xf32>, vector<2x128xf32> -> vector<2x128xf32>
    %754 = arith.addf %748, %753 : vector<2x128xf32>
    %755 = vector.extract_strided_slice %754 {offsets = [0, 0], sizes = [2, 32], strides = [1, 1]} : vector<2x128xf32> to vector<2x32xf32>
    %756 = arith.negf %755 : vector<2x32xf32>
    %757 = math.exp %756 : vector<2x32xf32>
    %cst_200 = arith.constant 1.000000e+00 : f32
    %758 = vector.broadcast %cst_200 : f32 to vector<2x32xf32>
    %759 = arith.addf %758, %757 : vector<2x32xf32>
    %760 = arith.divf %758, %759 : vector<2x32xf32>
    %761 = vector.extract_strided_slice %754 {offsets = [0, 32], sizes = [2, 32], strides = [1, 1]} : vector<2x128xf32> to vector<2x32xf32>
    %762 = arith.negf %761 : vector<2x32xf32>
    %763 = math.exp %762 : vector<2x32xf32>
    %cst_201 = arith.constant 1.000000e+00 : f32
    %764 = vector.broadcast %cst_201 : f32 to vector<2x32xf32>
    %765 = arith.addf %764, %763 : vector<2x32xf32>
    %766 = arith.divf %764, %765 : vector<2x32xf32>
    %767 = vector.extract_strided_slice %754 {offsets = [0, 64], sizes = [2, 32], strides = [1, 1]} : vector<2x128xf32> to vector<2x32xf32>
    %768 = math.tanh %767 : vector<2x32xf32>
    %769 = vector.extract_strided_slice %754 {offsets = [0, 96], sizes = [2, 32], strides = [1, 1]} : vector<2x128xf32> to vector<2x32xf32>
    %770 = arith.negf %769 : vector<2x32xf32>
    %771 = math.exp %770 : vector<2x32xf32>
    %cst_202 = arith.constant 1.000000e+00 : f32
    %772 = vector.broadcast %cst_202 : f32 to vector<2x32xf32>
    %773 = arith.addf %772, %771 : vector<2x32xf32>
    %774 = arith.divf %772, %773 : vector<2x32xf32>
    %775 = arith.mulf %766, %704 : vector<2x32xf32>
    %776 = arith.mulf %760, %768 : vector<2x32xf32>
    %777 = arith.addf %775, %776 : vector<2x32xf32>
    %778 = math.tanh %777 : vector<2x32xf32>
    %779 = arith.mulf %774, %778 : vector<2x32xf32>
    %780 = vector.shape_cast %752 : vector<2x1xi1> to vector<2x1xi1>
    %781 = vector.broadcast %780 : vector<2x1xi1> to vector<2x32xi1>
    %782 = arith.select %781, %779, %701 : vector<2x32xi1>, vector<2x32xf32>
    %783 = vector.shape_cast %752 : vector<2x1xi1> to vector<2x1xi1>
    %784 = vector.broadcast %783 : vector<2x1xi1> to vector<2x32xi1>
    %785 = arith.select %784, %777, %704 : vector<2x32xi1>, vector<2x32xf32>
    %c7_i32_203 = arith.constant 7 : i32
    %786 = arith.subi %c7_i32_203, %c5_i32 : i32
    %c2_i32_204 = arith.constant 2 : i32
    %787 = arith.muli %786, %c2_i32_204 : i32
    %788 = arith.index_cast %787 : i32 to index
    %c128_205 = arith.constant 128 : index
    %789 = vector.load %arg14[%788, %c128_205] : memref<16x256xf32, #tpu.memory_space<vmem>>, vector<2x128xf32>
    %c1_206 = arith.constant 1 : index
    %c0_207 = arith.constant 0 : index
    %c0_208 = arith.constant 0 : index
    %790 = vector.load %arg8[%c1_206, %c0_207, %c0_208] : memref<2x32x128xf32, #tpu.memory_space<vmem>>, vector<1x32x128xf32>
    %791 = vector.shape_cast %790 : vector<1x32x128xf32> to vector<32x128xf32>
    %792 = vector.broadcast %786 : i32 to vector<2x1xi32>
    %793 = arith.cmpi slt, %792, %15 : vector<2x1xi32>
    %cst_209 = arith.constant dense<0.000000e+00> : vector<2x128xf32>
    %794 = tpu.matmul %742, %791, %cst_209 {dimension_numbers = #tpu.dot_dimension_numbers<[1], [0], [0], [1], [0, 0, 1, 1], [], []>} : vector<2x32xf32>, vector<32x128xf32>, vector<2x128xf32> -> vector<2x128xf32>
    %795 = arith.addf %789, %794 : vector<2x128xf32>
    %796 = vector.extract_strided_slice %795 {offsets = [0, 0], sizes = [2, 32], strides = [1, 1]} : vector<2x128xf32> to vector<2x32xf32>
    %797 = arith.negf %796 : vector<2x32xf32>
    %798 = math.exp %797 : vector<2x32xf32>
    %cst_210 = arith.constant 1.000000e+00 : f32
    %799 = vector.broadcast %cst_210 : f32 to vector<2x32xf32>
    %800 = arith.addf %799, %798 : vector<2x32xf32>
    %801 = arith.divf %799, %800 : vector<2x32xf32>
    %802 = vector.extract_strided_slice %795 {offsets = [0, 32], sizes = [2, 32], strides = [1, 1]} : vector<2x128xf32> to vector<2x32xf32>
    %803 = arith.negf %802 : vector<2x32xf32>
    %804 = math.exp %803 : vector<2x32xf32>
    %cst_211 = arith.constant 1.000000e+00 : f32
    %805 = vector.broadcast %cst_211 : f32 to vector<2x32xf32>
    %806 = arith.addf %805, %804 : vector<2x32xf32>
    %807 = arith.divf %805, %806 : vector<2x32xf32>
    %808 = vector.extract_strided_slice %795 {offsets = [0, 64], sizes = [2, 32], strides = [1, 1]} : vector<2x128xf32> to vector<2x32xf32>
    %809 = math.tanh %808 : vector<2x32xf32>
    %810 = vector.extract_strided_slice %795 {offsets = [0, 96], sizes = [2, 32], strides = [1, 1]} : vector<2x128xf32> to vector<2x32xf32>
    %811 = arith.negf %810 : vector<2x32xf32>
    %812 = math.exp %811 : vector<2x32xf32>
    %cst_212 = arith.constant 1.000000e+00 : f32
    %813 = vector.broadcast %cst_212 : f32 to vector<2x32xf32>
    %814 = arith.addf %813, %812 : vector<2x32xf32>
    %815 = arith.divf %813, %814 : vector<2x32xf32>
    %816 = arith.mulf %807, %745 : vector<2x32xf32>
    %817 = arith.mulf %801, %809 : vector<2x32xf32>
    %818 = arith.addf %816, %817 : vector<2x32xf32>
    %819 = math.tanh %818 : vector<2x32xf32>
    %820 = arith.mulf %815, %819 : vector<2x32xf32>
    %821 = vector.shape_cast %793 : vector<2x1xi1> to vector<2x1xi1>
    %822 = vector.broadcast %821 : vector<2x1xi1> to vector<2x32xi1>
    %823 = arith.select %822, %820, %742 : vector<2x32xi1>, vector<2x32xf32>
    %824 = vector.shape_cast %793 : vector<2x1xi1> to vector<2x1xi1>
    %825 = vector.broadcast %824 : vector<2x1xi1> to vector<2x32xi1>
    %826 = arith.select %825, %818, %745 : vector<2x32xi1>, vector<2x32xf32>
    %c6_i32 = arith.constant 6 : i32
    %c2_i32_213 = arith.constant 2 : i32
    %827 = arith.muli %c6_i32, %c2_i32_213 : i32
    %828 = arith.index_cast %827 : i32 to index
    %c0_214 = arith.constant 0 : index
    %829 = vector.load %arg14[%828, %c0_214] : memref<16x256xf32, #tpu.memory_space<vmem>>, vector<2x128xf32>
    %c0_215 = arith.constant 0 : index
    %c0_216 = arith.constant 0 : index
    %c0_217 = arith.constant 0 : index
    %830 = vector.load %arg8[%c0_215, %c0_216, %c0_217] : memref<2x32x128xf32, #tpu.memory_space<vmem>>, vector<1x32x128xf32>
    %831 = vector.shape_cast %830 : vector<1x32x128xf32> to vector<32x128xf32>
    %832 = vector.broadcast %c6_i32 : i32 to vector<2x1xi32>
    %833 = arith.cmpi slt, %832, %15 : vector<2x1xi32>
    %cst_218 = arith.constant dense<0.000000e+00> : vector<2x128xf32>
    %834 = tpu.matmul %782, %831, %cst_218 {dimension_numbers = #tpu.dot_dimension_numbers<[1], [0], [0], [1], [0, 0, 1, 1], [], []>} : vector<2x32xf32>, vector<32x128xf32>, vector<2x128xf32> -> vector<2x128xf32>
    %835 = arith.addf %829, %834 : vector<2x128xf32>
    %836 = vector.extract_strided_slice %835 {offsets = [0, 0], sizes = [2, 32], strides = [1, 1]} : vector<2x128xf32> to vector<2x32xf32>
    %837 = arith.negf %836 : vector<2x32xf32>
    %838 = math.exp %837 : vector<2x32xf32>
    %cst_219 = arith.constant 1.000000e+00 : f32
    %839 = vector.broadcast %cst_219 : f32 to vector<2x32xf32>
    %840 = arith.addf %839, %838 : vector<2x32xf32>
    %841 = arith.divf %839, %840 : vector<2x32xf32>
    %842 = vector.extract_strided_slice %835 {offsets = [0, 32], sizes = [2, 32], strides = [1, 1]} : vector<2x128xf32> to vector<2x32xf32>
    %843 = arith.negf %842 : vector<2x32xf32>
    %844 = math.exp %843 : vector<2x32xf32>
    %cst_220 = arith.constant 1.000000e+00 : f32
    %845 = vector.broadcast %cst_220 : f32 to vector<2x32xf32>
    %846 = arith.addf %845, %844 : vector<2x32xf32>
    %847 = arith.divf %845, %846 : vector<2x32xf32>
    %848 = vector.extract_strided_slice %835 {offsets = [0, 64], sizes = [2, 32], strides = [1, 1]} : vector<2x128xf32> to vector<2x32xf32>
    %849 = math.tanh %848 : vector<2x32xf32>
    %850 = vector.extract_strided_slice %835 {offsets = [0, 96], sizes = [2, 32], strides = [1, 1]} : vector<2x128xf32> to vector<2x32xf32>
    %851 = arith.negf %850 : vector<2x32xf32>
    %852 = math.exp %851 : vector<2x32xf32>
    %cst_221 = arith.constant 1.000000e+00 : f32
    %853 = vector.broadcast %cst_221 : f32 to vector<2x32xf32>
    %854 = arith.addf %853, %852 : vector<2x32xf32>
    %855 = arith.divf %853, %854 : vector<2x32xf32>
    %856 = arith.mulf %847, %785 : vector<2x32xf32>
    %857 = arith.mulf %841, %849 : vector<2x32xf32>
    %858 = arith.addf %856, %857 : vector<2x32xf32>
    %859 = math.tanh %858 : vector<2x32xf32>
    %860 = arith.mulf %855, %859 : vector<2x32xf32>
    %861 = vector.shape_cast %833 : vector<2x1xi1> to vector<2x1xi1>
    %862 = vector.broadcast %861 : vector<2x1xi1> to vector<2x32xi1>
    %863 = arith.select %862, %860, %782 : vector<2x32xi1>, vector<2x32xf32>
    %864 = vector.shape_cast %833 : vector<2x1xi1> to vector<2x1xi1>
    %865 = vector.broadcast %864 : vector<2x1xi1> to vector<2x32xi1>
    %866 = arith.select %865, %858, %785 : vector<2x32xi1>, vector<2x32xf32>
    %c7_i32_222 = arith.constant 7 : i32
    %867 = arith.subi %c7_i32_222, %c6_i32 : i32
    %c2_i32_223 = arith.constant 2 : i32
    %868 = arith.muli %867, %c2_i32_223 : i32
    %869 = arith.index_cast %868 : i32 to index
    %c128_224 = arith.constant 128 : index
    %870 = vector.load %arg14[%869, %c128_224] : memref<16x256xf32, #tpu.memory_space<vmem>>, vector<2x128xf32>
    %c1_225 = arith.constant 1 : index
    %c0_226 = arith.constant 0 : index
    %c0_227 = arith.constant 0 : index
    %871 = vector.load %arg8[%c1_225, %c0_226, %c0_227] : memref<2x32x128xf32, #tpu.memory_space<vmem>>, vector<1x32x128xf32>
    %872 = vector.shape_cast %871 : vector<1x32x128xf32> to vector<32x128xf32>
    %873 = vector.broadcast %867 : i32 to vector<2x1xi32>
    %874 = arith.cmpi slt, %873, %15 : vector<2x1xi32>
    %cst_228 = arith.constant dense<0.000000e+00> : vector<2x128xf32>
    %875 = tpu.matmul %823, %872, %cst_228 {dimension_numbers = #tpu.dot_dimension_numbers<[1], [0], [0], [1], [0, 0, 1, 1], [], []>} : vector<2x32xf32>, vector<32x128xf32>, vector<2x128xf32> -> vector<2x128xf32>
    %876 = arith.addf %870, %875 : vector<2x128xf32>
    %877 = vector.extract_strided_slice %876 {offsets = [0, 0], sizes = [2, 32], strides = [1, 1]} : vector<2x128xf32> to vector<2x32xf32>
    %878 = arith.negf %877 : vector<2x32xf32>
    %879 = math.exp %878 : vector<2x32xf32>
    %cst_229 = arith.constant 1.000000e+00 : f32
    %880 = vector.broadcast %cst_229 : f32 to vector<2x32xf32>
    %881 = arith.addf %880, %879 : vector<2x32xf32>
    %882 = arith.divf %880, %881 : vector<2x32xf32>
    %883 = vector.extract_strided_slice %876 {offsets = [0, 32], sizes = [2, 32], strides = [1, 1]} : vector<2x128xf32> to vector<2x32xf32>
    %884 = arith.negf %883 : vector<2x32xf32>
    %885 = math.exp %884 : vector<2x32xf32>
    %cst_230 = arith.constant 1.000000e+00 : f32
    %886 = vector.broadcast %cst_230 : f32 to vector<2x32xf32>
    %887 = arith.addf %886, %885 : vector<2x32xf32>
    %888 = arith.divf %886, %887 : vector<2x32xf32>
    %889 = vector.extract_strided_slice %876 {offsets = [0, 64], sizes = [2, 32], strides = [1, 1]} : vector<2x128xf32> to vector<2x32xf32>
    %890 = math.tanh %889 : vector<2x32xf32>
    %891 = vector.extract_strided_slice %876 {offsets = [0, 96], sizes = [2, 32], strides = [1, 1]} : vector<2x128xf32> to vector<2x32xf32>
    %892 = arith.negf %891 : vector<2x32xf32>
    %893 = math.exp %892 : vector<2x32xf32>
    %cst_231 = arith.constant 1.000000e+00 : f32
    %894 = vector.broadcast %cst_231 : f32 to vector<2x32xf32>
    %895 = arith.addf %894, %893 : vector<2x32xf32>
    %896 = arith.divf %894, %895 : vector<2x32xf32>
    %897 = arith.mulf %888, %826 : vector<2x32xf32>
    %898 = arith.mulf %882, %890 : vector<2x32xf32>
    %899 = arith.addf %897, %898 : vector<2x32xf32>
    %900 = math.tanh %899 : vector<2x32xf32>
    %901 = arith.mulf %896, %900 : vector<2x32xf32>
    %902 = vector.shape_cast %874 : vector<2x1xi1> to vector<2x1xi1>
    %903 = vector.broadcast %902 : vector<2x1xi1> to vector<2x32xi1>
    %904 = arith.select %903, %901, %823 : vector<2x32xi1>, vector<2x32xf32>
    %905 = vector.shape_cast %874 : vector<2x1xi1> to vector<2x1xi1>
    %906 = vector.broadcast %905 : vector<2x1xi1> to vector<2x32xi1>
    %907 = arith.select %906, %899, %826 : vector<2x32xi1>, vector<2x32xf32>
    %c7_i32_232 = arith.constant 7 : i32
    %c2_i32_233 = arith.constant 2 : i32
    %908 = arith.muli %c7_i32_232, %c2_i32_233 : i32
    %909 = arith.index_cast %908 : i32 to index
    %c0_234 = arith.constant 0 : index
    %910 = vector.load %arg14[%909, %c0_234] : memref<16x256xf32, #tpu.memory_space<vmem>>, vector<2x128xf32>
    %c0_235 = arith.constant 0 : index
    %c0_236 = arith.constant 0 : index
    %c0_237 = arith.constant 0 : index
    %911 = vector.load %arg8[%c0_235, %c0_236, %c0_237] : memref<2x32x128xf32, #tpu.memory_space<vmem>>, vector<1x32x128xf32>
    %912 = vector.shape_cast %911 : vector<1x32x128xf32> to vector<32x128xf32>
    %913 = vector.broadcast %c7_i32_232 : i32 to vector<2x1xi32>
    %914 = arith.cmpi slt, %913, %15 : vector<2x1xi32>
    %cst_238 = arith.constant dense<0.000000e+00> : vector<2x128xf32>
    %915 = tpu.matmul %863, %912, %cst_238 {dimension_numbers = #tpu.dot_dimension_numbers<[1], [0], [0], [1], [0, 0, 1, 1], [], []>} : vector<2x32xf32>, vector<32x128xf32>, vector<2x128xf32> -> vector<2x128xf32>
    %916 = arith.addf %910, %915 : vector<2x128xf32>
    %917 = vector.extract_strided_slice %916 {offsets = [0, 0], sizes = [2, 32], strides = [1, 1]} : vector<2x128xf32> to vector<2x32xf32>
    %918 = arith.negf %917 : vector<2x32xf32>
    %919 = math.exp %918 : vector<2x32xf32>
    %cst_239 = arith.constant 1.000000e+00 : f32
    %920 = vector.broadcast %cst_239 : f32 to vector<2x32xf32>
    %921 = arith.addf %920, %919 : vector<2x32xf32>
    %922 = arith.divf %920, %921 : vector<2x32xf32>
    %923 = vector.extract_strided_slice %916 {offsets = [0, 32], sizes = [2, 32], strides = [1, 1]} : vector<2x128xf32> to vector<2x32xf32>
    %924 = arith.negf %923 : vector<2x32xf32>
    %925 = math.exp %924 : vector<2x32xf32>
    %cst_240 = arith.constant 1.000000e+00 : f32
    %926 = vector.broadcast %cst_240 : f32 to vector<2x32xf32>
    %927 = arith.addf %926, %925 : vector<2x32xf32>
    %928 = arith.divf %926, %927 : vector<2x32xf32>
    %929 = vector.extract_strided_slice %916 {offsets = [0, 64], sizes = [2, 32], strides = [1, 1]} : vector<2x128xf32> to vector<2x32xf32>
    %930 = math.tanh %929 : vector<2x32xf32>
    %931 = vector.extract_strided_slice %916 {offsets = [0, 96], sizes = [2, 32], strides = [1, 1]} : vector<2x128xf32> to vector<2x32xf32>
    %932 = arith.negf %931 : vector<2x32xf32>
    %933 = math.exp %932 : vector<2x32xf32>
    %cst_241 = arith.constant 1.000000e+00 : f32
    %934 = vector.broadcast %cst_241 : f32 to vector<2x32xf32>
    %935 = arith.addf %934, %933 : vector<2x32xf32>
    %936 = arith.divf %934, %935 : vector<2x32xf32>
    %937 = arith.mulf %928, %866 : vector<2x32xf32>
    %938 = arith.mulf %922, %930 : vector<2x32xf32>
    %939 = arith.addf %937, %938 : vector<2x32xf32>
    %940 = math.tanh %939 : vector<2x32xf32>
    %941 = arith.mulf %936, %940 : vector<2x32xf32>
    %942 = vector.shape_cast %914 : vector<2x1xi1> to vector<2x1xi1>
    %943 = vector.broadcast %942 : vector<2x1xi1> to vector<2x32xi1>
    %944 = arith.select %943, %941, %863 : vector<2x32xi1>, vector<2x32xf32>
    %945 = vector.shape_cast %914 : vector<2x1xi1> to vector<2x1xi1>
    %946 = vector.broadcast %945 : vector<2x1xi1> to vector<2x32xi1>
    %947 = arith.select %946, %939, %866 : vector<2x32xi1>, vector<2x32xf32>
    %c7_i32_242 = arith.constant 7 : i32
    %948 = arith.subi %c7_i32_242, %c7_i32_232 : i32
    %c2_i32_243 = arith.constant 2 : i32
    %949 = arith.muli %948, %c2_i32_243 : i32
    %950 = arith.index_cast %949 : i32 to index
    %c128_244 = arith.constant 128 : index
    %951 = vector.load %arg14[%950, %c128_244] : memref<16x256xf32, #tpu.memory_space<vmem>>, vector<2x128xf32>
    %c1_245 = arith.constant 1 : index
    %c0_246 = arith.constant 0 : index
    %c0_247 = arith.constant 0 : index
    %952 = vector.load %arg8[%c1_245, %c0_246, %c0_247] : memref<2x32x128xf32, #tpu.memory_space<vmem>>, vector<1x32x128xf32>
    %953 = vector.shape_cast %952 : vector<1x32x128xf32> to vector<32x128xf32>
    %954 = vector.broadcast %948 : i32 to vector<2x1xi32>
    %955 = arith.cmpi slt, %954, %15 : vector<2x1xi32>
    %cst_248 = arith.constant dense<0.000000e+00> : vector<2x128xf32>
    %956 = tpu.matmul %904, %953, %cst_248 {dimension_numbers = #tpu.dot_dimension_numbers<[1], [0], [0], [1], [0, 0, 1, 1], [], []>} : vector<2x32xf32>, vector<32x128xf32>, vector<2x128xf32> -> vector<2x128xf32>
    %957 = arith.addf %951, %956 : vector<2x128xf32>
    %958 = vector.extract_strided_slice %957 {offsets = [0, 0], sizes = [2, 32], strides = [1, 1]} : vector<2x128xf32> to vector<2x32xf32>
    %959 = arith.negf %958 : vector<2x32xf32>
    %960 = math.exp %959 : vector<2x32xf32>
    %cst_249 = arith.constant 1.000000e+00 : f32
    %961 = vector.broadcast %cst_249 : f32 to vector<2x32xf32>
    %962 = arith.addf %961, %960 : vector<2x32xf32>
    %963 = arith.divf %961, %962 : vector<2x32xf32>
    %964 = vector.extract_strided_slice %957 {offsets = [0, 32], sizes = [2, 32], strides = [1, 1]} : vector<2x128xf32> to vector<2x32xf32>
    %965 = arith.negf %964 : vector<2x32xf32>
    %966 = math.exp %965 : vector<2x32xf32>
    %cst_250 = arith.constant 1.000000e+00 : f32
    %967 = vector.broadcast %cst_250 : f32 to vector<2x32xf32>
    %968 = arith.addf %967, %966 : vector<2x32xf32>
    %969 = arith.divf %967, %968 : vector<2x32xf32>
    %970 = vector.extract_strided_slice %957 {offsets = [0, 64], sizes = [2, 32], strides = [1, 1]} : vector<2x128xf32> to vector<2x32xf32>
    %971 = math.tanh %970 : vector<2x32xf32>
    %972 = vector.extract_strided_slice %957 {offsets = [0, 96], sizes = [2, 32], strides = [1, 1]} : vector<2x128xf32> to vector<2x32xf32>
    %973 = arith.negf %972 : vector<2x32xf32>
    %974 = math.exp %973 : vector<2x32xf32>
    %cst_251 = arith.constant 1.000000e+00 : f32
    %975 = vector.broadcast %cst_251 : f32 to vector<2x32xf32>
    %976 = arith.addf %975, %974 : vector<2x32xf32>
    %977 = arith.divf %975, %976 : vector<2x32xf32>
    %978 = arith.mulf %969, %907 : vector<2x32xf32>
    %979 = arith.mulf %963, %971 : vector<2x32xf32>
    %980 = arith.addf %978, %979 : vector<2x32xf32>
    %981 = math.tanh %980 : vector<2x32xf32>
    %982 = arith.mulf %977, %981 : vector<2x32xf32>
    %983 = vector.shape_cast %955 : vector<2x1xi1> to vector<2x1xi1>
    %984 = vector.broadcast %983 : vector<2x1xi1> to vector<2x32xi1>
    %985 = arith.select %984, %982, %904 : vector<2x32xi1>, vector<2x32xf32>
    %986 = vector.shape_cast %955 : vector<2x1xi1> to vector<2x1xi1>
    %987 = vector.broadcast %986 : vector<2x1xi1> to vector<2x32xi1>
    %988 = arith.select %987, %980, %907 : vector<2x32xi1>, vector<2x32xf32>
    %c8_i32 = arith.constant 8 : i32
    %c0_252 = arith.constant 0 : index
    %c0_253 = arith.constant 0 : index
    %989 = vector.load %arg10[%c0_252, %c0_253] : memref<64x3xf32, #tpu.memory_space<vmem>>, vector<32x3xf32>
    %cst_254 = arith.constant dense<0.000000e+00> : vector<2x3xf32>
    %990 = tpu.matmul %944, %989, %cst_254 {dimension_numbers = #tpu.dot_dimension_numbers<[1], [0], [0], [1], [0, 0, 1, 1], [], []>} : vector<2x32xf32>, vector<32x3xf32>, vector<2x3xf32> -> vector<2x3xf32>
    %c32 = arith.constant 32 : index
    %c0_255 = arith.constant 0 : index
    %991 = vector.load %arg10[%c32, %c0_255] : memref<64x3xf32, #tpu.memory_space<vmem>>, vector<32x3xf32>
    %cst_256 = arith.constant dense<0.000000e+00> : vector<2x3xf32>
    %992 = tpu.matmul %985, %991, %cst_256 {dimension_numbers = #tpu.dot_dimension_numbers<[1], [0], [0], [1], [0, 0, 1, 1], [], []>} : vector<2x32xf32>, vector<32x3xf32>, vector<2x3xf32> -> vector<2x3xf32>
    %993 = arith.addf %990, %992 : vector<2x3xf32>
    %c0_257 = arith.constant 0 : index
    %c0_258 = arith.constant 0 : index
    %994 = vector.load %arg11[%c0_257, %c0_258] : memref<1x3xf32, #tpu.memory_space<vmem>>, vector<1x3xf32>
    %995 = vector.broadcast %994 : vector<1x3xf32> to vector<2x3xf32>
    %996 = arith.addf %993, %995 : vector<2x3xf32>
    %997 = math.tanh %996 : vector<2x3xf32>
    %cst_259 = arith.constant dense<0xFF800000> : vector<2xf32>
    %998 = vector.multi_reduction <maximumf>, %997, %cst_259 [1] : vector<2x3xf32> to vector<2xf32>
    %999 = vector.shape_cast %998 : vector<2xf32> to vector<2x1xf32>
    %1000 = vector.broadcast %999 : vector<2x1xf32> to vector<2x3xf32>
    %1001 = arith.subf %997, %1000 : vector<2x3xf32>
    %1002 = math.exp %1001 : vector<2x3xf32>
    %cst_260 = arith.constant dense<0.000000e+00> : vector<2xf32>
    %1003 = vector.multi_reduction <add>, %1002, %cst_260 [1] : vector<2x3xf32> to vector<2xf32>
    %1004 = vector.shape_cast %1003 : vector<2xf32> to vector<2x1xf32>
    %1005 = tpu.reciprocal %1004 {approx = true} : vector<2x1xf32> -> vector<2x1xf32>
    %1006 = vector.broadcast %1005 : vector<2x1xf32> to vector<2x3xf32>
    %1007 = arith.mulf %1002, %1006 : vector<2x3xf32>
    %c0_261 = arith.constant 0 : index
    %c0_262 = arith.constant 0 : index
    %1008 = vector.load %arg12[%c0_261, %c0_262] : memref<2x3xf32, #tpu.memory_space<vmem>>, vector<2x3xf32>
    tpu.vector_store %arg12[%c0_261, %c0_262], %1007 {strides = array<i32>} : memref<2x3xf32, #tpu.memory_space<vmem>>, vector<2x3xf32>,
    return
  }
}

</mosaic_0001>

<llo_original>
// kernel: tpu_custom_call.1
$region0: #{tpu_custom_call.1}
  #allocation0 [shape = 'u32[]', space=smem, size = 0x4, offset = 0x4, fixed_abs, tag = 'smem constant byte address 0x4 - core index']
  #allocation1 [shape = 'u32[144,128]{1,0:T(1,128)}', space=vmem, size = 0x12000, scoped, tag = 'internal scratch']
  #allocation2 [shape = 'f32[8,256]{1,0:T(8,128)}', space=vmem, size = 0x2000, scoped, tag = 'scratch operand']
  #allocation3 [shape = 'f32[16,256]{1,0:T(8,128)}', space=vmem, size = 0x4000, scoped, tag = 'scratch operand']
  %s0 = inlined_call_operand.vmem [shape: f32[16,64], index: 0, kind: input, shape index: {}]
  %s1 = inlined_call_operand.vmem [shape: f32[8,64], index: 1, kind: input, shape index: {}]
  %s2 = inlined_call_operand.vmem [shape: s32[2,1], index: 2, kind: input, shape index: {}]
  %s3 = inlined_call_operand.vmem [shape: s32[2,1], index: 3, kind: input, shape index: {}]
  %s4 = inlined_call_operand.hbm [shape: f32[64,256], index: 4, kind: input, shape index: {}]
  %s5 = inlined_call_operand.vmem [shape: f32[2,32,128], index: 5, kind: input, shape index: {}]
  %s6 = inlined_call_operand.vmem [shape: f32[1,256], index: 6, kind: input, shape index: {}]
  %s7 = inlined_call_operand.hbm [shape: f32[64,256], index: 7, kind: input, shape index: {}]
  %s8 = inlined_call_operand.hbm [shape: f32[2,32,128], index: 8, kind: input, shape index: {}]
  %s9 = inlined_call_operand.vmem [shape: f32[1,256], index: 9, kind: input, shape index: {}]
  %s10 = inlined_call_operand.vmem [shape: f32[64,3], index: 10, kind: input, shape index: {}]
  %s11 = inlined_call_operand.vmem [shape: f32[1,3], index: 11, kind: input, shape index: {}]
  %s12 = inlined_call_operand.hbm [shape: f32[2,3], index: 12, kind: output, shape index: {}]
  %s13 = sld [smem:[#allocation0]]
  $region70: #{tpu_custom_call.1} parent=0
    _
  %s15 = ssub.s32 1, %s13
  %s16 = scalar_select 0, %s15, %s13
  $region1: #{tpu_custom_call.1} parent=0
    #allocation4 [shape = 'u8[65536]{0}', space=vmem, size = 0x10000, scoped, tag = 'input window, operand 4, single buffered']
    #allocation5 [shape = 's32[1]{0}', space=sflag, size = 0x4, scoped, tag = 'scoped memory for tpu_custom_call.1']
    #allocation6 [shape = 's32[1]{0}', space=sflag, size = 0x4, scoped, tag = 'scoped memory for tpu_custom_call.1']
    #allocation7 [shape = 'u8[65536]{0}', space=vmem, size = 0x10000, scoped, tag = 'input window, operand 7, single buffered']
    #allocation8 [shape = 's32[1]{0}', space=sflag, size = 0x4, scoped, tag = 'scoped memory for tpu_custom_call.1']
    #allocation9 [shape = 'u8[32768]{0}', space=vmem, size = 0x8000, scoped, tag = 'input window, operand 8, single buffered']
    #allocation10 [shape = 'u8[1024]{0}', space=vmem, size = 0x400, scoped, tag = 'output window, operand 0, single buffered']
    %17 = vsyncpa [#allocation5], 0
    %18 = vsyncpa [#allocation8], 0
    %19 = vsyncpa [#allocation6], 0
    // Predicated region
    $region2: #{tpu_custom_call.1} parent=1 // pred_check
      _
    $region3: #{tpu_custom_call.1} parent=1 // pred_check_branch
      %21 = sbr.rel (0) target = $region5
    $region4: #{tpu_custom_call.1} parent=1 // pred_region
      _
    $region5: #{tpu_custom_call.1} parent=1 // pred_fallthru
      _
    // Predicated region
    $region6: #{tpu_custom_call.1} parent=1 // pred_check
      _
    $region7: #{tpu_custom_call.1} parent=1 // pred_check_branch
      %23 = sbr.rel (0) target = $region9
    $region8: #{tpu_custom_call.1} parent=1 // pred_region
      _
    $region9: #{tpu_custom_call.1} parent=1 // pred_fallthru
      _
    // Predicated region
    $region10: #{tpu_custom_call.1} parent=1 // pred_check
      _
    $region11: #{tpu_custom_call.1} parent=1 // pred_check_branch
      %25 = sbr.rel (0) target = $region13
    $region12: #{tpu_custom_call.1} parent=1 // pred_region
      _
    $region13: #{tpu_custom_call.1} parent=1 // pred_fallthru
      _
    // Predicated region
    $region14: #{tpu_custom_call.1} parent=1 // pred_check
      _
    $region15: #{tpu_custom_call.1} parent=1 // pred_check_branch
      %27 = sbr.rel (0) target = $region17
    $region16: #{tpu_custom_call.1} parent=1 // pred_region
      _
    $region17: #{tpu_custom_call.1} parent=1 // pred_fallthru
      _
    // Predicated region
    $region18: #{tpu_custom_call.1} parent=1 // pred_check
      _
    $region19: #{tpu_custom_call.1} parent=1 // pred_check_branch
      %29 = sbr.rel (0) target = $region21
    $region20: #{tpu_custom_call.1} parent=1 // pred_region
      %s31 = ssub.s32 2048, 2048
      %32 = vsyncadd [#allocation5], %s31
      %s33 = sshll.u32 [#allocation4], 4
      %s34 = int_to_ptr.vmem [resolvable:$true] %s33
      %39 = dma.hbm_to_vmem [thread:$0]  %s4, 2048, %s34, [#allocation5], 256, 256, 16
    $region21: #{tpu_custom_call.1} parent=1 // pred_fallthru
      _
    // Predicated region
    $region22: #{tpu_custom_call.1} parent=1 // pred_check
      _
    $region23: #{tpu_custom_call.1} parent=1 // pred_check_branch
      %41 = sbr.rel (0) target = $region25
    $region24: #{tpu_custom_call.1} parent=1 // pred_region
      _
    $region25: #{tpu_custom_call.1} parent=1 // pred_fallthru
      _
    // Predicated region
    $region26: #{tpu_custom_call.1} parent=1 // pred_check
      _
    $region27: #{tpu_custom_call.1} parent=1 // pred_check_branch
      %43 = sbr.rel (0) target = $region29
    $region28: #{tpu_custom_call.1} parent=1 // pred_region
      _
    $region29: #{tpu_custom_call.1} parent=1 // pred_fallthru
      _
    // Predicated region
    $region30: #{tpu_custom_call.1} parent=1 // pred_check
      _
    $region31: #{tpu_custom_call.1} parent=1 // pred_check_branch
      %45 = sbr.rel (0) target = $region33
    $region32: #{tpu_custom_call.1} parent=1 // pred_region
      %s47 = ssub.s32 2048, 2048
      %48 = vsyncadd [#allocation8], %s47
      %s49 = sshll.u32 [#allocation7], 4
      %s50 = int_to_ptr.vmem [resolvable:$true] %s49
      %55 = dma.hbm_to_vmem [thread:$0]  %s7, 2048, %s50, [#allocation8], 256, 256, 16
    $region33: #{tpu_custom_call.1} parent=1 // pred_fallthru
      _
    // Predicated region
    $region34: #{tpu_custom_call.1} parent=1 // pred_check
      _
    $region35: #{tpu_custom_call.1} parent=1 // pred_check_branch
      %57 = sbr.rel (0) target = $region37
    $region36: #{tpu_custom_call.1} parent=1 // pred_region
      %s59 = ssub.s32 1024, 1024
      %60 = vsyncadd [#allocation8], %s59
      %s61 = sshll.u32 [#allocation9], 4
      %s62 = int_to_ptr.vmem [resolvable:$true] %s61
      %67 = dma.hbm_to_vmem [thread:$0]  %s8, 1024, %s62, [#allocation8], 128, 128, 8
    $region37: #{tpu_custom_call.1} parent=1 // pred_fallthru
      _
    // Predicated region
    $region38: #{tpu_custom_call.1} parent=1 // pred_check
      _
    $region39: #{tpu_custom_call.1} parent=1 // pred_check_branch
      %69 = sbr.rel (0) target = $region41
    $region40: #{tpu_custom_call.1} parent=1 // pred_region
      _
    $region41: #{tpu_custom_call.1} parent=1 // pred_fallthru
      _
    // Predicated region
    $region42: #{tpu_custom_call.1} parent=1 // pred_check
      _
    $region43: #{tpu_custom_call.1} parent=1 // pred_check_branch
      %71 = sbr.rel (0) target = $region45
    $region44: #{tpu_custom_call.1} parent=1 // pred_region
      _
    $region45: #{tpu_custom_call.1} parent=1 // pred_fallthru
      _
    // Predicated region
    $region46: #{tpu_custom_call.1} parent=1 // pred_check
      _
    $region47: #{tpu_custom_call.1} parent=1 // pred_check_branch
      %73 = sbr.rel (0) target = $region49
    $region48: #{tpu_custom_call.1} parent=1 // pred_region
      _
    $region49: #{tpu_custom_call.1} parent=1 // pred_fallthru
      _
    // Predicated region
    $region50: #{tpu_custom_call.1} parent=1 // pred_check
      _
    $region51: #{tpu_custom_call.1} parent=1 // pred_check_branch
      %75 = sbr.rel (0) target = $region53
    $region52: #{tpu_custom_call.1} parent=1 // pred_region
      %76 = dma.done [#allocation5], 2048
    $region53: #{tpu_custom_call.1} parent=1 // pred_fallthru
      _
    // Predicated region
    $region54: #{tpu_custom_call.1} parent=1 // pred_check
      _
    $region55: #{tpu_custom_call.1} parent=1 // pred_check_branch
      %78 = sbr.rel (0) target = $region57
    $region56: #{tpu_custom_call.1} parent=1 // pred_region
      %79 = dma.done [#allocation8], 2048
    $region57: #{tpu_custom_call.1} parent=1 // pred_fallthru
      _
    // Predicated region
    $region58: #{tpu_custom_call.1} parent=1 // pred_check
      _
    $region59: #{tpu_custom_call.1} parent=1 // pred_check_branch
      %81 = sbr.rel (0) target = $region61
    $region60: #{tpu_custom_call.1} parent=1 // pred_region
      %82 = dma.done [#allocation8], 1024
    $region61: #{tpu_custom_call.1} parent=1 // pred_fallthru
      _
    %v83 = vld [vmem:[%s1] sm:$0xff]
    %v84 = vld [vmem:[#allocation4] sm:$0xff]
    %v85 = vld [vmem:[#allocation4 + $0x8] sm:$0xff]
    %v86 = vld [vmem:[#allocation4 + $0x10] sm:$0xff]
    %v87 = vld [vmem:[#allocation4 + $0x18] sm:$0xff]
    %v88 = vld [vmem:[#allocation4 + $0x20] sm:$0xff]
    %v89 = vld [vmem:[#allocation4 + $0x28] sm:$0xff]
    %v90 = vld [vmem:[#allocation4 + $0x30] sm:$0xff]
    %v91 = vld [vmem:[#allocation4 + $0x38] sm:$0xff]
    %v92 = vld [vmem:[#allocation4 + $0x40] sm:$0xff]
    %v93 = vld [vmem:[#allocation4 + $0x48] sm:$0xff]
    %v94 = vld [vmem:[#allocation4 + $0x50] sm:$0xff]
    %v95 = vld [vmem:[#allocation4 + $0x58] sm:$0xff]
    %v96 = vld [vmem:[#allocation4 + $0x60] sm:$0xff]
    %v97 = vld [vmem:[#allocation4 + $0x68] sm:$0xff]
    %v98 = vld [vmem:[#allocation4 + $0x70] sm:$0xff]
    %v99 = vld [vmem:[#allocation4 + $0x78] sm:$0xff]
    %v100 = vld [vmem:[%s6] sm:$0x3]
    %v102 = vlaneseq
    %v103 = vshrl.u32 %v102, 7
    %v104 = vsub.s32 0, %v103
    %v105 = vrot.slane %v100, %v104
    %v106 = vlaneseq
    %v107 = vshrl.u32 %v106, 7
    %v108 = vsub.s32 1, %v107
    %v109 = vrot.slane %v100, %v108
    %vm112 = vcmask 523264
    %v114 = vsel %vm112, %v83, 0
    %116 = vmatprep.subr.mxu0 %v85
    %117 = vmatpush1.msra.mxu0 %v84
    %118 = vmatprep.subr.mxu0 %v87
    %119 = vmatpush1.msra.mxu0 %v86
    %120 = vmatprep.subr.mxu0 %v89
    %121 = vmatpush1.msra.mxu0 %v88
    %122 = vmatprep.subr.mxu0 %v91
    %123 = vmatpush1.msra.mxu0 %v90
    %124 = vmatprep.subr.mxu0 %v93
    %125 = vmatpush1.msra.mxu0 %v92
    %126 = vmatprep.subr.mxu0 %v95
    %127 = vmatpush1.msra.mxu0 %v94
    %128 = vmatprep.subr.mxu0 %v97
    %129 = vmatpush1.msra.mxu0 %v96
    %130 = vmatprep.subr.mxu0 %v99
    %131 = vmatpush1.msra.mxu0 %v98
    %132 = vmatprep.subr.mxu0 0.0
    %133 = vmatpush1.msra.mxu0 0.0
    %134 = vmatprep.subr.mxu0 0.0
    %135 = vmatpush1.msra.mxu0 0.0
    %136 = vmatprep.subr.mxu0 0.0
    %137 = vmatpush1.msra.mxu0 0.0
    %138 = vmatprep.subr.mxu0 0.0
    %139 = vmatpush1.msra.mxu0 0.0
    %140 = vmatprep.subr.mxu0 0.0
    %141 = vmatpush1.msra.mxu0 0.0
    %142 = vmatprep.subr.mxu0 0.0
    %143 = vmatpush1.msra.mxu0 0.0
    %144 = vmatprep.subr.mxu0 0.0
    %145 = vmatpush1.msra.mxu0 0.0
    %146 = vmatprep.subr.mxu0 0.0
    %147 = vmatpush1.msra.mxu0 0.0
    %148 = vmatprep.subr.mxu0 0.0
    %149 = vmatpush1.msra.mxu0 0.0
    %150 = vmatprep.subr.mxu0 0.0
    %151 = vmatpush1.msra.mxu0 0.0
    %152 = vmatprep.subr.mxu0 0.0
    %153 = vmatpush1.msra.mxu0 0.0
    %154 = vmatprep.subr.mxu0 0.0
    %155 = vmatpush1.msra.mxu0 0.0
    %156 = vmatprep.subr.mxu0 0.0
    %157 = vmatpush1.msra.mxu0 0.0
    %158 = vmatprep.subr.mxu0 0.0
    %159 = vmatpush1.msra.mxu0 0.0
    %160 = vmatprep.subr.mxu0 0.0
    %161 = vmatpush1.msra.mxu0 0.0
    %162 = vmatprep.subr.mxu0 0.0
    %163 = vmatpush1.msra.mxu0 0.0
    %164 = vmatprep.subr.mxu0 0.0
    %165 = vmatpush1.msra.mxu0 0.0
    %166 = vmatprep.subr.mxu0 0.0
    %167 = vmatpush1.msra.mxu0 0.0
    %168 = vmatprep.subr.mxu0 0.0
    %169 = vmatpush1.msra.mxu0 0.0
    %170 = vmatprep.subr.mxu0 0.0
    %171 = vmatpush1.msra.mxu0 0.0
    %172 = vmatprep.subr.mxu0 0.0
    %173 = vmatpush1.msra.mxu0 0.0
    %174 = vmatprep.subr.mxu0 0.0
    %175 = vmatpush1.msra.mxu0 0.0
    %176 = vmatprep.subr.mxu0 0.0
    %177 = vmatpush1.msra.mxu0 0.0
    %178 = vmatprep.subr.mxu0 0.0
    %179 = vmatpush1.msra.mxu0 0.0
    %180 = vmatprep.mubr.f32.mxu0 0.0
    %181 = vmatmul.mubr.f32.gmra.mrb[0].mxu0 %v114
    %v182 = vpop.f32.mrb[0].mxu0
    %v183 = vadd.f32 %v105, %v182
    %v184 = vpop.f32.mrb[0].mxu0
    %v185 = vadd.f32 %v109, %v184
    %186 = vdwg.mxu0
    %187 = vst [vmem:[#allocation2] sm:$0xff] %v183
    %188 = vst [vmem:[#allocation2 + $0x8] sm:$0xff] %v185
    %v189 = vld [vmem:[%s0] sm:$0xff]
    %v190 = vld [vmem:[%s0 + $0x8] sm:$0xff]
    %v191 = vld [vmem:[#allocation7] sm:$0xff]
    %v192 = vld [vmem:[#allocation7 + $0x8] sm:$0xff]
    %v193 = vld [vmem:[#allocation7 + $0x10] sm:$0xff]
    %v194 = vld [vmem:[#allocation7 + $0x18] sm:$0xff]
    %v195 = vld [vmem:[#allocation7 + $0x20] sm:$0xff]
    %v196 = vld [vmem:[#allocation7 + $0x28] sm:$0xff]
    %v197 = vld [vmem:[#allocation7 + $0x30] sm:$0xff]
    %v198 = vld [vmem:[#allocation7 + $0x38] sm:$0xff]
    %v199 = vld [vmem:[#allocation7 + $0x40] sm:$0xff]
    %v200 = vld [vmem:[#allocation7 + $0x48] sm:$0xff]
    %v201 = vld [vmem:[#allocation7 + $0x50] sm:$0xff]
    %v202 = vld [vmem:[#allocation7 + $0x58] sm:$0xff]
    %v203 = vld [vmem:[#allocation7 + $0x60] sm:$0xff]
    %v204 = vld [vmem:[#allocation7 + $0x68] sm:$0xff]
    %v205 = vld [vmem:[#allocation7 + $0x70] sm:$0xff]
    %v206 = vld [vmem:[#allocation7 + $0x78] sm:$0xff]
    %v207 = vld [vmem:[%s9] sm:$0x3]
    %v209 = vlaneseq
    %v210 = vshrl.u32 %v209, 7
    %v211 = vsub.s32 0, %v210
    %v212 = vrot.slane %v207, %v211
    %v213 = vlaneseq
    %v214 = vshrl.u32 %v213, 7
    %v215 = vsub.s32 1, %v214
    %v216 = vrot.slane %v207, %v215
    %v220 = vsel %vm112, %v189, 0
    %v223 = vsel %vm112, %v190, 0
    %225 = vmatprep.subr.mxu0 %v192
    %226 = vmatpush1.msra.mxu0 %v191
    %227 = vmatprep.subr.mxu0 %v194
    %228 = vmatpush1.msra.mxu0 %v193
    %229 = vmatprep.subr.mxu0 %v196
    %230 = vmatpush1.msra.mxu0 %v195
    %231 = vmatprep.subr.mxu0 %v198
    %232 = vmatpush1.msra.mxu0 %v197
    %233 = vmatprep.subr.mxu0 %v200
    %234 = vmatpush1.msra.mxu0 %v199
    %235 = vmatprep.subr.mxu0 %v202
    %236 = vmatpush1.msra.mxu0 %v201
    %237 = vmatprep.subr.mxu0 %v204
    %238 = vmatpush1.msra.mxu0 %v203
    %239 = vmatprep.subr.mxu0 %v206
    %240 = vmatpush1.msra.mxu0 %v205
    %241 = vmatprep.subr.mxu0 0.0
    %242 = vmatpush1.msra.mxu0 0.0
    %243 = vmatprep.subr.mxu0 0.0
    %244 = vmatpush1.msra.mxu0 0.0
    %245 = vmatprep.subr.mxu0 0.0
    %246 = vmatpush1.msra.mxu0 0.0
    %247 = vmatprep.subr.mxu0 0.0
    %248 = vmatpush1.msra.mxu0 0.0
    %249 = vmatprep.subr.mxu0 0.0
    %250 = vmatpush1.msra.mxu0 0.0
    %251 = vmatprep.subr.mxu0 0.0
    %252 = vmatpush1.msra.mxu0 0.0
    %253 = vmatprep.subr.mxu0 0.0
    %254 = vmatpush1.msra.mxu0 0.0
    %255 = vmatprep.subr.mxu0 0.0
    %256 = vmatpush1.msra.mxu0 0.0
    %257 = vmatprep.subr.mxu0 0.0
    %258 = vmatpush1.msra.mxu0 0.0
    %259 = vmatprep.subr.mxu0 0.0
    %260 = vmatpush1.msra.mxu0 0.0
    %261 = vmatprep.subr.mxu0 0.0
    %262 = vmatpush1.msra.mxu0 0.0
    %263 = vmatprep.subr.mxu0 0.0
    %264 = vmatpush1.msra.mxu0 0.0
    %265 = vmatprep.subr.mxu0 0.0
    %266 = vmatpush1.msra.mxu0 0.0
    %267 = vmatprep.subr.mxu0 0.0
    %268 = vmatpush1.msra.mxu0 0.0
    %269 = vmatprep.subr.mxu0 0.0
    %270 = vmatpush1.msra.mxu0 0.0
    %271 = vmatprep.subr.mxu0 0.0
    %272 = vmatpush1.msra.mxu0 0.0
    %273 = vmatprep.subr.mxu0 0.0
    %274 = vmatpush1.msra.mxu0 0.0
    %275 = vmatprep.subr.mxu0 0.0
    %276 = vmatpush1.msra.mxu0 0.0
    %277 = vmatprep.subr.mxu0 0.0
    %278 = vmatpush1.msra.mxu0 0.0
    %279 = vmatprep.subr.mxu0 0.0
    %280 = vmatpush1.msra.mxu0 0.0
    %281 = vmatprep.subr.mxu0 0.0
    %282 = vmatpush1.msra.mxu0 0.0
    %283 = vmatprep.subr.mxu0 0.0
    %284 = vmatpush1.msra.mxu0 0.0
    %285 = vmatprep.subr.mxu0 0.0
    %286 = vmatpush1.msra.mxu0 0.0
    %287 = vmatprep.subr.mxu0 0.0
    %288 = vmatpush1.msra.mxu0 0.0
    %289 = vmatprep.mubr.f32.mxu0 0.0
    %290 = vmatmul.mubr.f32.gmra.mrb[0].mxu0 %v220
    %v291 = vpop.f32.mrb[0].mxu0
    %v292 = vadd.f32 %v212, %v291
    %v293 = vpop.f32.mrb[0].mxu0
    %v294 = vadd.f32 %v216, %v293
    %295 = vmatprep.mubr.f32.mxu0 0.0
    %296 = vmatmul.mubr.f32.gmra.mrb[0].mxu0 %v223
    %v297 = vpop.f32.mrb[0].mxu0
    %v298 = vadd.f32 %v212, %v297
    %v299 = vpop.f32.mrb[0].mxu0
    %v300 = vadd.f32 %v216, %v299
    %301 = vdwg.mxu0
    %302 = vst [vmem:[#allocation3] sm:$0xff] %v292
    %303 = vst [vmem:[#allocation3 + $0x8] sm:$0xff] %v294
    %304 = vst [vmem:[#allocation3 + $0x10] sm:$0xff] %v298
    %305 = vst [vmem:[#allocation3 + $0x18] sm:$0xff] %v300
    %v306 = vld [vmem:[%s3] sm:$0x3]
    %v307 = vld [vmem:[%s2] sm:$0x3]
    %v308 = vld [vmem:[#allocation2] sm:$0x3]
    %v309 = vld [vmem:[%s5] sm:$0xff]
    %v310 = vld [vmem:[%s5 + $0x8] sm:$0xff]
    %v311 = vld [vmem:[%s5 + $0x10] sm:$0xff]
    %v312 = vld [vmem:[%s5 + $0x18] sm:$0xff]
    %vm313 = vcmp.gt.s32.totalorder %v306, 0
    %vm314 = vcmask 261120
    %v316 = vsel %vm314, 0.0, 0
    %318 = vmatprep.subr.mxu0 0.0
    %319 = vmatpush1.msra.mxu0 %v309
    %320 = vmatprep.subr.mxu0 0.0
    %321 = vmatpush1.msra.mxu0 %v310
    %322 = vmatprep.subr.mxu0 0.0
    %323 = vmatpush1.msra.mxu0 %v311
    %324 = vmatprep.subr.mxu0 0.0
    %325 = vmatpush1.msra.mxu0 %v312
    %326 = vmatprep.subr.mxu0 0.0
    %327 = vmatpush1.msra.mxu0 0.0
    %328 = vmatprep.subr.mxu0 0.0
    %329 = vmatpush1.msra.mxu0 0.0
    %330 = vmatprep.subr.mxu0 0.0
    %331 = vmatpush1.msra.mxu0 0.0
    %332 = vmatprep.subr.mxu0 0.0
    %333 = vmatpush1.msra.mxu0 0.0
    %334 = vmatprep.subr.mxu0 0.0
    %335 = vmatpush1.msra.mxu0 0.0
    %336 = vmatprep.subr.mxu0 0.0
    %337 = vmatpush1.msra.mxu0 0.0
    %338 = vmatprep.subr.mxu0 0.0
    %339 = vmatpush1.msra.mxu0 0.0
    %340 = vmatprep.subr.mxu0 0.0
    %341 = vmatpush1.msra.mxu0 0.0
    %342 = vmatprep.subr.mxu0 0.0
    %343 = vmatpush1.msra.mxu0 0.0
    %344 = vmatprep.subr.mxu0 0.0
    %345 = vmatpush1.msra.mxu0 0.0
    %346 = vmatprep.subr.mxu0 0.0
    %347 = vmatpush1.msra.mxu0 0.0
    %348 = vmatprep.subr.mxu0 0.0
    %349 = vmatpush1.msra.mxu0 0.0
    %350 = vmatprep.subr.mxu0 0.0
    %351 = vmatpush1.msra.mxu0 0.0
    %352 = vmatprep.subr.mxu0 0.0
    %353 = vmatpush1.msra.mxu0 0.0
    %354 = vmatprep.subr.mxu0 0.0
    %355 = vmatpush1.msra.mxu0 0.0
    %356 = vmatprep.subr.mxu0 0.0
    %357 = vmatpush1.msra.mxu0 0.0
    %358 = vmatprep.subr.mxu0 0.0
    %359 = vmatpush1.msra.mxu0 0.0
    %360 = vmatprep.subr.mxu0 0.0
    %361 = vmatpush1.msra.mxu0 0.0
    %362 = vmatprep.subr.mxu0 0.0
    %363 = vmatpush1.msra.mxu0 0.0
    %364 = vmatprep.subr.mxu0 0.0
    %365 = vmatpush1.msra.mxu0 0.0
    %366 = vmatprep.subr.mxu0 0.0
    %367 = vmatpush1.msra.mxu0 0.0
    %368 = vmatprep.subr.mxu0 0.0
    %369 = vmatpush1.msra.mxu0 0.0
    %370 = vmatprep.subr.mxu0 0.0
    %371 = vmatpush1.msra.mxu0 0.0
    %372 = vmatprep.subr.mxu0 0.0
    %373 = vmatpush1.msra.mxu0 0.0
    %374 = vmatprep.subr.mxu0 0.0
    %375 = vmatpush1.msra.mxu0 0.0
    %376 = vmatprep.subr.mxu0 0.0
    %377 = vmatpush1.msra.mxu0 0.0
    %378 = vmatprep.subr.mxu0 0.0
    %379 = vmatpush1.msra.mxu0 0.0
    %380 = vmatprep.subr.mxu0 0.0
    %381 = vmatpush1.msra.mxu0 0.0
    %382 = vmatprep.mubr.f32.mxu0 0.0
    %383 = vmatmul.mubr.f32.gmra.mrb[0].mxu0 %v316
    %v384 = vpop.f32.mrb[0].mxu0
    %v385 = vadd.f32 0.0, %v384
    %v386 = vpop.f32.mrb[0].mxu0
    %387 = vdwg.mxu0
    %v388 = vadd.f32 %v308, %v385
    %v389 = vxor.u32 %v388, 2147483648
    %v390 = vmul.f32 %v389, 1.442695
    %v391 = vpow.pop %v390
    %v392 = vadd.f32 %v391, 1.0
    %v393 = vrcp.pop %v392
    %v394 = vmul.f32 1.0, %v393
    %v395 = vtanh.pop %v388
    %v396 = vmul.f32 %v394, 0.0
    %398 = vrot.lane.b32.xlu0 %v395, 64
    %v399 = vpop.permute.xlu0 %398
    %v401 = vmul.f32 %v394, %v399
    %403 = vrot.lane.b32.xlu0 %v401, 32
    %v404 = vpop.permute.xlu0 %403
    %v406 = vadd.f32 %v396, %v404
    %v407 = vtanh.pop %v406
    %409 = vrot.lane.b32.xlu0 %v407, 64
    %v410 = vpop.permute.xlu0 %409
    %v412 = vmul.f32 %v394, %v410
    %v413 = vsel %vm313, 1, 0
    %414 = vset.pattern.permute.xlu0 0
    %415 = vperm.xlu0 %414, %v413
    %v416 = vpop.permute.xlu0 %415
    %vm417 = vcmp.eq.s32.totalorder %v416, 1
    %v418 = vsel %vm417, %v412, 0.0
    %v419 = vsel %vm417, %v406, 0.0
    %v420 = vld [vmem:[#allocation2 + $0x8] sm:$0xc0]
    %s421 = scalar_lea.vmem %s5, 32
    %v422 = vld [vmem:[%s421] sm:$0xff]
    %v423 = vld [vmem:[%s421 + $0x8] sm:$0xff]
    %v424 = vld [vmem:[%s421 + $0x10] sm:$0xff]
    %v425 = vld [vmem:[%s421 + $0x18] sm:$0xff]
    %vm426 = vcmp.gt.s32.totalorder %v306, 3
    %427 = vmatprep.subr.mxu0 0.0
    %428 = vmatpush1.msra.mxu0 %v422
    %429 = vmatprep.subr.mxu0 0.0
    %430 = vmatpush1.msra.mxu0 %v423
    %431 = vmatprep.subr.mxu0 0.0
    %432 = vmatpush1.msra.mxu0 %v424
    %433 = vmatprep.subr.mxu0 0.0
    %434 = vmatpush1.msra.mxu0 %v425
    %435 = vmatprep.subr.mxu0 0.0
    %436 = vmatpush1.msra.mxu0 0.0
    %437 = vmatprep.subr.mxu0 0.0
    %438 = vmatpush1.msra.mxu0 0.0
    %439 = vmatprep.subr.mxu0 0.0
    %440 = vmatpush1.msra.mxu0 0.0
    %441 = vmatprep.subr.mxu0 0.0
    %442 = vmatpush1.msra.mxu0 0.0
    %443 = vmatprep.subr.mxu0 0.0
    %444 = vmatpush1.msra.mxu0 0.0
    %445 = vmatprep.subr.mxu0 0.0
    %446 = vmatpush1.msra.mxu0 0.0
    %447 = vmatprep.subr.mxu0 0.0
    %448 = vmatpush1.msra.mxu0 0.0
    %449 = vmatprep.subr.mxu0 0.0
    %450 = vmatpush1.msra.mxu0 0.0
    %451 = vmatprep.subr.mxu0 0.0
    %452 = vmatpush1.msra.mxu0 0.0
    %453 = vmatprep.subr.mxu0 0.0
    %454 = vmatpush1.msra.mxu0 0.0
    %455 = vmatprep.subr.mxu0 0.0
    %456 = vmatpush1.msra.mxu0 0.0
    %457 = vmatprep.subr.mxu0 0.0
    %458 = vmatpush1.msra.mxu0 0.0
    %459 = vmatprep.subr.mxu0 0.0
    %460 = vmatpush1.msra.mxu0 0.0
    %461 = vmatprep.subr.mxu0 0.0
    %462 = vmatpush1.msra.mxu0 0.0
    %463 = vmatprep.subr.mxu0 0.0
    %464 = vmatpush1.msra.mxu0 0.0
    %465 = vmatprep.subr.mxu0 0.0
    %466 = vmatpush1.msra.mxu0 0.0
    %467 = vmatprep.subr.mxu0 0.0
    %468 = vmatpush1.msra.mxu0 0.0
    %469 = vmatprep.subr.mxu0 0.0
    %470 = vmatpush1.msra.mxu0 0.0
    %471 = vmatprep.subr.mxu0 0.0
    %472 = vmatpush1.msra.mxu0 0.0
    %473 = vmatprep.subr.mxu0 0.0
    %474 = vmatpush1.msra.mxu0 0.0
    %475 = vmatprep.subr.mxu0 0.0
    %476 = vmatpush1.msra.mxu0 0.0
    %477 = vmatprep.subr.mxu0 0.0
    %478 = vmatpush1.msra.mxu0 0.0
    %479 = vmatprep.subr.mxu0 0.0
    %480 = vmatpush1.msra.mxu0 0.0
    %481 = vmatprep.subr.mxu0 0.0
    %482 = vmatpush1.msra.mxu0 0.0
    %483 = vmatprep.subr.mxu0 0.0
    %484 = vmatpush1.msra.mxu0 0.0
    %485 = vmatprep.subr.mxu0 0.0
    %486 = vmatpush1.msra.mxu0 0.0
    %487 = vmatprep.subr.mxu0 0.0
    %488 = vmatpush1.msra.mxu0 0.0
    %489 = vmatprep.subr.mxu0 0.0
    %490 = vmatpush1.msra.mxu0 0.0
    %491 = vmatprep.mubr.f32.mxu0 0.0
    %492 = vmatmul.mubr.f32.gmra.mrb[0].mxu0 %v316
    %v493 = vpop.f32.mrb[0].mxu0
    %v494 = vadd.f32 0.0, %v493
    %v495 = vpop.f32.mrb[0].mxu0
    %496 = vdwg.mxu0
    %v498 = vrot.slane %v494, 2
    %v500 = vadd.f32 %v420, %v498
    %v501 = vxor.u32 %v500, 2147483648
    %v502 = vmul.f32 %v501, 1.442695
    %v503 = vpow.pop %v502
    %v504 = vadd.f32 %v503, 1.0
    %v505 = vrcp.pop %v504
    %v506 = vmul.f32 1.0, %v505
    %v507 = vtanh.pop %v500
    %v508 = vmul.f32 %v506, 0.0
    %510 = vrot.lane.b32.xlu0 %v507, 64
    %v511 = vpop.permute.xlu0 %510
    %v513 = vmul.f32 %v506, %v511
    %515 = vrot.lane.b32.xlu0 %v513, 32
    %v516 = vpop.permute.xlu0 %515
    %v518 = vadd.f32 %v508, %v516
    %v519 = vtanh.pop %v518
    %521 = vrot.lane.b32.xlu0 %v519, 64
    %v522 = vpop.permute.xlu0 %521
    %v524 = vmul.f32 %v506, %v522
    %v525 = vsel %vm426, 1, 0
    %526 = vset.pattern.permute.xlu0 0
    %527 = vperm.xlu0 %526, %v525
    %v528 = vpop.permute.xlu0 %527
    %vm529 = vcmp.eq.s32.totalorder %v528, 1
    %v531 = vrot.slane %v524, 6
    %532 = vrot.lane.b32.xlu0 %v531, 32
    %v533 = vpop.permute.xlu0 %532
    %v535 = vsel %vm529, %v533, 0.0
    %v537 = vrot.slane %v518, 6
    %538 = vrot.lane.b32.xlu0 %v537, 96
    %v539 = vpop.permute.xlu0 %538
    %v541 = vsel %vm529, %v539, 0.0
    %v542 = vld [vmem:[#allocation2] sm:$0xc]
    %vm543 = vcmp.gt.s32.totalorder %v306, 1
    %545 = vrot.lane.b32.xlu0 %v418, 32
    %v546 = vpop.permute.xlu0 %545
    %v547 = vsel %vm314, %v546, 0
    %549 = vmatprep.subr.mxu0 0.0
    %550 = vmatpush1.msra.mxu0 %v309
    %551 = vmatprep.subr.mxu0 0.0
    %552 = vmatpush1.msra.mxu0 %v310
    %553 = vmatprep.subr.mxu0 0.0
    %554 = vmatpush1.msra.mxu0 %v311
    %555 = vmatprep.subr.mxu0 0.0
    %556 = vmatpush1.msra.mxu0 %v312
    %557 = vmatprep.subr.mxu0 0.0
    %558 = vmatpush1.msra.mxu0 0.0
    %559 = vmatprep.subr.mxu0 0.0
    %560 = vmatpush1.msra.mxu0 0.0
    %561 = vmatprep.subr.mxu0 0.0
    %562 = vmatpush1.msra.mxu0 0.0
    %563 = vmatprep.subr.mxu0 0.0
    %564 = vmatpush1.msra.mxu0 0.0
    %565 = vmatprep.subr.mxu0 0.0
    %566 = vmatpush1.msra.mxu0 0.0
    %567 = vmatprep.subr.mxu0 0.0
    %568 = vmatpush1.msra.mxu0 0.0
    %569 = vmatprep.subr.mxu0 0.0
    %570 = vmatpush1.msra.mxu0 0.0
    %571 = vmatprep.subr.mxu0 0.0
    %572 = vmatpush1.msra.mxu0 0.0
    %573 = vmatprep.subr.mxu0 0.0
    %574 = vmatpush1.msra.mxu0 0.0
    %575 = vmatprep.subr.mxu0 0.0
    %576 = vmatpush1.msra.mxu0 0.0
    %577 = vmatprep.subr.mxu0 0.0
    %578 = vmatpush1.msra.mxu0 0.0
    %579 = vmatprep.subr.mxu0 0.0
    %580 = vmatpush1.msra.mxu0 0.0
    %581 = vmatprep.subr.mxu0 0.0
    %582 = vmatpush1.msra.mxu0 0.0
    %583 = vmatprep.subr.mxu0 0.0
    %584 = vmatpush1.msra.mxu0 0.0
    %585 = vmatprep.subr.mxu0 0.0
    %586 = vmatpush1.msra.mxu0 0.0
    %587 = vmatprep.subr.mxu0 0.0
    %588 = vmatpush1.msra.mxu0 0.0
    %589 = vmatprep.subr.mxu0 0.0
    %590 = vmatpush1.msra.mxu0 0.0
    %591 = vmatprep.subr.mxu0 0.0
    %592 = vmatpush1.msra.mxu0 0.0
    %593 = vmatprep.subr.mxu0 0.0
    %594 = vmatpush1.msra.mxu0 0.0
    %595 = vmatprep.subr.mxu0 0.0
    %596 = vmatpush1.msra.mxu0 0.0
    %597 = vmatprep.subr.mxu0 0.0
    %598 = vmatpush1.msra.mxu0 0.0
    %599 = vmatprep.subr.mxu0 0.0
    %600 = vmatpush1.msra.mxu0 0.0
    %601 = vmatprep.subr.mxu0 0.0
    %602 = vmatpush1.msra.mxu0 0.0
    %603 = vmatprep.subr.mxu0 0.0
    %604 = vmatpush1.msra.mxu0 0.0
    %605 = vmatprep.subr.mxu0 0.0
    %606 = vmatpush1.msra.mxu0 0.0
    %607 = vmatprep.subr.mxu0 0.0
    %608 = vmatpush1.msra.mxu0 0.0
    %609 = vmatprep.subr.mxu0 0.0
    %610 = vmatpush1.msra.mxu0 0.0
    %611 = vmatprep.subr.mxu0 0.0
    %612 = vmatpush1.msra.mxu0 0.0
    %613 = vmatprep.mubr.f32.mxu0 0.0
    %614 = vmatmul.mubr.f32.gmra.mrb[0].mxu0 %v547
    %v615 = vpop.f32.mrb[0].mxu0
    %v616 = vadd.f32 0.0, %v615
    %v617 = vpop.f32.mrb[0].mxu0
    %618 = vdwg.mxu0
    %v620 = vrot.slane %v616, 6
    %v622 = vadd.f32 %v542, %v620
    %v623 = vxor.u32 %v622, 2147483648
    %v624 = vmul.f32 %v623, 1.442695
    %v625 = vpow.pop %v624
    %v626 = vadd.f32 %v625, 1.0
    %v627 = vrcp.pop %v626
    %v628 = vmul.f32 1.0, %v627
    %v629 = vtanh.pop %v622
    %v631 = vrot.slane %v419, 6
    %v633 = vmul.f32 %v628, %v631
    %635 = vrot.lane.b32.xlu0 %v629, 64
    %v636 = vpop.permute.xlu0 %635
    %v638 = vmul.f32 %v628, %v636
    %640 = vrot.lane.b32.xlu0 %v638, 32
    %v641 = vpop.permute.xlu0 %640
    %v643 = vadd.f32 %v633, %v641
    %v644 = vtanh.pop %v643
    %646 = vrot.lane.b32.xlu0 %v644, 64
    %v647 = vpop.permute.xlu0 %646
    %v649 = vmul.f32 %v628, %v647
    %v650 = vsel %vm543, 1, 0
    %651 = vset.pattern.permute.xlu0 0
    %652 = vperm.xlu0 %651, %v650
    %v653 = vpop.permute.xlu0 %652
    %vm654 = vcmp.eq.s32.totalorder %v653, 1
    %v656 = vrot.slane %v649, 2
    %657 = vrot.lane.b32.xlu0 %v656, 32
    %v658 = vpop.permute.xlu0 %657
    %v661 = vsel %vm654, %v658, %v546
    %v663 = vrot.slane %v643, 2
    %664 = vrot.lane.b32.xlu0 %v663, 96
    %v665 = vpop.permute.xlu0 %664
    %667 = vrot.lane.b32.xlu0 %v419, 96
    %v668 = vpop.permute.xlu0 %667
    %v670 = vsel %vm654, %v665, %v668
    %v671 = vld [vmem:[#allocation2 + $0x8] sm:$0x30]
    %vm672 = vcmp.gt.s32.totalorder %v306, 2
    %v674 = vsel %vm314, %v535, 0
    %676 = vmatprep.subr.mxu0 0.0
    %677 = vmatpush1.msra.mxu0 %v422
    %678 = vmatprep.subr.mxu0 0.0
    %679 = vmatpush1.msra.mxu0 %v423
    %680 = vmatprep.subr.mxu0 0.0
    %681 = vmatpush1.msra.mxu0 %v424
    %682 = vmatprep.subr.mxu0 0.0
    %683 = vmatpush1.msra.mxu0 %v425
    %684 = vmatprep.subr.mxu0 0.0
    %685 = vmatpush1.msra.mxu0 0.0
    %686 = vmatprep.subr.mxu0 0.0
    %687 = vmatpush1.msra.mxu0 0.0
    %688 = vmatprep.subr.mxu0 0.0
    %689 = vmatpush1.msra.mxu0 0.0
    %690 = vmatprep.subr.mxu0 0.0
    %691 = vmatpush1.msra.mxu0 0.0
    %692 = vmatprep.subr.mxu0 0.0
    %693 = vmatpush1.msra.mxu0 0.0
    %694 = vmatprep.subr.mxu0 0.0
    %695 = vmatpush1.msra.mxu0 0.0
    %696 = vmatprep.subr.mxu0 0.0
    %697 = vmatpush1.msra.mxu0 0.0
    %698 = vmatprep.subr.mxu0 0.0
    %699 = vmatpush1.msra.mxu0 0.0
    %700 = vmatprep.subr.mxu0 0.0
    %701 = vmatpush1.msra.mxu0 0.0
    %702 = vmatprep.subr.mxu0 0.0
    %703 = vmatpush1.msra.mxu0 0.0
    %704 = vmatprep.subr.mxu0 0.0
    %705 = vmatpush1.msra.mxu0 0.0
    %706 = vmatprep.subr.mxu0 0.0
    %707 = vmatpush1.msra.mxu0 0.0
    %708 = vmatprep.subr.mxu0 0.0
    %709 = vmatpush1.msra.mxu0 0.0
    %710 = vmatprep.subr.mxu0 0.0
    %711 = vmatpush1.msra.mxu0 0.0
    %712 = vmatprep.subr.mxu0 0.0
    %713 = vmatpush1.msra.mxu0 0.0
    %714 = vmatprep.subr.mxu0 0.0
    %715 = vmatpush1.msra.mxu0 0.0
    %716 = vmatprep.subr.mxu0 0.0
    %717 = vmatpush1.msra.mxu0 0.0
    %718 = vmatprep.subr.mxu0 0.0
    %719 = vmatpush1.msra.mxu0 0.0
    %720 = vmatprep.subr.mxu0 0.0
    %721 = vmatpush1.msra.mxu0 0.0
    %722 = vmatprep.subr.mxu0 0.0
    %723 = vmatpush1.msra.mxu0 0.0
    %724 = vmatprep.subr.mxu0 0.0
    %725 = vmatpush1.msra.mxu0 0.0
    %726 = vmatprep.subr.mxu0 0.0
    %727 = vmatpush1.msra.mxu0 0.0
    %728 = vmatprep.subr.mxu0 0.0
    %729 = vmatpush1.msra.mxu0 0.0
    %730 = vmatprep.subr.mxu0 0.0
    %731 = vmatpush1.msra.mxu0 0.0
    %732 = vmatprep.subr.mxu0 0.0
    %733 = vmatpush1.msra.mxu0 0.0
    %734 = vmatprep.subr.mxu0 0.0
    %735 = vmatpush1.msra.mxu0 0.0
    %736 = vmatprep.subr.mxu0 0.0
    %737 = vmatpush1.msra.mxu0 0.0
    %738 = vmatprep.subr.mxu0 0.0
    %739 = vmatpush1.msra.mxu0 0.0
    %740 = vmatprep.mubr.f32.mxu0 0.0
    %741 = vmatmul.mubr.f32.gmra.mrb[0].mxu0 %v674
    %v742 = vpop.f32.mrb[0].mxu0
    %v743 = vadd.f32 0.0, %v742
    %v744 = vpop.f32.mrb[0].mxu0
    %745 = vdwg.mxu0
    %v747 = vrot.slane %v743, 4
    %v749 = vadd.f32 %v671, %v747
    %v750 = vxor.u32 %v749, 2147483648
    %v751 = vmul.f32 %v750, 1.442695
    %v752 = vpow.pop %v751
    %v753 = vadd.f32 %v752, 1.0
    %v754 = vrcp.pop %v753
    %v755 = vmul.f32 1.0, %v754
    %v756 = vtanh.pop %v749
    %v758 = vrot.slane %v541, 4
    %759 = vrot.lane.b32.xlu0 %v758, 32
    %v760 = vpop.permute.xlu0 %759
    %v762 = vmul.f32 %v755, %v760
    %764 = vrot.lane.b32.xlu0 %v756, 64
    %v765 = vpop.permute.xlu0 %764
    %v767 = vmul.f32 %v755, %v765
    %769 = vrot.lane.b32.xlu0 %v767, 32
    %v770 = vpop.permute.xlu0 %769
    %v772 = vadd.f32 %v762, %v770
    %v773 = vtanh.pop %v772
    %775 = vrot.lane.b32.xlu0 %v773, 64
    %v776 = vpop.permute.xlu0 %775
    %v778 = vmul.f32 %v755, %v776
    %v779 = vsel %vm672, 1, 0
    %780 = vset.pattern.permute.xlu0 0
    %781 = vperm.xlu0 %780, %v779
    %v782 = vpop.permute.xlu0 %781
    %vm783 = vcmp.eq.s32.totalorder %v782, 1
    %v785 = vrot.slane %v778, 4
    %786 = vrot.lane.b32.xlu0 %v785, 32
    %v787 = vpop.permute.xlu0 %786
    %v789 = vsel %vm783, %v787, %v535
    %v791 = vrot.slane %v772, 4
    %792 = vrot.lane.b32.xlu0 %v791, 96
    %v793 = vpop.permute.xlu0 %792
    %v795 = vsel %vm783, %v793, %v541
    %v796 = vld [vmem:[#allocation2] sm:$0x30]
    %v798 = vsel %vm314, %v661, 0
    %800 = vmatprep.subr.mxu0 0.0
    %801 = vmatpush1.msra.mxu0 %v309
    %802 = vmatprep.subr.mxu0 0.0
    %803 = vmatpush1.msra.mxu0 %v310
    %804 = vmatprep.subr.mxu0 0.0
    %805 = vmatpush1.msra.mxu0 %v311
    %806 = vmatprep.subr.mxu0 0.0
    %807 = vmatpush1.msra.mxu0 %v312
    %808 = vmatprep.subr.mxu0 0.0
    %809 = vmatpush1.msra.mxu0 0.0
    %810 = vmatprep.subr.mxu0 0.0
    %811 = vmatpush1.msra.mxu0 0.0
    %812 = vmatprep.subr.mxu0 0.0
    %813 = vmatpush1.msra.mxu0 0.0
    %814 = vmatprep.subr.mxu0 0.0
    %815 = vmatpush1.msra.mxu0 0.0
    %816 = vmatprep.subr.mxu0 0.0
    %817 = vmatpush1.msra.mxu0 0.0
    %818 = vmatprep.subr.mxu0 0.0
    %819 = vmatpush1.msra.mxu0 0.0
    %820 = vmatprep.subr.mxu0 0.0
    %821 = vmatpush1.msra.mxu0 0.0
    %822 = vmatprep.subr.mxu0 0.0
    %823 = vmatpush1.msra.mxu0 0.0
    %824 = vmatprep.subr.mxu0 0.0
    %825 = vmatpush1.msra.mxu0 0.0
    %826 = vmatprep.subr.mxu0 0.0
    %827 = vmatpush1.msra.mxu0 0.0
    %828 = vmatprep.subr.mxu0 0.0
    %829 = vmatpush1.msra.mxu0 0.0
    %830 = vmatprep.subr.mxu0 0.0
    %831 = vmatpush1.msra.mxu0 0.0
    %832 = vmatprep.subr.mxu0 0.0
    %833 = vmatpush1.msra.mxu0 0.0
    %834 = vmatprep.subr.mxu0 0.0
    %835 = vmatpush1.msra.mxu0 0.0
    %836 = vmatprep.subr.mxu0 0.0
    %837 = vmatpush1.msra.mxu0 0.0
    %838 = vmatprep.subr.mxu0 0.0
    %839 = vmatpush1.msra.mxu0 0.0
    %840 = vmatprep.subr.mxu0 0.0
    %841 = vmatpush1.msra.mxu0 0.0
    %842 = vmatprep.subr.mxu0 0.0
    %843 = vmatpush1.msra.mxu0 0.0
    %844 = vmatprep.subr.mxu0 0.0
    %845 = vmatpush1.msra.mxu0 0.0
    %846 = vmatprep.subr.mxu0 0.0
    %847 = vmatpush1.msra.mxu0 0.0
    %848 = vmatprep.subr.mxu0 0.0
    %849 = vmatpush1.msra.mxu0 0.0
    %850 = vmatprep.subr.mxu0 0.0
    %851 = vmatpush1.msra.mxu0 0.0
    %852 = vmatprep.subr.mxu0 0.0
    %853 = vmatpush1.msra.mxu0 0.0
    %854 = vmatprep.subr.mxu0 0.0
    %855 = vmatpush1.msra.mxu0 0.0
    %856 = vmatprep.subr.mxu0 0.0
    %857 = vmatpush1.msra.mxu0 0.0
    %858 = vmatprep.subr.mxu0 0.0
    %859 = vmatpush1.msra.mxu0 0.0
    %860 = vmatprep.subr.mxu0 0.0
    %861 = vmatpush1.msra.mxu0 0.0
    %862 = vmatprep.subr.mxu0 0.0
    %863 = vmatpush1.msra.mxu0 0.0
    %864 = vmatprep.mubr.f32.mxu0 0.0
    %865 = vmatmul.mubr.f32.gmra.mrb[0].mxu0 %v798
    %v866 = vpop.f32.mrb[0].mxu0
    %v867 = vadd.f32 0.0, %v866
    %v868 = vpop.f32.mrb[0].mxu0
    %869 = vdwg.mxu0
    %v871 = vrot.slane %v867, 4
    %v873 = vadd.f32 %v796, %v871
    %v874 = vxor.u32 %v873, 2147483648
    %v875 = vmul.f32 %v874, 1.442695
    %v876 = vpow.pop %v875
    %v877 = vadd.f32 %v876, 1.0
    %v878 = vrcp.pop %v877
    %v879 = vmul.f32 1.0, %v878
    %v880 = vtanh.pop %v873
    %v882 = vrot.slane %v670, 4
    %883 = vrot.lane.b32.xlu0 %v882, 32
    %v884 = vpop.permute.xlu0 %883
    %v886 = vmul.f32 %v879, %v884
    %888 = vrot.lane.b32.xlu0 %v880, 64
    %v889 = vpop.permute.xlu0 %888
    %v891 = vmul.f32 %v879, %v889
    %893 = vrot.lane.b32.xlu0 %v891, 32
    %v894 = vpop.permute.xlu0 %893
    %v896 = vadd.f32 %v886, %v894
    %v897 = vtanh.pop %v896
    %899 = vrot.lane.b32.xlu0 %v897, 64
    %v900 = vpop.permute.xlu0 %899
    %v902 = vmul.f32 %v879, %v900
    %v904 = vrot.slane %v902, 4
    %905 = vrot.lane.b32.xlu0 %v904, 32
    %v906 = vpop.permute.xlu0 %905
    %v908 = vsel %vm783, %v906, %v661
    %v910 = vrot.slane %v896, 4
    %911 = vrot.lane.b32.xlu0 %v910, 96
    %v912 = vpop.permute.xlu0 %911
    %v914 = vsel %vm783, %v912, %v670
    %v915 = vld [vmem:[#allocation2 + $0x8] sm:$0xc]
    %v917 = vsel %vm314, %v789, 0
    %919 = vmatprep.subr.mxu0 0.0
    %920 = vmatpush1.msra.mxu0 %v422
    %921 = vmatprep.subr.mxu0 0.0
    %922 = vmatpush1.msra.mxu0 %v423
    %923 = vmatprep.subr.mxu0 0.0
    %924 = vmatpush1.msra.mxu0 %v424
    %925 = vmatprep.subr.mxu0 0.0
    %926 = vmatpush1.msra.mxu0 %v425
    %927 = vmatprep.subr.mxu0 0.0
    %928 = vmatpush1.msra.mxu0 0.0
    %929 = vmatprep.subr.mxu0 0.0
    %930 = vmatpush1.msra.mxu0 0.0
    %931 = vmatprep.subr.mxu0 0.0
    %932 = vmatpush1.msra.mxu0 0.0
    %933 = vmatprep.subr.mxu0 0.0
    %934 = vmatpush1.msra.mxu0 0.0
    %935 = vmatprep.subr.mxu0 0.0
    %936 = vmatpush1.msra.mxu0 0.0
    %937 = vmatprep.subr.mxu0 0.0
    %938 = vmatpush1.msra.mxu0 0.0
    %939 = vmatprep.subr.mxu0 0.0
    %940 = vmatpush1.msra.mxu0 0.0
    %941 = vmatprep.subr.mxu0 0.0
    %942 = vmatpush1.msra.mxu0 0.0
    %943 = vmatprep.subr.mxu0 0.0
    %944 = vmatpush1.msra.mxu0 0.0
    %945 = vmatprep.subr.mxu0 0.0
    %946 = vmatpush1.msra.mxu0 0.0
    %947 = vmatprep.subr.mxu0 0.0
    %948 = vmatpush1.msra.mxu0 0.0
    %949 = vmatprep.subr.mxu0 0.0
    %950 = vmatpush1.msra.mxu0 0.0
    %951 = vmatprep.subr.mxu0 0.0
    %952 = vmatpush1.msra.mxu0 0.0
    %953 = vmatprep.subr.mxu0 0.0
    %954 = vmatpush1.msra.mxu0 0.0
    %955 = vmatprep.subr.mxu0 0.0
    %956 = vmatpush1.msra.mxu0 0.0
    %957 = vmatprep.subr.mxu0 0.0
    %958 = vmatpush1.msra.mxu0 0.0
    %959 = vmatprep.subr.mxu0 0.0
    %960 = vmatpush1.msra.mxu0 0.0
    %961 = vmatprep.subr.mxu0 0.0
    %962 = vmatpush1.msra.mxu0 0.0
    %963 = vmatprep.subr.mxu0 0.0
    %964 = vmatpush1.msra.mxu0 0.0
    %965 = vmatprep.subr.mxu0 0.0
    %966 = vmatpush1.msra.mxu0 0.0
    %967 = vmatprep.subr.mxu0 0.0
    %968 = vmatpush1.msra.mxu0 0.0
    %969 = vmatprep.subr.mxu0 0.0
    %970 = vmatpush1.msra.mxu0 0.0
    %971 = vmatprep.subr.mxu0 0.0
    %972 = vmatpush1.msra.mxu0 0.0
    %973 = vmatprep.subr.mxu0 0.0
    %974 = vmatpush1.msra.mxu0 0.0
    %975 = vmatprep.subr.mxu0 0.0
    %976 = vmatpush1.msra.mxu0 0.0
    %977 = vmatprep.subr.mxu0 0.0
    %978 = vmatpush1.msra.mxu0 0.0
    %979 = vmatprep.subr.mxu0 0.0
    %980 = vmatpush1.msra.mxu0 0.0
    %981 = vmatprep.subr.mxu0 0.0
    %982 = vmatpush1.msra.mxu0 0.0
    %983 = vmatprep.mubr.f32.mxu0 0.0
    %984 = vmatmul.mubr.f32.gmra.mrb[0].mxu0 %v917
    %v985 = vpop.f32.mrb[0].mxu0
    %v986 = vadd.f32 0.0, %v985
    %v987 = vpop.f32.mrb[0].mxu0
    %988 = vdwg.mxu0
    %v990 = vrot.slane %v986, 6
    %v992 = vadd.f32 %v915, %v990
    %v993 = vxor.u32 %v992, 2147483648
    %v994 = vmul.f32 %v993, 1.442695
    %v995 = vpow.pop %v994
    %v996 = vadd.f32 %v995, 1.0
    %v997 = vrcp.pop %v996
    %v998 = vmul.f32 1.0, %v997
    %v999 = vtanh.pop %v992
    %v1001 = vrot.slane %v795, 6
    %1002 = vrot.lane.b32.xlu0 %v1001, 32
    %v1003 = vpop.permute.xlu0 %1002
    %v1005 = vmul.f32 %v998, %v1003
    %1007 = vrot.lane.b32.xlu0 %v999, 64
    %v1008 = vpop.permute.xlu0 %1007
    %v1010 = vmul.f32 %v998, %v1008
    %1012 = vrot.lane.b32.xlu0 %v1010, 32
    %v1013 = vpop.permute.xlu0 %1012
    %v1015 = vadd.f32 %v1005, %v1013
    %v1016 = vtanh.pop %v1015
    %1018 = vrot.lane.b32.xlu0 %v1016, 64
    %v1019 = vpop.permute.xlu0 %1018
    %v1021 = vmul.f32 %v998, %v1019
    %v1023 = vrot.slane %v1021, 2
    %1024 = vrot.lane.b32.xlu0 %v1023, 32
    %v1025 = vpop.permute.xlu0 %1024
    %v1027 = vsel %vm654, %v1025, %v789
    %v1029 = vrot.slane %v1015, 2
    %1030 = vrot.lane.b32.xlu0 %v1029, 96
    %v1031 = vpop.permute.xlu0 %1030
    %v1033 = vsel %vm654, %v1031, %v795
    %v1034 = vld [vmem:[#allocation2] sm:$0xc0]
    %v1036 = vsel %vm314, %v908, 0
    %1038 = vmatprep.subr.mxu0 0.0
    %1039 = vmatpush1.msra.mxu0 %v309
    %1040 = vmatprep.subr.mxu0 0.0
    %1041 = vmatpush1.msra.mxu0 %v310
    %1042 = vmatprep.subr.mxu0 0.0
    %1043 = vmatpush1.msra.mxu0 %v311
    %1044 = vmatprep.subr.mxu0 0.0
    %1045 = vmatpush1.msra.mxu0 %v312
    %1046 = vmatprep.subr.mxu0 0.0
    %1047 = vmatpush1.msra.mxu0 0.0
    %1048 = vmatprep.subr.mxu0 0.0
    %1049 = vmatpush1.msra.mxu0 0.0
    %1050 = vmatprep.subr.mxu0 0.0
    %1051 = vmatpush1.msra.mxu0 0.0
    %1052 = vmatprep.subr.mxu0 0.0
    %1053 = vmatpush1.msra.mxu0 0.0
    %1054 = vmatprep.subr.mxu0 0.0
    %1055 = vmatpush1.msra.mxu0 0.0
    %1056 = vmatprep.subr.mxu0 0.0
    %1057 = vmatpush1.msra.mxu0 0.0
    %1058 = vmatprep.subr.mxu0 0.0
    %1059 = vmatpush1.msra.mxu0 0.0
    %1060 = vmatprep.subr.mxu0 0.0
    %1061 = vmatpush1.msra.mxu0 0.0
    %1062 = vmatprep.subr.mxu0 0.0
    %1063 = vmatpush1.msra.mxu0 0.0
    %1064 = vmatprep.subr.mxu0 0.0
    %1065 = vmatpush1.msra.mxu0 0.0
    %1066 = vmatprep.subr.mxu0 0.0
    %1067 = vmatpush1.msra.mxu0 0.0
    %1068 = vmatprep.subr.mxu0 0.0
    %1069 = vmatpush1.msra.mxu0 0.0
    %1070 = vmatprep.subr.mxu0 0.0
    %1071 = vmatpush1.msra.mxu0 0.0
    %1072 = vmatprep.subr.mxu0 0.0
    %1073 = vmatpush1.msra.mxu0 0.0
    %1074 = vmatprep.subr.mxu0 0.0
    %1075 = vmatpush1.msra.mxu0 0.0
    %1076 = vmatprep.subr.mxu0 0.0
    %1077 = vmatpush1.msra.mxu0 0.0
    %1078 = vmatprep.subr.mxu0 0.0
    %1079 = vmatpush1.msra.mxu0 0.0
    %1080 = vmatprep.subr.mxu0 0.0
    %1081 = vmatpush1.msra.mxu0 0.0
    %1082 = vmatprep.subr.mxu0 0.0
    %1083 = vmatpush1.msra.mxu0 0.0
    %1084 = vmatprep.subr.mxu0 0.0
    %1085 = vmatpush1.msra.mxu0 0.0
    %1086 = vmatprep.subr.mxu0 0.0
    %1087 = vmatpush1.msra.mxu0 0.0
    %1088 = vmatprep.subr.mxu0 0.0
    %1089 = vmatpush1.msra.mxu0 0.0
    %1090 = vmatprep.subr.mxu0 0.0
    %1091 = vmatpush1.msra.mxu0 0.0
    %1092 = vmatprep.subr.mxu0 0.0
    %1093 = vmatpush1.msra.mxu0 0.0
    %1094 = vmatprep.subr.mxu0 0.0
    %1095 = vmatpush1.msra.mxu0 0.0
    %1096 = vmatprep.subr.mxu0 0.0
    %1097 = vmatpush1.msra.mxu0 0.0
    %1098 = vmatprep.subr.mxu0 0.0
    %1099 = vmatpush1.msra.mxu0 0.0
    %1100 = vmatprep.subr.mxu0 0.0
    %1101 = vmatpush1.msra.mxu0 0.0
    %1102 = vmatprep.mubr.f32.mxu0 0.0
    %1103 = vmatmul.mubr.f32.gmra.mrb[0].mxu0 %v1036
    %v1104 = vpop.f32.mrb[0].mxu0
    %v1105 = vadd.f32 0.0, %v1104
    %v1106 = vpop.f32.mrb[0].mxu0
    %1107 = vdwg.mxu0
    %v1109 = vrot.slane %v1105, 2
    %v1111 = vadd.f32 %v1034, %v1109
    %v1112 = vxor.u32 %v1111, 2147483648
    %v1113 = vmul.f32 %v1112, 1.442695
    %v1114 = vpow.pop %v1113
    %v1115 = vadd.f32 %v1114, 1.0
    %v1116 = vrcp.pop %v1115
    %v1117 = vmul.f32 1.0, %v1116
    %v1118 = vtanh.pop %v1111
    %v1120 = vrot.slane %v914, 2
    %1121 = vrot.lane.b32.xlu0 %v1120, 32
    %v1122 = vpop.permute.xlu0 %1121
    %v1124 = vmul.f32 %v1117, %v1122
    %1126 = vrot.lane.b32.xlu0 %v1118, 64
    %v1127 = vpop.permute.xlu0 %1126
    %v1129 = vmul.f32 %v1117, %v1127
    %1131 = vrot.lane.b32.xlu0 %v1129, 32
    %v1132 = vpop.permute.xlu0 %1131
    %v1134 = vadd.f32 %v1124, %v1132
    %v1135 = vtanh.pop %v1134
    %1137 = vrot.lane.b32.xlu0 %v1135, 64
    %v1138 = vpop.permute.xlu0 %1137
    %v1140 = vmul.f32 %v1117, %v1138
    %v1142 = vrot.slane %v1140, 6
    %1143 = vrot.lane.b32.xlu0 %v1142, 32
    %v1144 = vpop.permute.xlu0 %1143
    %v1146 = vsel %vm529, %v1144, %v908
    %v1148 = vrot.slane %v1134, 6
    %1149 = vrot.lane.b32.xlu0 %v1148, 96
    %v1150 = vpop.permute.xlu0 %1149
    %v1152 = vsel %vm529, %v1150, %v914
    %v1153 = vld [vmem:[#allocation2 + $0x8] sm:$0x3]
    %v1155 = vsel %vm314, %v1027, 0
    %1157 = vmatprep.subr.mxu0 0.0
    %1158 = vmatpush1.msra.mxu0 %v422
    %1159 = vmatprep.subr.mxu0 0.0
    %1160 = vmatpush1.msra.mxu0 %v423
    %1161 = vmatprep.subr.mxu0 0.0
    %1162 = vmatpush1.msra.mxu0 %v424
    %1163 = vmatprep.subr.mxu0 0.0
    %1164 = vmatpush1.msra.mxu0 %v425
    %1165 = vmatprep.subr.mxu0 0.0
    %1166 = vmatpush1.msra.mxu0 0.0
    %1167 = vmatprep.subr.mxu0 0.0
    %1168 = vmatpush1.msra.mxu0 0.0
    %1169 = vmatprep.subr.mxu0 0.0
    %1170 = vmatpush1.msra.mxu0 0.0
    %1171 = vmatprep.subr.mxu0 0.0
    %1172 = vmatpush1.msra.mxu0 0.0
    %1173 = vmatprep.subr.mxu0 0.0
    %1174 = vmatpush1.msra.mxu0 0.0
    %1175 = vmatprep.subr.mxu0 0.0
    %1176 = vmatpush1.msra.mxu0 0.0
    %1177 = vmatprep.subr.mxu0 0.0
    %1178 = vmatpush1.msra.mxu0 0.0
    %1179 = vmatprep.subr.mxu0 0.0
    %1180 = vmatpush1.msra.mxu0 0.0
    %1181 = vmatprep.subr.mxu0 0.0
    %1182 = vmatpush1.msra.mxu0 0.0
    %1183 = vmatprep.subr.mxu0 0.0
    %1184 = vmatpush1.msra.mxu0 0.0
    %1185 = vmatprep.subr.mxu0 0.0
    %1186 = vmatpush1.msra.mxu0 0.0
    %1187 = vmatprep.subr.mxu0 0.0
    %1188 = vmatpush1.msra.mxu0 0.0
    %1189 = vmatprep.subr.mxu0 0.0
    %1190 = vmatpush1.msra.mxu0 0.0
    %1191 = vmatprep.subr.mxu0 0.0
    %1192 = vmatpush1.msra.mxu0 0.0
    %1193 = vmatprep.subr.mxu0 0.0
    %1194 = vmatpush1.msra.mxu0 0.0
    %1195 = vmatprep.subr.mxu0 0.0
    %1196 = vmatpush1.msra.mxu0 0.0
    %1197 = vmatprep.subr.mxu0 0.0
    %1198 = vmatpush1.msra.mxu0 0.0
    %1199 = vmatprep.subr.mxu0 0.0
    %1200 = vmatpush1.msra.mxu0 0.0
    %1201 = vmatprep.subr.mxu0 0.0
    %1202 = vmatpush1.msra.mxu0 0.0
    %1203 = vmatprep.subr.mxu0 0.0
    %1204 = vmatpush1.msra.mxu0 0.0
    %1205 = vmatprep.subr.mxu0 0.0
    %1206 = vmatpush1.msra.mxu0 0.0
    %1207 = vmatprep.subr.mxu0 0.0
    %1208 = vmatpush1.msra.mxu0 0.0
    %1209 = vmatprep.subr.mxu0 0.0
    %1210 = vmatpush1.msra.mxu0 0.0
    %1211 = vmatprep.subr.mxu0 0.0
    %1212 = vmatpush1.msra.mxu0 0.0
    %1213 = vmatprep.subr.mxu0 0.0
    %1214 = vmatpush1.msra.mxu0 0.0
    %1215 = vmatprep.subr.mxu0 0.0
    %1216 = vmatpush1.msra.mxu0 0.0
    %1217 = vmatprep.subr.mxu0 0.0
    %1218 = vmatpush1.msra.mxu0 0.0
    %1219 = vmatprep.subr.mxu0 0.0
    %1220 = vmatpush1.msra.mxu0 0.0
    %1221 = vmatprep.mubr.f32.mxu0 0.0
    %1222 = vmatmul.mubr.f32.gmra.mrb[0].mxu0 %v1155
    %v1223 = vpop.f32.mrb[0].mxu0
    %v1224 = vadd.f32 0.0, %v1223
    %v1225 = vpop.f32.mrb[0].mxu0
    %1226 = vdwg.mxu0
    %v1227 = vadd.f32 %v1153, %v1224
    %v1228 = vxor.u32 %v1227, 2147483648
    %v1229 = vmul.f32 %v1228, 1.442695
    %v1230 = vpow.pop %v1229
    %v1231 = vadd.f32 %v1230, 1.0
    %v1232 = vrcp.pop %v1231
    %v1233 = vmul.f32 1.0, %v1232
    %v1234 = vtanh.pop %v1227
    %1236 = vrot.lane.b32.xlu0 %v1033, 32
    %v1237 = vpop.permute.xlu0 %1236
    %v1239 = vmul.f32 %v1233, %v1237
    %1241 = vrot.lane.b32.xlu0 %v1234, 64
    %v1242 = vpop.permute.xlu0 %1241
    %v1244 = vmul.f32 %v1233, %v1242
    %1246 = vrot.lane.b32.xlu0 %v1244, 32
    %v1247 = vpop.permute.xlu0 %1246
    %v1249 = vadd.f32 %v1239, %v1247
    %v1250 = vtanh.pop %v1249
    %1252 = vrot.lane.b32.xlu0 %v1250, 64
    %v1253 = vpop.permute.xlu0 %1252
    %v1255 = vmul.f32 %v1233, %v1253
    %1256 = vrot.lane.b32.xlu0 %v1027, 96
    %v1257 = vpop.permute.xlu0 %1256
    %v1259 = vsel %vm417, %v1255, %v1257
    %v1260 = vsel %vm417, %v1249, %v1237
    %v1261 = vld [vmem:[#allocation3] sm:$0x3]
    %v1262 = vld [vmem:[#allocation9] sm:$0xff]
    %v1263 = vld [vmem:[#allocation9 + $0x8] sm:$0xff]
    %v1264 = vld [vmem:[#allocation9 + $0x10] sm:$0xff]
    %v1265 = vld [vmem:[#allocation9 + $0x18] sm:$0xff]
    %vm1266 = vcmp.gt.s32.totalorder %v307, 0
    %v1268 = vsel %vm314, %v1146, 0
    %1270 = vmatprep.subr.mxu0 0.0
    %1271 = vmatpush1.msra.mxu0 %v1262
    %1272 = vmatprep.subr.mxu0 0.0
    %1273 = vmatpush1.msra.mxu0 %v1263
    %1274 = vmatprep.subr.mxu0 0.0
    %1275 = vmatpush1.msra.mxu0 %v1264
    %1276 = vmatprep.subr.mxu0 0.0
    %1277 = vmatpush1.msra.mxu0 %v1265
    %1278 = vmatprep.subr.mxu0 0.0
    %1279 = vmatpush1.msra.mxu0 0.0
    %1280 = vmatprep.subr.mxu0 0.0
    %1281 = vmatpush1.msra.mxu0 0.0
    %1282 = vmatprep.subr.mxu0 0.0
    %1283 = vmatpush1.msra.mxu0 0.0
    %1284 = vmatprep.subr.mxu0 0.0
    %1285 = vmatpush1.msra.mxu0 0.0
    %1286 = vmatprep.subr.mxu0 0.0
    %1287 = vmatpush1.msra.mxu0 0.0
    %1288 = vmatprep.subr.mxu0 0.0
    %1289 = vmatpush1.msra.mxu0 0.0
    %1290 = vmatprep.subr.mxu0 0.0
    %1291 = vmatpush1.msra.mxu0 0.0
    %1292 = vmatprep.subr.mxu0 0.0
    %1293 = vmatpush1.msra.mxu0 0.0
    %1294 = vmatprep.subr.mxu0 0.0
    %1295 = vmatpush1.msra.mxu0 0.0
    %1296 = vmatprep.subr.mxu0 0.0
    %1297 = vmatpush1.msra.mxu0 0.0
    %1298 = vmatprep.subr.mxu0 0.0
    %1299 = vmatpush1.msra.mxu0 0.0
    %1300 = vmatprep.subr.mxu0 0.0
    %1301 = vmatpush1.msra.mxu0 0.0
    %1302 = vmatprep.subr.mxu0 0.0
    %1303 = vmatpush1.msra.mxu0 0.0
    %1304 = vmatprep.subr.mxu0 0.0
    %1305 = vmatpush1.msra.mxu0 0.0
    %1306 = vmatprep.subr.mxu0 0.0
    %1307 = vmatpush1.msra.mxu0 0.0
    %1308 = vmatprep.subr.mxu0 0.0
    %1309 = vmatpush1.msra.mxu0 0.0
    %1310 = vmatprep.subr.mxu0 0.0
    %1311 = vmatpush1.msra.mxu0 0.0
    %1312 = vmatprep.subr.mxu0 0.0
    %1313 = vmatpush1.msra.mxu0 0.0
    %1314 = vmatprep.subr.mxu0 0.0
    %1315 = vmatpush1.msra.mxu0 0.0
    %1316 = vmatprep.subr.mxu0 0.0
    %1317 = vmatpush1.msra.mxu0 0.0
    %1318 = vmatprep.subr.mxu0 0.0
    %1319 = vmatpush1.msra.mxu0 0.0
    %1320 = vmatprep.subr.mxu0 0.0
    %1321 = vmatpush1.msra.mxu0 0.0
    %1322 = vmatprep.subr.mxu0 0.0
    %1323 = vmatpush1.msra.mxu0 0.0
    %1324 = vmatprep.subr.mxu0 0.0
    %1325 = vmatpush1.msra.mxu0 0.0
    %1326 = vmatprep.subr.mxu0 0.0
    %1327 = vmatpush1.msra.mxu0 0.0
    %1328 = vmatprep.subr.mxu0 0.0
    %1329 = vmatpush1.msra.mxu0 0.0
    %1330 = vmatprep.subr.mxu0 0.0
    %1331 = vmatpush1.msra.mxu0 0.0
    %1332 = vmatprep.subr.mxu0 0.0
    %1333 = vmatpush1.msra.mxu0 0.0
    %1334 = vmatprep.mubr.f32.mxu0 0.0
    %1335 = vmatmul.mubr.f32.gmra.mrb[0].mxu0 %v1268
    %v1336 = vpop.f32.mrb[0].mxu0
    %v1337 = vadd.f32 0.0, %v1336
    %v1338 = vpop.f32.mrb[0].mxu0
    %1339 = vdwg.mxu0
    %v1340 = vadd.f32 %v1261, %v1337
    %v1341 = vxor.u32 %v1340, 2147483648
    %v1342 = vmul.f32 %v1341, 1.442695
    %v1343 = vpow.pop %v1342
    %v1344 = vadd.f32 %v1343, 1.0
    %v1345 = vrcp.pop %v1344
    %v1346 = vmul.f32 1.0, %v1345
    %v1347 = vtanh.pop %v1340
    %1349 = vrot.lane.b32.xlu0 %v1152, 32
    %v1350 = vpop.permute.xlu0 %1349
    %v1352 = vmul.f32 %v1346, %v1350
    %1354 = vrot.lane.b32.xlu0 %v1347, 64
    %v1355 = vpop.permute.xlu0 %1354
    %v1357 = vmul.f32 %v1346, %v1355
    %1359 = vrot.lane.b32.xlu0 %v1357, 32
    %v1360 = vpop.permute.xlu0 %1359
    %v1362 = vadd.f32 %v1352, %v1360
    %v1363 = vtanh.pop %v1362
    %1365 = vrot.lane.b32.xlu0 %v1363, 64
    %v1366 = vpop.permute.xlu0 %1365
    %v1368 = vmul.f32 %v1346, %v1366
    %v1369 = vsel %vm1266, 1, 0
    %1370 = vset.pattern.permute.xlu0 0
    %1371 = vperm.xlu0 %1370, %v1369
    %v1372 = vpop.permute.xlu0 %1371
    %vm1373 = vcmp.eq.s32.totalorder %v1372, 1
    %1374 = vrot.lane.b32.xlu0 %v1146, 96
    %v1375 = vpop.permute.xlu0 %1374
    %v1377 = vsel %vm1373, %v1368, %v1375
    %v1378 = vsel %vm1373, %v1362, %v1350
    %v1379 = vld [vmem:[#allocation3 + $0x18] sm:$0xc0]
    %s1380 = scalar_lea.vmem [#allocation9], 32
    %v1381 = vld [vmem:[%s1380] sm:$0xff]
    %v1382 = vld [vmem:[%s1380 + $0x8] sm:$0xff]
    %v1383 = vld [vmem:[%s1380 + $0x10] sm:$0xff]
    %v1384 = vld [vmem:[%s1380 + $0x18] sm:$0xff]
    %vm1385 = vcmp.gt.s32.totalorder %v307, 7
    %1387 = vrot.lane.b32.xlu0 %v1259, 32
    %v1388 = vpop.permute.xlu0 %1387
    %v1389 = vsel %vm314, %v1388, 0
    %1391 = vmatprep.subr.mxu0 0.0
    %1392 = vmatpush1.msra.mxu0 %v1381
    %1393 = vmatprep.subr.mxu0 0.0
    %1394 = vmatpush1.msra.mxu0 %v1382
    %1395 = vmatprep.subr.mxu0 0.0
    %1396 = vmatpush1.msra.mxu0 %v1383
    %1397 = vmatprep.subr.mxu0 0.0
    %1398 = vmatpush1.msra.mxu0 %v1384
    %1399 = vmatprep.subr.mxu0 0.0
    %1400 = vmatpush1.msra.mxu0 0.0
    %1401 = vmatprep.subr.mxu0 0.0
    %1402 = vmatpush1.msra.mxu0 0.0
    %1403 = vmatprep.subr.mxu0 0.0
    %1404 = vmatpush1.msra.mxu0 0.0
    %1405 = vmatprep.subr.mxu0 0.0
    %1406 = vmatpush1.msra.mxu0 0.0
    %1407 = vmatprep.subr.mxu0 0.0
    %1408 = vmatpush1.msra.mxu0 0.0
    %1409 = vmatprep.subr.mxu0 0.0
    %1410 = vmatpush1.msra.mxu0 0.0
    %1411 = vmatprep.subr.mxu0 0.0
    %1412 = vmatpush1.msra.mxu0 0.0
    %1413 = vmatprep.subr.mxu0 0.0
    %1414 = vmatpush1.msra.mxu0 0.0
    %1415 = vmatprep.subr.mxu0 0.0
    %1416 = vmatpush1.msra.mxu0 0.0
    %1417 = vmatprep.subr.mxu0 0.0
    %1418 = vmatpush1.msra.mxu0 0.0
    %1419 = vmatprep.subr.mxu0 0.0
    %1420 = vmatpush1.msra.mxu0 0.0
    %1421 = vmatprep.subr.mxu0 0.0
    %1422 = vmatpush1.msra.mxu0 0.0
    %1423 = vmatprep.subr.mxu0 0.0
    %1424 = vmatpush1.msra.mxu0 0.0
    %1425 = vmatprep.subr.mxu0 0.0
    %1426 = vmatpush1.msra.mxu0 0.0
    %1427 = vmatprep.subr.mxu0 0.0
    %1428 = vmatpush1.msra.mxu0 0.0
    %1429 = vmatprep.subr.mxu0 0.0
    %1430 = vmatpush1.msra.mxu0 0.0
    %1431 = vmatprep.subr.mxu0 0.0
    %1432 = vmatpush1.msra.mxu0 0.0
    %1433 = vmatprep.subr.mxu0 0.0
    %1434 = vmatpush1.msra.mxu0 0.0
    %1435 = vmatprep.subr.mxu0 0.0
    %1436 = vmatpush1.msra.mxu0 0.0
    %1437 = vmatprep.subr.mxu0 0.0
    %1438 = vmatpush1.msra.mxu0 0.0
    %1439 = vmatprep.subr.mxu0 0.0
    %1440 = vmatpush1.msra.mxu0 0.0
    %1441 = vmatprep.subr.mxu0 0.0
    %1442 = vmatpush1.msra.mxu0 0.0
    %1443 = vmatprep.subr.mxu0 0.0
    %1444 = vmatpush1.msra.mxu0 0.0
    %1445 = vmatprep.subr.mxu0 0.0
    %1446 = vmatpush1.msra.mxu0 0.0
    %1447 = vmatprep.subr.mxu0 0.0
    %1448 = vmatpush1.msra.mxu0 0.0
    %1449 = vmatprep.subr.mxu0 0.0
    %1450 = vmatpush1.msra.mxu0 0.0
    %1451 = vmatprep.subr.mxu0 0.0
    %1452 = vmatpush1.msra.mxu0 0.0
    %1453 = vmatprep.subr.mxu0 0.0
    %1454 = vmatpush1.msra.mxu0 0.0
    %1455 = vmatprep.mubr.f32.mxu0 0.0
    %1456 = vmatmul.mubr.f32.gmra.mrb[0].mxu0 %v1389
    %v1457 = vpop.f32.mrb[0].mxu0
    %v1458 = vadd.f32 0.0, %v1457
    %v1459 = vpop.f32.mrb[0].mxu0
    %1460 = vdwg.mxu0
    %v1462 = vrot.slane %v1458, 2
    %v1464 = vadd.f32 %v1379, %v1462
    %v1465 = vxor.u32 %v1464, 2147483648
    %v1466 = vmul.f32 %v1465, 1.442695
    %v1467 = vpow.pop %v1466
    %v1468 = vadd.f32 %v1467, 1.0
    %v1469 = vrcp.pop %v1468
    %v1470 = vmul.f32 1.0, %v1469
    %v1471 = vtanh.pop %v1464
    %v1473 = vrot.slane %v1260, 2
    %v1475 = vmul.f32 %v1470, %v1473
    %1477 = vrot.lane.b32.xlu0 %v1471, 64
    %v1478 = vpop.permute.xlu0 %1477
    %v1480 = vmul.f32 %v1470, %v1478
    %1482 = vrot.lane.b32.xlu0 %v1480, 32
    %v1483 = vpop.permute.xlu0 %1482
    %v1485 = vadd.f32 %v1475, %v1483
    %v1486 = vtanh.pop %v1485
    %1488 = vrot.lane.b32.xlu0 %v1486, 64
    %v1489 = vpop.permute.xlu0 %1488
    %v1491 = vmul.f32 %v1470, %v1489
    %v1492 = vsel %vm1385, 1, 0
    %1493 = vset.pattern.permute.xlu0 0
    %1494 = vperm.xlu0 %1493, %v1492
    %v1495 = vpop.permute.xlu0 %1494
    %vm1496 = vcmp.eq.s32.totalorder %v1495, 1
    %v1498 = vrot.slane %v1491, 6
    %1499 = vrot.lane.b32.xlu0 %v1498, 32
    %v1500 = vpop.permute.xlu0 %1499
    %v1503 = vsel %vm1496, %v1500, %v1388
    %v1505 = vrot.slane %v1485, 6
    %1506 = vrot.lane.b32.xlu0 %v1505, 96
    %v1507 = vpop.permute.xlu0 %1506
    %1509 = vrot.lane.b32.xlu0 %v1260, 96
    %v1510 = vpop.permute.xlu0 %1509
    %v1512 = vsel %vm1496, %v1507, %v1510
    %v1513 = vld [vmem:[#allocation3] sm:$0xc]
    %vm1514 = vcmp.gt.s32.totalorder %v307, 1
    %1516 = vrot.lane.b32.xlu0 %v1377, 32
    %v1517 = vpop.permute.xlu0 %1516
    %v1518 = vsel %vm314, %v1517, 0
    %1520 = vmatprep.subr.mxu0 0.0
    %1521 = vmatpush1.msra.mxu0 %v1262
    %1522 = vmatprep.subr.mxu0 0.0
    %1523 = vmatpush1.msra.mxu0 %v1263
    %1524 = vmatprep.subr.mxu0 0.0
    %1525 = vmatpush1.msra.mxu0 %v1264
    %1526 = vmatprep.subr.mxu0 0.0
    %1527 = vmatpush1.msra.mxu0 %v1265
    %1528 = vmatprep.subr.mxu0 0.0
    %1529 = vmatpush1.msra.mxu0 0.0
    %1530 = vmatprep.subr.mxu0 0.0
    %1531 = vmatpush1.msra.mxu0 0.0
    %1532 = vmatprep.subr.mxu0 0.0
    %1533 = vmatpush1.msra.mxu0 0.0
    %1534 = vmatprep.subr.mxu0 0.0
    %1535 = vmatpush1.msra.mxu0 0.0
    %1536 = vmatprep.subr.mxu0 0.0
    %1537 = vmatpush1.msra.mxu0 0.0
    %1538 = vmatprep.subr.mxu0 0.0
    %1539 = vmatpush1.msra.mxu0 0.0
    %1540 = vmatprep.subr.mxu0 0.0
    %1541 = vmatpush1.msra.mxu0 0.0
    %1542 = vmatprep.subr.mxu0 0.0
    %1543 = vmatpush1.msra.mxu0 0.0
    %1544 = vmatprep.subr.mxu0 0.0
    %1545 = vmatpush1.msra.mxu0 0.0
    %1546 = vmatprep.subr.mxu0 0.0
    %1547 = vmatpush1.msra.mxu0 0.0
    %1548 = vmatprep.subr.mxu0 0.0
    %1549 = vmatpush1.msra.mxu0 0.0
    %1550 = vmatprep.subr.mxu0 0.0
    %1551 = vmatpush1.msra.mxu0 0.0
    %1552 = vmatprep.subr.mxu0 0.0
    %1553 = vmatpush1.msra.mxu0 0.0
    %1554 = vmatprep.subr.mxu0 0.0
    %1555 = vmatpush1.msra.mxu0 0.0
    %1556 = vmatprep.subr.mxu0 0.0
    %1557 = vmatpush1.msra.mxu0 0.0
    %1558 = vmatprep.subr.mxu0 0.0
    %1559 = vmatpush1.msra.mxu0 0.0
    %1560 = vmatprep.subr.mxu0 0.0
    %1561 = vmatpush1.msra.mxu0 0.0
    %1562 = vmatprep.subr.mxu0 0.0
    %1563 = vmatpush1.msra.mxu0 0.0
    %1564 = vmatprep.subr.mxu0 0.0
    %1565 = vmatpush1.msra.mxu0 0.0
    %1566 = vmatprep.subr.mxu0 0.0
    %1567 = vmatpush1.msra.mxu0 0.0
    %1568 = vmatprep.subr.mxu0 0.0
    %1569 = vmatpush1.msra.mxu0 0.0
    %1570 = vmatprep.subr.mxu0 0.0
    %1571 = vmatpush1.msra.mxu0 0.0
    %1572 = vmatprep.subr.mxu0 0.0
    %1573 = vmatpush1.msra.mxu0 0.0
    %1574 = vmatprep.subr.mxu0 0.0
    %1575 = vmatpush1.msra.mxu0 0.0
    %1576 = vmatprep.subr.mxu0 0.0
    %1577 = vmatpush1.msra.mxu0 0.0
    %1578 = vmatprep.subr.mxu0 0.0
    %1579 = vmatpush1.msra.mxu0 0.0
    %1580 = vmatprep.subr.mxu0 0.0
    %1581 = vmatpush1.msra.mxu0 0.0
    %1582 = vmatprep.subr.mxu0 0.0
    %1583 = vmatpush1.msra.mxu0 0.0
    %1584 = vmatprep.mubr.f32.mxu0 0.0
    %1585 = vmatmul.mubr.f32.gmra.mrb[0].mxu0 %v1518
    %v1586 = vpop.f32.mrb[0].mxu0
    %v1587 = vadd.f32 0.0, %v1586
    %v1588 = vpop.f32.mrb[0].mxu0
    %1589 = vdwg.mxu0
    %v1591 = vrot.slane %v1587, 6
    %v1593 = vadd.f32 %v1513, %v1591
    %v1594 = vxor.u32 %v1593, 2147483648
    %v1595 = vmul.f32 %v1594, 1.442695
    %v1596 = vpow.pop %v1595
    %v1597 = vadd.f32 %v1596, 1.0
    %v1598 = vrcp.pop %v1597
    %v1599 = vmul.f32 1.0, %v1598
    %v1600 = vtanh.pop %v1593
    %v1602 = vrot.slane %v1378, 6
    %v1604 = vmul.f32 %v1599, %v1602
    %1606 = vrot.lane.b32.xlu0 %v1600, 64
    %v1607 = vpop.permute.xlu0 %1606
    %v1609 = vmul.f32 %v1599, %v1607
    %1611 = vrot.lane.b32.xlu0 %v1609, 32
    %v1612 = vpop.permute.xlu0 %1611
    %v1614 = vadd.f32 %v1604, %v1612
    %v1615 = vtanh.pop %v1614
    %1617 = vrot.lane.b32.xlu0 %v1615, 64
    %v1618 = vpop.permute.xlu0 %1617
    %v1620 = vmul.f32 %v1599, %v1618
    %v1621 = vsel %vm1514, 1, 0
    %1622 = vset.pattern.permute.xlu0 0
    %1623 = vperm.xlu0 %1622, %v1621
    %v1624 = vpop.permute.xlu0 %1623
    %vm1625 = vcmp.eq.s32.totalorder %v1624, 1
    %v1627 = vrot.slane %v1620, 2
    %1628 = vrot.lane.b32.xlu0 %v1627, 32
    %v1629 = vpop.permute.xlu0 %1628
    %v1632 = vsel %vm1625, %v1629, %v1517
    %v1634 = vrot.slane %v1614, 2
    %1635 = vrot.lane.b32.xlu0 %v1634, 96
    %v1636 = vpop.permute.xlu0 %1635
    %1638 = vrot.lane.b32.xlu0 %v1378, 96
    %v1639 = vpop.permute.xlu0 %1638
    %v1641 = vsel %vm1625, %v1636, %v1639
    %v1642 = vld [vmem:[#allocation3 + $0x18] sm:$0x30]
    %vm1643 = vcmp.gt.s32.totalorder %v307, 6
    %v1645 = vsel %vm314, %v1503, 0
    %1647 = vmatprep.subr.mxu0 0.0
    %1648 = vmatpush1.msra.mxu0 %v1381
    %1649 = vmatprep.subr.mxu0 0.0
    %1650 = vmatpush1.msra.mxu0 %v1382
    %1651 = vmatprep.subr.mxu0 0.0
    %1652 = vmatpush1.msra.mxu0 %v1383
    %1653 = vmatprep.subr.mxu0 0.0
    %1654 = vmatpush1.msra.mxu0 %v1384
    %1655 = vmatprep.subr.mxu0 0.0
    %1656 = vmatpush1.msra.mxu0 0.0
    %1657 = vmatprep.subr.mxu0 0.0
    %1658 = vmatpush1.msra.mxu0 0.0
    %1659 = vmatprep.subr.mxu0 0.0
    %1660 = vmatpush1.msra.mxu0 0.0
    %1661 = vmatprep.subr.mxu0 0.0
    %1662 = vmatpush1.msra.mxu0 0.0
    %1663 = vmatprep.subr.mxu0 0.0
    %1664 = vmatpush1.msra.mxu0 0.0
    %1665 = vmatprep.subr.mxu0 0.0
    %1666 = vmatpush1.msra.mxu0 0.0
    %1667 = vmatprep.subr.mxu0 0.0
    %1668 = vmatpush1.msra.mxu0 0.0
    %1669 = vmatprep.subr.mxu0 0.0
    %1670 = vmatpush1.msra.mxu0 0.0
    %1671 = vmatprep.subr.mxu0 0.0
    %1672 = vmatpush1.msra.mxu0 0.0
    %1673 = vmatprep.subr.mxu0 0.0
    %1674 = vmatpush1.msra.mxu0 0.0
    %1675 = vmatprep.subr.mxu0 0.0
    %1676 = vmatpush1.msra.mxu0 0.0
    %1677 = vmatprep.subr.mxu0 0.0
    %1678 = vmatpush1.msra.mxu0 0.0
    %1679 = vmatprep.subr.mxu0 0.0
    %1680 = vmatpush1.msra.mxu0 0.0
    %1681 = vmatprep.subr.mxu0 0.0
    %1682 = vmatpush1.msra.mxu0 0.0
    %1683 = vmatprep.subr.mxu0 0.0
    %1684 = vmatpush1.msra.mxu0 0.0
    %1685 = vmatprep.subr.mxu0 0.0
    %1686 = vmatpush1.msra.mxu0 0.0
    %1687 = vmatprep.subr.mxu0 0.0
    %1688 = vmatpush1.msra.mxu0 0.0
    %1689 = vmatprep.subr.mxu0 0.0
    %1690 = vmatpush1.msra.mxu0 0.0
    %1691 = vmatprep.subr.mxu0 0.0
    %1692 = vmatpush1.msra.mxu0 0.0
    %1693 = vmatprep.subr.mxu0 0.0
    %1694 = vmatpush1.msra.mxu0 0.0
    %1695 = vmatprep.subr.mxu0 0.0
    %1696 = vmatpush1.msra.mxu0 0.0
    %1697 = vmatprep.subr.mxu0 0.0
    %1698 = vmatpush1.msra.mxu0 0.0
    %1699 = vmatprep.subr.mxu0 0.0
    %1700 = vmatpush1.msra.mxu0 0.0
    %1701 = vmatprep.subr.mxu0 0.0
    %1702 = vmatpush1.msra.mxu0 0.0
    %1703 = vmatprep.subr.mxu0 0.0
    %1704 = vmatpush1.msra.mxu0 0.0
    %1705 = vmatprep.subr.mxu0 0.0
    %1706 = vmatpush1.msra.mxu0 0.0
    %1707 = vmatprep.subr.mxu0 0.0
    %1708 = vmatpush1.msra.mxu0 0.0
    %1709 = vmatprep.subr.mxu0 0.0
    %1710 = vmatpush1.msra.mxu0 0.0
    %1711 = vmatprep.mubr.f32.mxu0 0.0
    %1712 = vmatmul.mubr.f32.gmra.mrb[0].mxu0 %v1645
    %v1713 = vpop.f32.mrb[0].mxu0
    %v1714 = vadd.f32 0.0, %v1713
    %v1715 = vpop.f32.mrb[0].mxu0
    %1716 = vdwg.mxu0
    %v1718 = vrot.slane %v1714, 4
    %v1720 = vadd.f32 %v1642, %v1718
    %v1721 = vxor.u32 %v1720, 2147483648
    %v1722 = vmul.f32 %v1721, 1.442695
    %v1723 = vpow.pop %v1722
    %v1724 = vadd.f32 %v1723, 1.0
    %v1725 = vrcp.pop %v1724
    %v1726 = vmul.f32 1.0, %v1725
    %v1727 = vtanh.pop %v1720
    %v1729 = vrot.slane %v1512, 4
    %1730 = vrot.lane.b32.xlu0 %v1729, 32
    %v1731 = vpop.permute.xlu0 %1730
    %v1733 = vmul.f32 %v1726, %v1731
    %1735 = vrot.lane.b32.xlu0 %v1727, 64
    %v1736 = vpop.permute.xlu0 %1735
    %v1738 = vmul.f32 %v1726, %v1736
    %1740 = vrot.lane.b32.xlu0 %v1738, 32
    %v1741 = vpop.permute.xlu0 %1740
    %v1743 = vadd.f32 %v1733, %v1741
    %v1744 = vtanh.pop %v1743
    %1746 = vrot.lane.b32.xlu0 %v1744, 64
    %v1747 = vpop.permute.xlu0 %1746
    %v1749 = vmul.f32 %v1726, %v1747
    %v1750 = vsel %vm1643, 1, 0
    %1751 = vset.pattern.permute.xlu0 0
    %1752 = vperm.xlu0 %1751, %v1750
    %v1753 = vpop.permute.xlu0 %1752
    %vm1754 = vcmp.eq.s32.totalorder %v1753, 1
    %v1756 = vrot.slane %v1749, 4
    %1757 = vrot.lane.b32.xlu0 %v1756, 32
    %v1758 = vpop.permute.xlu0 %1757
    %v1760 = vsel %vm1754, %v1758, %v1503
    %v1762 = vrot.slane %v1743, 4
    %1763 = vrot.lane.b32.xlu0 %v1762, 96
    %v1764 = vpop.permute.xlu0 %1763
    %v1766 = vsel %vm1754, %v1764, %v1512
    %v1767 = vld [vmem:[#allocation3] sm:$0x30]
    %vm1768 = vcmp.gt.s32.totalorder %v307, 2
    %v1770 = vsel %vm314, %v1632, 0
    %1772 = vmatprep.subr.mxu0 0.0
    %1773 = vmatpush1.msra.mxu0 %v1262
    %1774 = vmatprep.subr.mxu0 0.0
    %1775 = vmatpush1.msra.mxu0 %v1263
    %1776 = vmatprep.subr.mxu0 0.0
    %1777 = vmatpush1.msra.mxu0 %v1264
    %1778 = vmatprep.subr.mxu0 0.0
    %1779 = vmatpush1.msra.mxu0 %v1265
    %1780 = vmatprep.subr.mxu0 0.0
    %1781 = vmatpush1.msra.mxu0 0.0
    %1782 = vmatprep.subr.mxu0 0.0
    %1783 = vmatpush1.msra.mxu0 0.0
    %1784 = vmatprep.subr.mxu0 0.0
    %1785 = vmatpush1.msra.mxu0 0.0
    %1786 = vmatprep.subr.mxu0 0.0
    %1787 = vmatpush1.msra.mxu0 0.0
    %1788 = vmatprep.subr.mxu0 0.0
    %1789 = vmatpush1.msra.mxu0 0.0
    %1790 = vmatprep.subr.mxu0 0.0
    %1791 = vmatpush1.msra.mxu0 0.0
    %1792 = vmatprep.subr.mxu0 0.0
    %1793 = vmatpush1.msra.mxu0 0.0
    %1794 = vmatprep.subr.mxu0 0.0
    %1795 = vmatpush1.msra.mxu0 0.0
    %1796 = vmatprep.subr.mxu0 0.0
    %1797 = vmatpush1.msra.mxu0 0.0
    %1798 = vmatprep.subr.mxu0 0.0
    %1799 = vmatpush1.msra.mxu0 0.0
    %1800 = vmatprep.subr.mxu0 0.0
    %1801 = vmatpush1.msra.mxu0 0.0
    %1802 = vmatprep.subr.mxu0 0.0
    %1803 = vmatpush1.msra.mxu0 0.0
    %1804 = vmatprep.subr.mxu0 0.0
    %1805 = vmatpush1.msra.mxu0 0.0
    %1806 = vmatprep.subr.mxu0 0.0
    %1807 = vmatpush1.msra.mxu0 0.0
    %1808 = vmatprep.subr.mxu0 0.0
    %1809 = vmatpush1.msra.mxu0 0.0
    %1810 = vmatprep.subr.mxu0 0.0
    %1811 = vmatpush1.msra.mxu0 0.0
    %1812 = vmatprep.subr.mxu0 0.0
    %1813 = vmatpush1.msra.mxu0 0.0
    %1814 = vmatprep.subr.mxu0 0.0
    %1815 = vmatpush1.msra.mxu0 0.0
    %1816 = vmatprep.subr.mxu0 0.0
    %1817 = vmatpush1.msra.mxu0 0.0
    %1818 = vmatprep.subr.mxu0 0.0
    %1819 = vmatpush1.msra.mxu0 0.0
    %1820 = vmatprep.subr.mxu0 0.0
    %1821 = vmatpush1.msra.mxu0 0.0
    %1822 = vmatprep.subr.mxu0 0.0
    %1823 = vmatpush1.msra.mxu0 0.0
    %1824 = vmatprep.subr.mxu0 0.0
    %1825 = vmatpush1.msra.mxu0 0.0
    %1826 = vmatprep.subr.mxu0 0.0
    %1827 = vmatpush1.msra.mxu0 0.0
    %1828 = vmatprep.subr.mxu0 0.0
    %1829 = vmatpush1.msra.mxu0 0.0
    %1830 = vmatprep.subr.mxu0 0.0
    %1831 = vmatpush1.msra.mxu0 0.0
    %1832 = vmatprep.subr.mxu0 0.0
    %1833 = vmatpush1.msra.mxu0 0.0
    %1834 = vmatprep.subr.mxu0 0.0
    %1835 = vmatpush1.msra.mxu0 0.0
    %1836 = vmatprep.mubr.f32.mxu0 0.0
    %1837 = vmatmul.mubr.f32.gmra.mrb[0].mxu0 %v1770
    %v1838 = vpop.f32.mrb[0].mxu0
    %v1839 = vadd.f32 0.0, %v1838
    %v1840 = vpop.f32.mrb[0].mxu0
    %1841 = vdwg.mxu0
    %v1843 = vrot.slane %v1839, 4
    %v1845 = vadd.f32 %v1767, %v1843
    %v1846 = vxor.u32 %v1845, 2147483648
    %v1847 = vmul.f32 %v1846, 1.442695
    %v1848 = vpow.pop %v1847
    %v1849 = vadd.f32 %v1848, 1.0
    %v1850 = vrcp.pop %v1849
    %v1851 = vmul.f32 1.0, %v1850
    %v1852 = vtanh.pop %v1845
    %v1854 = vrot.slane %v1641, 4
    %1855 = vrot.lane.b32.xlu0 %v1854, 32
    %v1856 = vpop.permute.xlu0 %1855
    %v1858 = vmul.f32 %v1851, %v1856
    %1860 = vrot.lane.b32.xlu0 %v1852, 64
    %v1861 = vpop.permute.xlu0 %1860
    %v1863 = vmul.f32 %v1851, %v1861
    %1865 = vrot.lane.b32.xlu0 %v1863, 32
    %v1866 = vpop.permute.xlu0 %1865
    %v1868 = vadd.f32 %v1858, %v1866
    %v1869 = vtanh.pop %v1868
    %1871 = vrot.lane.b32.xlu0 %v1869, 64
    %v1872 = vpop.permute.xlu0 %1871
    %v1874 = vmul.f32 %v1851, %v1872
    %v1875 = vsel %vm1768, 1, 0
    %1876 = vset.pattern.permute.xlu0 0
    %1877 = vperm.xlu0 %1876, %v1875
    %v1878 = vpop.permute.xlu0 %1877
    %vm1879 = vcmp.eq.s32.totalorder %v1878, 1
    %v1881 = vrot.slane %v1874, 4
    %1882 = vrot.lane.b32.xlu0 %v1881, 32
    %v1883 = vpop.permute.xlu0 %1882
    %v1885 = vsel %vm1879, %v1883, %v1632
    %v1887 = vrot.slane %v1868, 4
    %1888 = vrot.lane.b32.xlu0 %v1887, 96
    %v1889 = vpop.permute.xlu0 %1888
    %v1891 = vsel %vm1879, %v1889, %v1641
    %v1892 = vld [vmem:[#allocation3 + $0x18] sm:$0xc]
    %vm1893 = vcmp.gt.s32.totalorder %v307, 5
    %v1895 = vsel %vm314, %v1760, 0
    %1897 = vmatprep.subr.mxu0 0.0
    %1898 = vmatpush1.msra.mxu0 %v1381
    %1899 = vmatprep.subr.mxu0 0.0
    %1900 = vmatpush1.msra.mxu0 %v1382
    %1901 = vmatprep.subr.mxu0 0.0
    %1902 = vmatpush1.msra.mxu0 %v1383
    %1903 = vmatprep.subr.mxu0 0.0
    %1904 = vmatpush1.msra.mxu0 %v1384
    %1905 = vmatprep.subr.mxu0 0.0
    %1906 = vmatpush1.msra.mxu0 0.0
    %1907 = vmatprep.subr.mxu0 0.0
    %1908 = vmatpush1.msra.mxu0 0.0
    %1909 = vmatprep.subr.mxu0 0.0
    %1910 = vmatpush1.msra.mxu0 0.0
    %1911 = vmatprep.subr.mxu0 0.0
    %1912 = vmatpush1.msra.mxu0 0.0
    %1913 = vmatprep.subr.mxu0 0.0
    %1914 = vmatpush1.msra.mxu0 0.0
    %1915 = vmatprep.subr.mxu0 0.0
    %1916 = vmatpush1.msra.mxu0 0.0
    %1917 = vmatprep.subr.mxu0 0.0
    %1918 = vmatpush1.msra.mxu0 0.0
    %1919 = vmatprep.subr.mxu0 0.0
    %1920 = vmatpush1.msra.mxu0 0.0
    %1921 = vmatprep.subr.mxu0 0.0
    %1922 = vmatpush1.msra.mxu0 0.0
    %1923 = vmatprep.subr.mxu0 0.0
    %1924 = vmatpush1.msra.mxu0 0.0
    %1925 = vmatprep.subr.mxu0 0.0
    %1926 = vmatpush1.msra.mxu0 0.0
    %1927 = vmatprep.subr.mxu0 0.0
    %1928 = vmatpush1.msra.mxu0 0.0
    %1929 = vmatprep.subr.mxu0 0.0
    %1930 = vmatpush1.msra.mxu0 0.0
    %1931 = vmatprep.subr.mxu0 0.0
    %1932 = vmatpush1.msra.mxu0 0.0
    %1933 = vmatprep.subr.mxu0 0.0
    %1934 = vmatpush1.msra.mxu0 0.0
    %1935 = vmatprep.subr.mxu0 0.0
    %1936 = vmatpush1.msra.mxu0 0.0
    %1937 = vmatprep.subr.mxu0 0.0
    %1938 = vmatpush1.msra.mxu0 0.0
    %1939 = vmatprep.subr.mxu0 0.0
    %1940 = vmatpush1.msra.mxu0 0.0
    %1941 = vmatprep.subr.mxu0 0.0
    %1942 = vmatpush1.msra.mxu0 0.0
    %1943 = vmatprep.subr.mxu0 0.0
    %1944 = vmatpush1.msra.mxu0 0.0
    %1945 = vmatprep.subr.mxu0 0.0
    %1946 = vmatpush1.msra.mxu0 0.0
    %1947 = vmatprep.subr.mxu0 0.0
    %1948 = vmatpush1.msra.mxu0 0.0
    %1949 = vmatprep.subr.mxu0 0.0
    %1950 = vmatpush1.msra.mxu0 0.0
    %1951 = vmatprep.subr.mxu0 0.0
    %1952 = vmatpush1.msra.mxu0 0.0
    %1953 = vmatprep.subr.mxu0 0.0
    %1954 = vmatpush1.msra.mxu0 0.0
    %1955 = vmatprep.subr.mxu0 0.0
    %1956 = vmatpush1.msra.mxu0 0.0
    %1957 = vmatprep.subr.mxu0 0.0
    %1958 = vmatpush1.msra.mxu0 0.0
    %1959 = vmatprep.subr.mxu0 0.0
    %1960 = vmatpush1.msra.mxu0 0.0
    %1961 = vmatprep.mubr.f32.mxu0 0.0
    %1962 = vmatmul.mubr.f32.gmra.mrb[0].mxu0 %v1895
    %v1963 = vpop.f32.mrb[0].mxu0
    %v1964 = vadd.f32 0.0, %v1963
    %v1965 = vpop.f32.mrb[0].mxu0
    %1966 = vdwg.mxu0
    %v1968 = vrot.slane %v1964, 6
    %v1970 = vadd.f32 %v1892, %v1968
    %v1971 = vxor.u32 %v1970, 2147483648
    %v1972 = vmul.f32 %v1971, 1.442695
    %v1973 = vpow.pop %v1972
    %v1974 = vadd.f32 %v1973, 1.0
    %v1975 = vrcp.pop %v1974
    %v1976 = vmul.f32 1.0, %v1975
    %v1977 = vtanh.pop %v1970
    %v1979 = vrot.slane %v1766, 6
    %1980 = vrot.lane.b32.xlu0 %v1979, 32
    %v1981 = vpop.permute.xlu0 %1980
    %v1983 = vmul.f32 %v1976, %v1981
    %1985 = vrot.lane.b32.xlu0 %v1977, 64
    %v1986 = vpop.permute.xlu0 %1985
    %v1988 = vmul.f32 %v1976, %v1986
    %1990 = vrot.lane.b32.xlu0 %v1988, 32
    %v1991 = vpop.permute.xlu0 %1990
    %v1993 = vadd.f32 %v1983, %v1991
    %v1994 = vtanh.pop %v1993
    %1996 = vrot.lane.b32.xlu0 %v1994, 64
    %v1997 = vpop.permute.xlu0 %1996
    %v1999 = vmul.f32 %v1976, %v1997
    %v2000 = vsel %vm1893, 1, 0
    %2001 = vset.pattern.permute.xlu0 0
    %2002 = vperm.xlu0 %2001, %v2000
    %v2003 = vpop.permute.xlu0 %2002
    %vm2004 = vcmp.eq.s32.totalorder %v2003, 1
    %v2006 = vrot.slane %v1999, 2
    %2007 = vrot.lane.b32.xlu0 %v2006, 32
    %v2008 = vpop.permute.xlu0 %2007
    %v2010 = vsel %vm2004, %v2008, %v1760
    %v2012 = vrot.slane %v1993, 2
    %2013 = vrot.lane.b32.xlu0 %v2012, 96
    %v2014 = vpop.permute.xlu0 %2013
    %v2016 = vsel %vm2004, %v2014, %v1766
    %v2017 = vld [vmem:[#allocation3] sm:$0xc0]
    %vm2018 = vcmp.gt.s32.totalorder %v307, 3
    %v2020 = vsel %vm314, %v1885, 0
    %2022 = vmatprep.subr.mxu0 0.0
    %2023 = vmatpush1.msra.mxu0 %v1262
    %2024 = vmatprep.subr.mxu0 0.0
    %2025 = vmatpush1.msra.mxu0 %v1263
    %2026 = vmatprep.subr.mxu0 0.0
    %2027 = vmatpush1.msra.mxu0 %v1264
    %2028 = vmatprep.subr.mxu0 0.0
    %2029 = vmatpush1.msra.mxu0 %v1265
    %2030 = vmatprep.subr.mxu0 0.0
    %2031 = vmatpush1.msra.mxu0 0.0
    %2032 = vmatprep.subr.mxu0 0.0
    %2033 = vmatpush1.msra.mxu0 0.0
    %2034 = vmatprep.subr.mxu0 0.0
    %2035 = vmatpush1.msra.mxu0 0.0
    %2036 = vmatprep.subr.mxu0 0.0
    %2037 = vmatpush1.msra.mxu0 0.0
    %2038 = vmatprep.subr.mxu0 0.0
    %2039 = vmatpush1.msra.mxu0 0.0
    %2040 = vmatprep.subr.mxu0 0.0
    %2041 = vmatpush1.msra.mxu0 0.0
    %2042 = vmatprep.subr.mxu0 0.0
    %2043 = vmatpush1.msra.mxu0 0.0
    %2044 = vmatprep.subr.mxu0 0.0
    %2045 = vmatpush1.msra.mxu0 0.0
    %2046 = vmatprep.subr.mxu0 0.0
    %2047 = vmatpush1.msra.mxu0 0.0
    %2048 = vmatprep.subr.mxu0 0.0
    %2049 = vmatpush1.msra.mxu0 0.0
    %2050 = vmatprep.subr.mxu0 0.0
    %2051 = vmatpush1.msra.mxu0 0.0
    %2052 = vmatprep.subr.mxu0 0.0
    %2053 = vmatpush1.msra.mxu0 0.0
    %2054 = vmatprep.subr.mxu0 0.0
    %2055 = vmatpush1.msra.mxu0 0.0
    %2056 = vmatprep.subr.mxu0 0.0
    %2057 = vmatpush1.msra.mxu0 0.0
    %2058 = vmatprep.subr.mxu0 0.0
    %2059 = vmatpush1.msra.mxu0 0.0
    %2060 = vmatprep.subr.mxu0 0.0
    %2061 = vmatpush1.msra.mxu0 0.0
    %2062 = vmatprep.subr.mxu0 0.0
    %2063 = vmatpush1.msra.mxu0 0.0
    %2064 = vmatprep.subr.mxu0 0.0
    %2065 = vmatpush1.msra.mxu0 0.0
    %2066 = vmatprep.subr.mxu0 0.0
    %2067 = vmatpush1.msra.mxu0 0.0
    %2068 = vmatprep.subr.mxu0 0.0
    %2069 = vmatpush1.msra.mxu0 0.0
    %2070 = vmatprep.subr.mxu0 0.0
    %2071 = vmatpush1.msra.mxu0 0.0
    %2072 = vmatprep.subr.mxu0 0.0
    %2073 = vmatpush1.msra.mxu0 0.0
    %2074 = vmatprep.subr.mxu0 0.0
    %2075 = vmatpush1.msra.mxu0 0.0
    %2076 = vmatprep.subr.mxu0 0.0
    %2077 = vmatpush1.msra.mxu0 0.0
    %2078 = vmatprep.subr.mxu0 0.0
    %2079 = vmatpush1.msra.mxu0 0.0
    %2080 = vmatprep.subr.mxu0 0.0
    %2081 = vmatpush1.msra.mxu0 0.0
    %2082 = vmatprep.subr.mxu0 0.0
    %2083 = vmatpush1.msra.mxu0 0.0
    %2084 = vmatprep.subr.mxu0 0.0
    %2085 = vmatpush1.msra.mxu0 0.0
    %2086 = vmatprep.mubr.f32.mxu0 0.0
    %2087 = vmatmul.mubr.f32.gmra.mrb[0].mxu0 %v2020
    %v2088 = vpop.f32.mrb[0].mxu0
    %v2089 = vadd.f32 0.0, %v2088
    %v2090 = vpop.f32.mrb[0].mxu0
    %2091 = vdwg.mxu0
    %v2093 = vrot.slane %v2089, 2
    %v2095 = vadd.f32 %v2017, %v2093
    %v2096 = vxor.u32 %v2095, 2147483648
    %v2097 = vmul.f32 %v2096, 1.442695
    %v2098 = vpow.pop %v2097
    %v2099 = vadd.f32 %v2098, 1.0
    %v2100 = vrcp.pop %v2099
    %v2101 = vmul.f32 1.0, %v2100
    %v2102 = vtanh.pop %v2095
    %v2104 = vrot.slane %v1891, 2
    %2105 = vrot.lane.b32.xlu0 %v2104, 32
    %v2106 = vpop.permute.xlu0 %2105
    %v2108 = vmul.f32 %v2101, %v2106
    %2110 = vrot.lane.b32.xlu0 %v2102, 64
    %v2111 = vpop.permute.xlu0 %2110
    %v2113 = vmul.f32 %v2101, %v2111
    %2115 = vrot.lane.b32.xlu0 %v2113, 32
    %v2116 = vpop.permute.xlu0 %2115
    %v2118 = vadd.f32 %v2108, %v2116
    %v2119 = vtanh.pop %v2118
    %2121 = vrot.lane.b32.xlu0 %v2119, 64
    %v2122 = vpop.permute.xlu0 %2121
    %v2124 = vmul.f32 %v2101, %v2122
    %v2125 = vsel %vm2018, 1, 0
    %2126 = vset.pattern.permute.xlu0 0
    %2127 = vperm.xlu0 %2126, %v2125
    %v2128 = vpop.permute.xlu0 %2127
    %vm2129 = vcmp.eq.s32.totalorder %v2128, 1
    %v2131 = vrot.slane %v2124, 6
    %2132 = vrot.lane.b32.xlu0 %v2131, 32
    %v2133 = vpop.permute.xlu0 %2132
    %v2135 = vsel %vm2129, %v2133, %v1885
    %v2137 = vrot.slane %v2118, 6
    %2138 = vrot.lane.b32.xlu0 %v2137, 96
    %v2139 = vpop.permute.xlu0 %2138
    %v2141 = vsel %vm2129, %v2139, %v1891
    %v2142 = vld [vmem:[#allocation3 + $0x18] sm:$0x3]
    %vm2143 = vcmp.gt.s32.totalorder %v307, 4
    %v2145 = vsel %vm314, %v2010, 0
    %2147 = vmatprep.subr.mxu0 0.0
    %2148 = vmatpush1.msra.mxu0 %v1381
    %2149 = vmatprep.subr.mxu0 0.0
    %2150 = vmatpush1.msra.mxu0 %v1382
    %2151 = vmatprep.subr.mxu0 0.0
    %2152 = vmatpush1.msra.mxu0 %v1383
    %2153 = vmatprep.subr.mxu0 0.0
    %2154 = vmatpush1.msra.mxu0 %v1384
    %2155 = vmatprep.subr.mxu0 0.0
    %2156 = vmatpush1.msra.mxu0 0.0
    %2157 = vmatprep.subr.mxu0 0.0
    %2158 = vmatpush1.msra.mxu0 0.0
    %2159 = vmatprep.subr.mxu0 0.0
    %2160 = vmatpush1.msra.mxu0 0.0
    %2161 = vmatprep.subr.mxu0 0.0
    %2162 = vmatpush1.msra.mxu0 0.0
    %2163 = vmatprep.subr.mxu0 0.0
    %2164 = vmatpush1.msra.mxu0 0.0
    %2165 = vmatprep.subr.mxu0 0.0
    %2166 = vmatpush1.msra.mxu0 0.0
    %2167 = vmatprep.subr.mxu0 0.0
    %2168 = vmatpush1.msra.mxu0 0.0
    %2169 = vmatprep.subr.mxu0 0.0
    %2170 = vmatpush1.msra.mxu0 0.0
    %2171 = vmatprep.subr.mxu0 0.0
    %2172 = vmatpush1.msra.mxu0 0.0
    %2173 = vmatprep.subr.mxu0 0.0
    %2174 = vmatpush1.msra.mxu0 0.0
    %2175 = vmatprep.subr.mxu0 0.0
    %2176 = vmatpush1.msra.mxu0 0.0
    %2177 = vmatprep.subr.mxu0 0.0
    %2178 = vmatpush1.msra.mxu0 0.0
    %2179 = vmatprep.subr.mxu0 0.0
    %2180 = vmatpush1.msra.mxu0 0.0
    %2181 = vmatprep.subr.mxu0 0.0
    %2182 = vmatpush1.msra.mxu0 0.0
    %2183 = vmatprep.subr.mxu0 0.0
    %2184 = vmatpush1.msra.mxu0 0.0
    %2185 = vmatprep.subr.mxu0 0.0
    %2186 = vmatpush1.msra.mxu0 0.0
    %2187 = vmatprep.subr.mxu0 0.0
    %2188 = vmatpush1.msra.mxu0 0.0
    %2189 = vmatprep.subr.mxu0 0.0
    %2190 = vmatpush1.msra.mxu0 0.0
    %2191 = vmatprep.subr.mxu0 0.0
    %2192 = vmatpush1.msra.mxu0 0.0
    %2193 = vmatprep.subr.mxu0 0.0
    %2194 = vmatpush1.msra.mxu0 0.0
    %2195 = vmatprep.subr.mxu0 0.0
    %2196 = vmatpush1.msra.mxu0 0.0
    %2197 = vmatprep.subr.mxu0 0.0
    %2198 = vmatpush1.msra.mxu0 0.0
    %2199 = vmatprep.subr.mxu0 0.0
    %2200 = vmatpush1.msra.mxu0 0.0
    %2201 = vmatprep.subr.mxu0 0.0
    %2202 = vmatpush1.msra.mxu0 0.0
    %2203 = vmatprep.subr.mxu0 0.0
    %2204 = vmatpush1.msra.mxu0 0.0
    %2205 = vmatprep.subr.mxu0 0.0
    %2206 = vmatpush1.msra.mxu0 0.0
    %2207 = vmatprep.subr.mxu0 0.0
    %2208 = vmatpush1.msra.mxu0 0.0
    %2209 = vmatprep.subr.mxu0 0.0
    %2210 = vmatpush1.msra.mxu0 0.0
    %2211 = vmatprep.mubr.f32.mxu0 0.0
    %2212 = vmatmul.mubr.f32.gmra.mrb[0].mxu0 %v2145
    %v2213 = vpop.f32.mrb[0].mxu0
    %v2214 = vadd.f32 0.0, %v2213
    %v2215 = vpop.f32.mrb[0].mxu0
    %2216 = vdwg.mxu0
    %v2217 = vadd.f32 %v2142, %v2214
    %v2218 = vxor.u32 %v2217, 2147483648
    %v2219 = vmul.f32 %v2218, 1.442695
    %v2220 = vpow.pop %v2219
    %v2221 = vadd.f32 %v2220, 1.0
    %v2222 = vrcp.pop %v2221
    %v2223 = vmul.f32 1.0, %v2222
    %v2224 = vtanh.pop %v2217
    %2226 = vrot.lane.b32.xlu0 %v2016, 32
    %v2227 = vpop.permute.xlu0 %2226
    %v2229 = vmul.f32 %v2223, %v2227
    %2231 = vrot.lane.b32.xlu0 %v2224, 64
    %v2232 = vpop.permute.xlu0 %2231
    %v2234 = vmul.f32 %v2223, %v2232
    %2236 = vrot.lane.b32.xlu0 %v2234, 32
    %v2237 = vpop.permute.xlu0 %2236
    %v2239 = vadd.f32 %v2229, %v2237
    %v2240 = vtanh.pop %v2239
    %2242 = vrot.lane.b32.xlu0 %v2240, 64
    %v2243 = vpop.permute.xlu0 %2242
    %v2245 = vmul.f32 %v2223, %v2243
    %v2246 = vsel %vm2143, 1, 0
    %2247 = vset.pattern.permute.xlu0 0
    %2248 = vperm.xlu0 %2247, %v2246
    %v2249 = vpop.permute.xlu0 %2248
    %vm2250 = vcmp.eq.s32.totalorder %v2249, 1
    %2251 = vrot.lane.b32.xlu0 %v2010, 96
    %v2252 = vpop.permute.xlu0 %2251
    %v2254 = vsel %vm2250, %v2245, %v2252
    %v2255 = vsel %vm2250, %v2239, %v2227
    %v2256 = vld [vmem:[#allocation3 + $0x10] sm:$0x3]
    %v2258 = vsel %vm314, %v2135, 0
    %2260 = vmatprep.subr.mxu0 0.0
    %2261 = vmatpush1.msra.mxu0 %v1262
    %2262 = vmatprep.subr.mxu0 0.0
    %2263 = vmatpush1.msra.mxu0 %v1263
    %2264 = vmatprep.subr.mxu0 0.0
    %2265 = vmatpush1.msra.mxu0 %v1264
    %2266 = vmatprep.subr.mxu0 0.0
    %2267 = vmatpush1.msra.mxu0 %v1265
    %2268 = vmatprep.subr.mxu0 0.0
    %2269 = vmatpush1.msra.mxu0 0.0
    %2270 = vmatprep.subr.mxu0 0.0
    %2271 = vmatpush1.msra.mxu0 0.0
    %2272 = vmatprep.subr.mxu0 0.0
    %2273 = vmatpush1.msra.mxu0 0.0
    %2274 = vmatprep.subr.mxu0 0.0
    %2275 = vmatpush1.msra.mxu0 0.0
    %2276 = vmatprep.subr.mxu0 0.0
    %2277 = vmatpush1.msra.mxu0 0.0
    %2278 = vmatprep.subr.mxu0 0.0
    %2279 = vmatpush1.msra.mxu0 0.0
    %2280 = vmatprep.subr.mxu0 0.0
    %2281 = vmatpush1.msra.mxu0 0.0
    %2282 = vmatprep.subr.mxu0 0.0
    %2283 = vmatpush1.msra.mxu0 0.0
    %2284 = vmatprep.subr.mxu0 0.0
    %2285 = vmatpush1.msra.mxu0 0.0
    %2286 = vmatprep.subr.mxu0 0.0
    %2287 = vmatpush1.msra.mxu0 0.0
    %2288 = vmatprep.subr.mxu0 0.0
    %2289 = vmatpush1.msra.mxu0 0.0
    %2290 = vmatprep.subr.mxu0 0.0
    %2291 = vmatpush1.msra.mxu0 0.0
    %2292 = vmatprep.subr.mxu0 0.0
    %2293 = vmatpush1.msra.mxu0 0.0
    %2294 = vmatprep.subr.mxu0 0.0
    %2295 = vmatpush1.msra.mxu0 0.0
    %2296 = vmatprep.subr.mxu0 0.0
    %2297 = vmatpush1.msra.mxu0 0.0
    %2298 = vmatprep.subr.mxu0 0.0
    %2299 = vmatpush1.msra.mxu0 0.0
    %2300 = vmatprep.subr.mxu0 0.0
    %2301 = vmatpush1.msra.mxu0 0.0
    %2302 = vmatprep.subr.mxu0 0.0
    %2303 = vmatpush1.msra.mxu0 0.0
    %2304 = vmatprep.subr.mxu0 0.0
    %2305 = vmatpush1.msra.mxu0 0.0
    %2306 = vmatprep.subr.mxu0 0.0
    %2307 = vmatpush1.msra.mxu0 0.0
    %2308 = vmatprep.subr.mxu0 0.0
    %2309 = vmatpush1.msra.mxu0 0.0
    %2310 = vmatprep.subr.mxu0 0.0
    %2311 = vmatpush1.msra.mxu0 0.0
    %2312 = vmatprep.subr.mxu0 0.0
    %2313 = vmatpush1.msra.mxu0 0.0
    %2314 = vmatprep.subr.mxu0 0.0
    %2315 = vmatpush1.msra.mxu0 0.0
    %2316 = vmatprep.subr.mxu0 0.0
    %2317 = vmatpush1.msra.mxu0 0.0
    %2318 = vmatprep.subr.mxu0 0.0
    %2319 = vmatpush1.msra.mxu0 0.0
    %2320 = vmatprep.subr.mxu0 0.0
    %2321 = vmatpush1.msra.mxu0 0.0
    %2322 = vmatprep.subr.mxu0 0.0
    %2323 = vmatpush1.msra.mxu0 0.0
    %2324 = vmatprep.mubr.f32.mxu0 0.0
    %2325 = vmatmul.mubr.f32.gmra.mrb[0].mxu0 %v2258
    %v2326 = vpop.f32.mrb[0].mxu0
    %v2327 = vadd.f32 0.0, %v2326
    %v2328 = vpop.f32.mrb[0].mxu0
    %2329 = vdwg.mxu0
    %v2330 = vadd.f32 %v2256, %v2327
    %v2331 = vxor.u32 %v2330, 2147483648
    %v2332 = vmul.f32 %v2331, 1.442695
    %v2333 = vpow.pop %v2332
    %v2334 = vadd.f32 %v2333, 1.0
    %v2335 = vrcp.pop %v2334
    %v2336 = vmul.f32 1.0, %v2335
    %v2337 = vtanh.pop %v2330
    %2339 = vrot.lane.b32.xlu0 %v2141, 32
    %v2340 = vpop.permute.xlu0 %2339
    %v2342 = vmul.f32 %v2336, %v2340
    %2344 = vrot.lane.b32.xlu0 %v2337, 64
    %v2345 = vpop.permute.xlu0 %2344
    %v2347 = vmul.f32 %v2336, %v2345
    %2349 = vrot.lane.b32.xlu0 %v2347, 32
    %v2350 = vpop.permute.xlu0 %2349
    %v2352 = vadd.f32 %v2342, %v2350
    %v2353 = vtanh.pop %v2352
    %2355 = vrot.lane.b32.xlu0 %v2353, 64
    %v2356 = vpop.permute.xlu0 %2355
    %v2358 = vmul.f32 %v2336, %v2356
    %2359 = vrot.lane.b32.xlu0 %v2135, 96
    %v2360 = vpop.permute.xlu0 %2359
    %v2362 = vsel %vm2250, %v2358, %v2360
    %v2363 = vsel %vm2250, %v2352, %v2340
    %v2364 = vld [vmem:[#allocation3 + $0x8] sm:$0xc0]
    %2366 = vrot.lane.b32.xlu0 %v2254, 32
    %v2367 = vpop.permute.xlu0 %2366
    %v2368 = vsel %vm314, %v2367, 0
    %2370 = vmatprep.subr.mxu0 0.0
    %2371 = vmatpush1.msra.mxu0 %v1381
    %2372 = vmatprep.subr.mxu0 0.0
    %2373 = vmatpush1.msra.mxu0 %v1382
    %2374 = vmatprep.subr.mxu0 0.0
    %2375 = vmatpush1.msra.mxu0 %v1383
    %2376 = vmatprep.subr.mxu0 0.0
    %2377 = vmatpush1.msra.mxu0 %v1384
    %2378 = vmatprep.subr.mxu0 0.0
    %2379 = vmatpush1.msra.mxu0 0.0
    %2380 = vmatprep.subr.mxu0 0.0
    %2381 = vmatpush1.msra.mxu0 0.0
    %2382 = vmatprep.subr.mxu0 0.0
    %2383 = vmatpush1.msra.mxu0 0.0
    %2384 = vmatprep.subr.mxu0 0.0
    %2385 = vmatpush1.msra.mxu0 0.0
    %2386 = vmatprep.subr.mxu0 0.0
    %2387 = vmatpush1.msra.mxu0 0.0
    %2388 = vmatprep.subr.mxu0 0.0
    %2389 = vmatpush1.msra.mxu0 0.0
    %2390 = vmatprep.subr.mxu0 0.0
    %2391 = vmatpush1.msra.mxu0 0.0
    %2392 = vmatprep.subr.mxu0 0.0
    %2393 = vmatpush1.msra.mxu0 0.0
    %2394 = vmatprep.subr.mxu0 0.0
    %2395 = vmatpush1.msra.mxu0 0.0
    %2396 = vmatprep.subr.mxu0 0.0
    %2397 = vmatpush1.msra.mxu0 0.0
    %2398 = vmatprep.subr.mxu0 0.0
    %2399 = vmatpush1.msra.mxu0 0.0
    %2400 = vmatprep.subr.mxu0 0.0
    %2401 = vmatpush1.msra.mxu0 0.0
    %2402 = vmatprep.subr.mxu0 0.0
    %2403 = vmatpush1.msra.mxu0 0.0
    %2404 = vmatprep.subr.mxu0 0.0
    %2405 = vmatpush1.msra.mxu0 0.0
    %2406 = vmatprep.subr.mxu0 0.0
    %2407 = vmatpush1.msra.mxu0 0.0
    %2408 = vmatprep.subr.mxu0 0.0
    %2409 = vmatpush1.msra.mxu0 0.0
    %2410 = vmatprep.subr.mxu0 0.0
    %2411 = vmatpush1.msra.mxu0 0.0
    %2412 = vmatprep.subr.mxu0 0.0
    %2413 = vmatpush1.msra.mxu0 0.0
    %2414 = vmatprep.subr.mxu0 0.0
    %2415 = vmatpush1.msra.mxu0 0.0
    %2416 = vmatprep.subr.mxu0 0.0
    %2417 = vmatpush1.msra.mxu0 0.0
    %2418 = vmatprep.subr.mxu0 0.0
    %2419 = vmatpush1.msra.mxu0 0.0
    %2420 = vmatprep.subr.mxu0 0.0
    %2421 = vmatpush1.msra.mxu0 0.0
    %2422 = vmatprep.subr.mxu0 0.0
    %2423 = vmatpush1.msra.mxu0 0.0
    %2424 = vmatprep.subr.mxu0 0.0
    %2425 = vmatpush1.msra.mxu0 0.0
    %2426 = vmatprep.subr.mxu0 0.0
    %2427 = vmatpush1.msra.mxu0 0.0
    %2428 = vmatprep.subr.mxu0 0.0
    %2429 = vmatpush1.msra.mxu0 0.0
    %2430 = vmatprep.subr.mxu0 0.0
    %2431 = vmatpush1.msra.mxu0 0.0
    %2432 = vmatprep.subr.mxu0 0.0
    %2433 = vmatpush1.msra.mxu0 0.0
    %2434 = vmatprep.mubr.f32.mxu0 0.0
    %2435 = vmatmul.mubr.f32.gmra.mrb[0].mxu0 %v2368
    %v2436 = vpop.f32.mrb[0].mxu0
    %v2437 = vadd.f32 0.0, %v2436
    %v2438 = vpop.f32.mrb[0].mxu0
    %2439 = vdwg.mxu0
    %v2441 = vrot.slane %v2437, 2
    %v2443 = vadd.f32 %v2364, %v2441
    %v2444 = vxor.u32 %v2443, 2147483648
    %v2445 = vmul.f32 %v2444, 1.442695
    %v2446 = vpow.pop %v2445
    %v2447 = vadd.f32 %v2446, 1.0
    %v2448 = vrcp.pop %v2447
    %v2449 = vmul.f32 1.0, %v2448
    %v2450 = vtanh.pop %v2443
    %v2452 = vrot.slane %v2255, 2
    %v2454 = vmul.f32 %v2449, %v2452
    %2456 = vrot.lane.b32.xlu0 %v2450, 64
    %v2457 = vpop.permute.xlu0 %2456
    %v2459 = vmul.f32 %v2449, %v2457
    %2461 = vrot.lane.b32.xlu0 %v2459, 32
    %v2462 = vpop.permute.xlu0 %2461
    %v2464 = vadd.f32 %v2454, %v2462
    %v2465 = vtanh.pop %v2464
    %2467 = vrot.lane.b32.xlu0 %v2465, 64
    %v2468 = vpop.permute.xlu0 %2467
    %v2470 = vmul.f32 %v2449, %v2468
    %v2472 = vrot.slane %v2470, 6
    %2473 = vrot.lane.b32.xlu0 %v2472, 32
    %v2474 = vpop.permute.xlu0 %2473
    %v2477 = vsel %vm2129, %v2474, %v2367
    %v2479 = vrot.slane %v2464, 6
    %2480 = vrot.lane.b32.xlu0 %v2479, 96
    %v2481 = vpop.permute.xlu0 %2480
    %2483 = vrot.lane.b32.xlu0 %v2255, 96
    %v2484 = vpop.permute.xlu0 %2483
    %v2486 = vsel %vm2129, %v2481, %v2484
    %v2487 = vld [vmem:[#allocation3 + $0x10] sm:$0xc]
    %2489 = vrot.lane.b32.xlu0 %v2362, 32
    %v2490 = vpop.permute.xlu0 %2489
    %v2491 = vsel %vm314, %v2490, 0
    %2493 = vmatprep.subr.mxu0 0.0
    %2494 = vmatpush1.msra.mxu0 %v1262
    %2495 = vmatprep.subr.mxu0 0.0
    %2496 = vmatpush1.msra.mxu0 %v1263
    %2497 = vmatprep.subr.mxu0 0.0
    %2498 = vmatpush1.msra.mxu0 %v1264
    %2499 = vmatprep.subr.mxu0 0.0
    %2500 = vmatpush1.msra.mxu0 %v1265
    %2501 = vmatprep.subr.mxu0 0.0
    %2502 = vmatpush1.msra.mxu0 0.0
    %2503 = vmatprep.subr.mxu0 0.0
    %2504 = vmatpush1.msra.mxu0 0.0
    %2505 = vmatprep.subr.mxu0 0.0
    %2506 = vmatpush1.msra.mxu0 0.0
    %2507 = vmatprep.subr.mxu0 0.0
    %2508 = vmatpush1.msra.mxu0 0.0
    %2509 = vmatprep.subr.mxu0 0.0
    %2510 = vmatpush1.msra.mxu0 0.0
    %2511 = vmatprep.subr.mxu0 0.0
    %2512 = vmatpush1.msra.mxu0 0.0
    %2513 = vmatprep.subr.mxu0 0.0
    %2514 = vmatpush1.msra.mxu0 0.0
    %2515 = vmatprep.subr.mxu0 0.0
    %2516 = vmatpush1.msra.mxu0 0.0
    %2517 = vmatprep.subr.mxu0 0.0
    %2518 = vmatpush1.msra.mxu0 0.0
    %2519 = vmatprep.subr.mxu0 0.0
    %2520 = vmatpush1.msra.mxu0 0.0
    %2521 = vmatprep.subr.mxu0 0.0
    %2522 = vmatpush1.msra.mxu0 0.0
    %2523 = vmatprep.subr.mxu0 0.0
    %2524 = vmatpush1.msra.mxu0 0.0
    %2525 = vmatprep.subr.mxu0 0.0
    %2526 = vmatpush1.msra.mxu0 0.0
    %2527 = vmatprep.subr.mxu0 0.0
    %2528 = vmatpush1.msra.mxu0 0.0
    %2529 = vmatprep.subr.mxu0 0.0
    %2530 = vmatpush1.msra.mxu0 0.0
    %2531 = vmatprep.subr.mxu0 0.0
    %2532 = vmatpush1.msra.mxu0 0.0
    %2533 = vmatprep.subr.mxu0 0.0
    %2534 = vmatpush1.msra.mxu0 0.0
    %2535 = vmatprep.subr.mxu0 0.0
    %2536 = vmatpush1.msra.mxu0 0.0
    %2537 = vmatprep.subr.mxu0 0.0
    %2538 = vmatpush1.msra.mxu0 0.0
    %2539 = vmatprep.subr.mxu0 0.0
    %2540 = vmatpush1.msra.mxu0 0.0
    %2541 = vmatprep.subr.mxu0 0.0
    %2542 = vmatpush1.msra.mxu0 0.0
    %2543 = vmatprep.subr.mxu0 0.0
    %2544 = vmatpush1.msra.mxu0 0.0
    %2545 = vmatprep.subr.mxu0 0.0
    %2546 = vmatpush1.msra.mxu0 0.0
    %2547 = vmatprep.subr.mxu0 0.0
    %2548 = vmatpush1.msra.mxu0 0.0
    %2549 = vmatprep.subr.mxu0 0.0
    %2550 = vmatpush1.msra.mxu0 0.0
    %2551 = vmatprep.subr.mxu0 0.0
    %2552 = vmatpush1.msra.mxu0 0.0
    %2553 = vmatprep.subr.mxu0 0.0
    %2554 = vmatpush1.msra.mxu0 0.0
    %2555 = vmatprep.subr.mxu0 0.0
    %2556 = vmatpush1.msra.mxu0 0.0
    %2557 = vmatprep.mubr.f32.mxu0 0.0
    %2558 = vmatmul.mubr.f32.gmra.mrb[0].mxu0 %v2491
    %v2559 = vpop.f32.mrb[0].mxu0
    %v2560 = vadd.f32 0.0, %v2559
    %v2561 = vpop.f32.mrb[0].mxu0
    %2562 = vdwg.mxu0
    %v2564 = vrot.slane %v2560, 6
    %v2566 = vadd.f32 %v2487, %v2564
    %v2567 = vxor.u32 %v2566, 2147483648
    %v2568 = vmul.f32 %v2567, 1.442695
    %v2569 = vpow.pop %v2568
    %v2570 = vadd.f32 %v2569, 1.0
    %v2571 = vrcp.pop %v2570
    %v2572 = vmul.f32 1.0, %v2571
    %v2573 = vtanh.pop %v2566
    %v2575 = vrot.slane %v2363, 6
    %v2577 = vmul.f32 %v2572, %v2575
    %2579 = vrot.lane.b32.xlu0 %v2573, 64
    %v2580 = vpop.permute.xlu0 %2579
    %v2582 = vmul.f32 %v2572, %v2580
    %2584 = vrot.lane.b32.xlu0 %v2582, 32
    %v2585 = vpop.permute.xlu0 %2584
    %v2587 = vadd.f32 %v2577, %v2585
    %v2588 = vtanh.pop %v2587
    %2590 = vrot.lane.b32.xlu0 %v2588, 64
    %v2591 = vpop.permute.xlu0 %2590
    %v2593 = vmul.f32 %v2572, %v2591
    %v2595 = vrot.slane %v2593, 2
    %2596 = vrot.lane.b32.xlu0 %v2595, 32
    %v2597 = vpop.permute.xlu0 %2596
    %v2600 = vsel %vm2004, %v2597, %v2490
    %v2602 = vrot.slane %v2587, 2
    %2603 = vrot.lane.b32.xlu0 %v2602, 96
    %v2604 = vpop.permute.xlu0 %2603
    %2606 = vrot.lane.b32.xlu0 %v2363, 96
    %v2607 = vpop.permute.xlu0 %2606
    %v2609 = vsel %vm2004, %v2604, %v2607
    %v2610 = vld [vmem:[#allocation3 + $0x8] sm:$0x30]
    %v2612 = vsel %vm314, %v2477, 0
    %2614 = vmatprep.subr.mxu0 0.0
    %2615 = vmatpush1.msra.mxu0 %v1381
    %2616 = vmatprep.subr.mxu0 0.0
    %2617 = vmatpush1.msra.mxu0 %v1382
    %2618 = vmatprep.subr.mxu0 0.0
    %2619 = vmatpush1.msra.mxu0 %v1383
    %2620 = vmatprep.subr.mxu0 0.0
    %2621 = vmatpush1.msra.mxu0 %v1384
    %2622 = vmatprep.subr.mxu0 0.0
    %2623 = vmatpush1.msra.mxu0 0.0
    %2624 = vmatprep.subr.mxu0 0.0
    %2625 = vmatpush1.msra.mxu0 0.0
    %2626 = vmatprep.subr.mxu0 0.0
    %2627 = vmatpush1.msra.mxu0 0.0
    %2628 = vmatprep.subr.mxu0 0.0
    %2629 = vmatpush1.msra.mxu0 0.0
    %2630 = vmatprep.subr.mxu0 0.0
    %2631 = vmatpush1.msra.mxu0 0.0
    %2632 = vmatprep.subr.mxu0 0.0
    %2633 = vmatpush1.msra.mxu0 0.0
    %2634 = vmatprep.subr.mxu0 0.0
    %2635 = vmatpush1.msra.mxu0 0.0
    %2636 = vmatprep.subr.mxu0 0.0
    %2637 = vmatpush1.msra.mxu0 0.0
    %2638 = vmatprep.subr.mxu0 0.0
    %2639 = vmatpush1.msra.mxu0 0.0
    %2640 = vmatprep.subr.mxu0 0.0
    %2641 = vmatpush1.msra.mxu0 0.0
    %2642 = vmatprep.subr.mxu0 0.0
    %2643 = vmatpush1.msra.mxu0 0.0
    %2644 = vmatprep.subr.mxu0 0.0
    %2645 = vmatpush1.msra.mxu0 0.0
    %2646 = vmatprep.subr.mxu0 0.0
    %2647 = vmatpush1.msra.mxu0 0.0
    %2648 = vmatprep.subr.mxu0 0.0
    %2649 = vmatpush1.msra.mxu0 0.0
    %2650 = vmatprep.subr.mxu0 0.0
    %2651 = vmatpush1.msra.mxu0 0.0
    %2652 = vmatprep.subr.mxu0 0.0
    %2653 = vmatpush1.msra.mxu0 0.0
    %2654 = vmatprep.subr.mxu0 0.0
    %2655 = vmatpush1.msra.mxu0 0.0
    %2656 = vmatprep.subr.mxu0 0.0
    %2657 = vmatpush1.msra.mxu0 0.0
    %2658 = vmatprep.subr.mxu0 0.0
    %2659 = vmatpush1.msra.mxu0 0.0
    %2660 = vmatprep.subr.mxu0 0.0
    %2661 = vmatpush1.msra.mxu0 0.0
    %2662 = vmatprep.subr.mxu0 0.0
    %2663 = vmatpush1.msra.mxu0 0.0
    %2664 = vmatprep.subr.mxu0 0.0
    %2665 = vmatpush1.msra.mxu0 0.0
    %2666 = vmatprep.subr.mxu0 0.0
    %2667 = vmatpush1.msra.mxu0 0.0
    %2668 = vmatprep.subr.mxu0 0.0
    %2669 = vmatpush1.msra.mxu0 0.0
    %2670 = vmatprep.subr.mxu0 0.0
    %2671 = vmatpush1.msra.mxu0 0.0
    %2672 = vmatprep.subr.mxu0 0.0
    %2673 = vmatpush1.msra.mxu0 0.0
    %2674 = vmatprep.subr.mxu0 0.0
    %2675 = vmatpush1.msra.mxu0 0.0
    %2676 = vmatprep.subr.mxu0 0.0
    %2677 = vmatpush1.msra.mxu0 0.0
    %2678 = vmatprep.mubr.f32.mxu0 0.0
    %2679 = vmatmul.mubr.f32.gmra.mrb[0].mxu0 %v2612
    %v2680 = vpop.f32.mrb[0].mxu0
    %v2681 = vadd.f32 0.0, %v2680
    %v2682 = vpop.f32.mrb[0].mxu0
    %2683 = vdwg.mxu0
    %v2685 = vrot.slane %v2681, 4
    %v2687 = vadd.f32 %v2610, %v2685
    %v2688 = vxor.u32 %v2687, 2147483648
    %v2689 = vmul.f32 %v2688, 1.442695
    %v2690 = vpow.pop %v2689
    %v2691 = vadd.f32 %v2690, 1.0
    %v2692 = vrcp.pop %v2691
    %v2693 = vmul.f32 1.0, %v2692
    %v2694 = vtanh.pop %v2687
    %v2696 = vrot.slane %v2486, 4
    %2697 = vrot.lane.b32.xlu0 %v2696, 32
    %v2698 = vpop.permute.xlu0 %2697
    %v2700 = vmul.f32 %v2693, %v2698
    %2702 = vrot.lane.b32.xlu0 %v2694, 64
    %v2703 = vpop.permute.xlu0 %2702
    %v2705 = vmul.f32 %v2693, %v2703
    %2707 = vrot.lane.b32.xlu0 %v2705, 32
    %v2708 = vpop.permute.xlu0 %2707
    %v2710 = vadd.f32 %v2700, %v2708
    %v2711 = vtanh.pop %v2710
    %2713 = vrot.lane.b32.xlu0 %v2711, 64
    %v2714 = vpop.permute.xlu0 %2713
    %v2716 = vmul.f32 %v2693, %v2714
    %v2718 = vrot.slane %v2716, 4
    %2719 = vrot.lane.b32.xlu0 %v2718, 32
    %v2720 = vpop.permute.xlu0 %2719
    %v2722 = vsel %vm1879, %v2720, %v2477
    %v2724 = vrot.slane %v2710, 4
    %2725 = vrot.lane.b32.xlu0 %v2724, 96
    %v2726 = vpop.permute.xlu0 %2725
    %v2728 = vsel %vm1879, %v2726, %v2486
    %v2729 = vld [vmem:[#allocation3 + $0x10] sm:$0x30]
    %v2731 = vsel %vm314, %v2600, 0
    %2733 = vmatprep.subr.mxu0 0.0
    %2734 = vmatpush1.msra.mxu0 %v1262
    %2735 = vmatprep.subr.mxu0 0.0
    %2736 = vmatpush1.msra.mxu0 %v1263
    %2737 = vmatprep.subr.mxu0 0.0
    %2738 = vmatpush1.msra.mxu0 %v1264
    %2739 = vmatprep.subr.mxu0 0.0
    %2740 = vmatpush1.msra.mxu0 %v1265
    %2741 = vmatprep.subr.mxu0 0.0
    %2742 = vmatpush1.msra.mxu0 0.0
    %2743 = vmatprep.subr.mxu0 0.0
    %2744 = vmatpush1.msra.mxu0 0.0
    %2745 = vmatprep.subr.mxu0 0.0
    %2746 = vmatpush1.msra.mxu0 0.0
    %2747 = vmatprep.subr.mxu0 0.0
    %2748 = vmatpush1.msra.mxu0 0.0
    %2749 = vmatprep.subr.mxu0 0.0
    %2750 = vmatpush1.msra.mxu0 0.0
    %2751 = vmatprep.subr.mxu0 0.0
    %2752 = vmatpush1.msra.mxu0 0.0
    %2753 = vmatprep.subr.mxu0 0.0
    %2754 = vmatpush1.msra.mxu0 0.0
    %2755 = vmatprep.subr.mxu0 0.0
    %2756 = vmatpush1.msra.mxu0 0.0
    %2757 = vmatprep.subr.mxu0 0.0
    %2758 = vmatpush1.msra.mxu0 0.0
    %2759 = vmatprep.subr.mxu0 0.0
    %2760 = vmatpush1.msra.mxu0 0.0
    %2761 = vmatprep.subr.mxu0 0.0
    %2762 = vmatpush1.msra.mxu0 0.0
    %2763 = vmatprep.subr.mxu0 0.0
    %2764 = vmatpush1.msra.mxu0 0.0
    %2765 = vmatprep.subr.mxu0 0.0
    %2766 = vmatpush1.msra.mxu0 0.0
    %2767 = vmatprep.subr.mxu0 0.0
    %2768 = vmatpush1.msra.mxu0 0.0
    %2769 = vmatprep.subr.mxu0 0.0
    %2770 = vmatpush1.msra.mxu0 0.0
    %2771 = vmatprep.subr.mxu0 0.0
    %2772 = vmatpush1.msra.mxu0 0.0
    %2773 = vmatprep.subr.mxu0 0.0
    %2774 = vmatpush1.msra.mxu0 0.0
    %2775 = vmatprep.subr.mxu0 0.0
    %2776 = vmatpush1.msra.mxu0 0.0
    %2777 = vmatprep.subr.mxu0 0.0
    %2778 = vmatpush1.msra.mxu0 0.0
    %2779 = vmatprep.subr.mxu0 0.0
    %2780 = vmatpush1.msra.mxu0 0.0
    %2781 = vmatprep.subr.mxu0 0.0
    %2782 = vmatpush1.msra.mxu0 0.0
    %2783 = vmatprep.subr.mxu0 0.0
    %2784 = vmatpush1.msra.mxu0 0.0
    %2785 = vmatprep.subr.mxu0 0.0
    %2786 = vmatpush1.msra.mxu0 0.0
    %2787 = vmatprep.subr.mxu0 0.0
    %2788 = vmatpush1.msra.mxu0 0.0
    %2789 = vmatprep.subr.mxu0 0.0
    %2790 = vmatpush1.msra.mxu0 0.0
    %2791 = vmatprep.subr.mxu0 0.0
    %2792 = vmatpush1.msra.mxu0 0.0
    %2793 = vmatprep.subr.mxu0 0.0
    %2794 = vmatpush1.msra.mxu0 0.0
    %2795 = vmatprep.subr.mxu0 0.0
    %2796 = vmatpush1.msra.mxu0 0.0
    %2797 = vmatprep.mubr.f32.mxu0 0.0
    %2798 = vmatmul.mubr.f32.gmra.mrb[0].mxu0 %v2731
    %v2799 = vpop.f32.mrb[0].mxu0
    %v2800 = vadd.f32 0.0, %v2799
    %v2801 = vpop.f32.mrb[0].mxu0
    %2802 = vdwg.mxu0
    %v2804 = vrot.slane %v2800, 4
    %v2806 = vadd.f32 %v2729, %v2804
    %v2807 = vxor.u32 %v2806, 2147483648
    %v2808 = vmul.f32 %v2807, 1.442695
    %v2809 = vpow.pop %v2808
    %v2810 = vadd.f32 %v2809, 1.0
    %v2811 = vrcp.pop %v2810
    %v2812 = vmul.f32 1.0, %v2811
    %v2813 = vtanh.pop %v2806
    %v2815 = vrot.slane %v2609, 4
    %2816 = vrot.lane.b32.xlu0 %v2815, 32
    %v2817 = vpop.permute.xlu0 %2816
    %v2819 = vmul.f32 %v2812, %v2817
    %2821 = vrot.lane.b32.xlu0 %v2813, 64
    %v2822 = vpop.permute.xlu0 %2821
    %v2824 = vmul.f32 %v2812, %v2822
    %2826 = vrot.lane.b32.xlu0 %v2824, 32
    %v2827 = vpop.permute.xlu0 %2826
    %v2829 = vadd.f32 %v2819, %v2827
    %v2830 = vtanh.pop %v2829
    %2832 = vrot.lane.b32.xlu0 %v2830, 64
    %v2833 = vpop.permute.xlu0 %2832
    %v2835 = vmul.f32 %v2812, %v2833
    %v2837 = vrot.slane %v2835, 4
    %2838 = vrot.lane.b32.xlu0 %v2837, 32
    %v2839 = vpop.permute.xlu0 %2838
    %v2841 = vsel %vm1754, %v2839, %v2600
    %v2843 = vrot.slane %v2829, 4
    %2844 = vrot.lane.b32.xlu0 %v2843, 96
    %v2845 = vpop.permute.xlu0 %2844
    %v2847 = vsel %vm1754, %v2845, %v2609
    %v2848 = vld [vmem:[#allocation3 + $0x8] sm:$0xc]
    %v2850 = vsel %vm314, %v2722, 0
    %2852 = vmatprep.subr.mxu0 0.0
    %2853 = vmatpush1.msra.mxu0 %v1381
    %2854 = vmatprep.subr.mxu0 0.0
    %2855 = vmatpush1.msra.mxu0 %v1382
    %2856 = vmatprep.subr.mxu0 0.0
    %2857 = vmatpush1.msra.mxu0 %v1383
    %2858 = vmatprep.subr.mxu0 0.0
    %2859 = vmatpush1.msra.mxu0 %v1384
    %2860 = vmatprep.subr.mxu0 0.0
    %2861 = vmatpush1.msra.mxu0 0.0
    %2862 = vmatprep.subr.mxu0 0.0
    %2863 = vmatpush1.msra.mxu0 0.0
    %2864 = vmatprep.subr.mxu0 0.0
    %2865 = vmatpush1.msra.mxu0 0.0
    %2866 = vmatprep.subr.mxu0 0.0
    %2867 = vmatpush1.msra.mxu0 0.0
    %2868 = vmatprep.subr.mxu0 0.0
    %2869 = vmatpush1.msra.mxu0 0.0
    %2870 = vmatprep.subr.mxu0 0.0
    %2871 = vmatpush1.msra.mxu0 0.0
    %2872 = vmatprep.subr.mxu0 0.0
    %2873 = vmatpush1.msra.mxu0 0.0
    %2874 = vmatprep.subr.mxu0 0.0
    %2875 = vmatpush1.msra.mxu0 0.0
    %2876 = vmatprep.subr.mxu0 0.0
    %2877 = vmatpush1.msra.mxu0 0.0
    %2878 = vmatprep.subr.mxu0 0.0
    %2879 = vmatpush1.msra.mxu0 0.0
    %2880 = vmatprep.subr.mxu0 0.0
    %2881 = vmatpush1.msra.mxu0 0.0
    %2882 = vmatprep.subr.mxu0 0.0
    %2883 = vmatpush1.msra.mxu0 0.0
    %2884 = vmatprep.subr.mxu0 0.0
    %2885 = vmatpush1.msra.mxu0 0.0
    %2886 = vmatprep.subr.mxu0 0.0
    %2887 = vmatpush1.msra.mxu0 0.0
    %2888 = vmatprep.subr.mxu0 0.0
    %2889 = vmatpush1.msra.mxu0 0.0
    %2890 = vmatprep.subr.mxu0 0.0
    %2891 = vmatpush1.msra.mxu0 0.0
    %2892 = vmatprep.subr.mxu0 0.0
    %2893 = vmatpush1.msra.mxu0 0.0
    %2894 = vmatprep.subr.mxu0 0.0
    %2895 = vmatpush1.msra.mxu0 0.0
    %2896 = vmatprep.subr.mxu0 0.0
    %2897 = vmatpush1.msra.mxu0 0.0
    %2898 = vmatprep.subr.mxu0 0.0
    %2899 = vmatpush1.msra.mxu0 0.0
    %2900 = vmatprep.subr.mxu0 0.0
    %2901 = vmatpush1.msra.mxu0 0.0
    %2902 = vmatprep.subr.mxu0 0.0
    %2903 = vmatpush1.msra.mxu0 0.0
    %2904 = vmatprep.subr.mxu0 0.0
    %2905 = vmatpush1.msra.mxu0 0.0
    %2906 = vmatprep.subr.mxu0 0.0
    %2907 = vmatpush1.msra.mxu0 0.0
    %2908 = vmatprep.subr.mxu0 0.0
    %2909 = vmatpush1.msra.mxu0 0.0
    %2910 = vmatprep.subr.mxu0 0.0
    %2911 = vmatpush1.msra.mxu0 0.0
    %2912 = vmatprep.subr.mxu0 0.0
    %2913 = vmatpush1.msra.mxu0 0.0
    %2914 = vmatprep.subr.mxu0 0.0
    %2915 = vmatpush1.msra.mxu0 0.0
    %2916 = vmatprep.mubr.f32.mxu0 0.0
    %2917 = vmatmul.mubr.f32.gmra.mrb[0].mxu0 %v2850
    %v2918 = vpop.f32.mrb[0].mxu0
    %v2919 = vadd.f32 0.0, %v2918
    %v2920 = vpop.f32.mrb[0].mxu0
    %2921 = vdwg.mxu0
    %v2923 = vrot.slane %v2919, 6
    %v2925 = vadd.f32 %v2848, %v2923
    %v2926 = vxor.u32 %v2925, 2147483648
    %v2927 = vmul.f32 %v2926, 1.442695
    %v2928 = vpow.pop %v2927
    %v2929 = vadd.f32 %v2928, 1.0
    %v2930 = vrcp.pop %v2929
    %v2931 = vmul.f32 1.0, %v2930
    %v2932 = vtanh.pop %v2925
    %v2934 = vrot.slane %v2728, 6
    %2935 = vrot.lane.b32.xlu0 %v2934, 32
    %v2936 = vpop.permute.xlu0 %2935
    %v2938 = vmul.f32 %v2931, %v2936
    %2940 = vrot.lane.b32.xlu0 %v2932, 64
    %v2941 = vpop.permute.xlu0 %2940
    %v2943 = vmul.f32 %v2931, %v2941
    %2945 = vrot.lane.b32.xlu0 %v2943, 32
    %v2946 = vpop.permute.xlu0 %2945
    %v2948 = vadd.f32 %v2938, %v2946
    %v2949 = vtanh.pop %v2948
    %2951 = vrot.lane.b32.xlu0 %v2949, 64
    %v2952 = vpop.permute.xlu0 %2951
    %v2954 = vmul.f32 %v2931, %v2952
    %v2956 = vrot.slane %v2954, 2
    %2957 = vrot.lane.b32.xlu0 %v2956, 32
    %v2958 = vpop.permute.xlu0 %2957
    %v2960 = vsel %vm1625, %v2958, %v2722
    %v2962 = vrot.slane %v2948, 2
    %2963 = vrot.lane.b32.xlu0 %v2962, 96
    %v2964 = vpop.permute.xlu0 %2963
    %v2966 = vsel %vm1625, %v2964, %v2728
    %v2967 = vld [vmem:[#allocation3 + $0x10] sm:$0xc0]
    %v2969 = vsel %vm314, %v2841, 0
    %2971 = vmatprep.subr.mxu0 0.0
    %2972 = vmatpush1.msra.mxu0 %v1262
    %2973 = vmatprep.subr.mxu0 0.0
    %2974 = vmatpush1.msra.mxu0 %v1263
    %2975 = vmatprep.subr.mxu0 0.0
    %2976 = vmatpush1.msra.mxu0 %v1264
    %2977 = vmatprep.subr.mxu0 0.0
    %2978 = vmatpush1.msra.mxu0 %v1265
    %2979 = vmatprep.subr.mxu0 0.0
    %2980 = vmatpush1.msra.mxu0 0.0
    %2981 = vmatprep.subr.mxu0 0.0
    %2982 = vmatpush1.msra.mxu0 0.0
    %2983 = vmatprep.subr.mxu0 0.0
    %2984 = vmatpush1.msra.mxu0 0.0
    %2985 = vmatprep.subr.mxu0 0.0
    %2986 = vmatpush1.msra.mxu0 0.0
    %2987 = vmatprep.subr.mxu0 0.0
    %2988 = vmatpush1.msra.mxu0 0.0
    %2989 = vmatprep.subr.mxu0 0.0
    %2990 = vmatpush1.msra.mxu0 0.0
    %2991 = vmatprep.subr.mxu0 0.0
    %2992 = vmatpush1.msra.mxu0 0.0
    %2993 = vmatprep.subr.mxu0 0.0
    %2994 = vmatpush1.msra.mxu0 0.0
    %2995 = vmatprep.subr.mxu0 0.0
    %2996 = vmatpush1.msra.mxu0 0.0
    %2997 = vmatprep.subr.mxu0 0.0
    %2998 = vmatpush1.msra.mxu0 0.0
    %2999 = vmatprep.subr.mxu0 0.0
    %3000 = vmatpush1.msra.mxu0 0.0
    %3001 = vmatprep.subr.mxu0 0.0
    %3002 = vmatpush1.msra.mxu0 0.0
    %3003 = vmatprep.subr.mxu0 0.0
    %3004 = vmatpush1.msra.mxu0 0.0
    %3005 = vmatprep.subr.mxu0 0.0
    %3006 = vmatpush1.msra.mxu0 0.0
    %3007 = vmatprep.subr.mxu0 0.0
    %3008 = vmatpush1.msra.mxu0 0.0
    %3009 = vmatprep.subr.mxu0 0.0
    %3010 = vmatpush1.msra.mxu0 0.0
    %3011 = vmatprep.subr.mxu0 0.0
    %3012 = vmatpush1.msra.mxu0 0.0
    %3013 = vmatprep.subr.mxu0 0.0
    %3014 = vmatpush1.msra.mxu0 0.0
    %3015 = vmatprep.subr.mxu0 0.0
    %3016 = vmatpush1.msra.mxu0 0.0
    %3017 = vmatprep.subr.mxu0 0.0
    %3018 = vmatpush1.msra.mxu0 0.0
    %3019 = vmatprep.subr.mxu0 0.0
    %3020 = vmatpush1.msra.mxu0 0.0
    %3021 = vmatprep.subr.mxu0 0.0
    %3022 = vmatpush1.msra.mxu0 0.0
    %3023 = vmatprep.subr.mxu0 0.0
    %3024 = vmatpush1.msra.mxu0 0.0
    %3025 = vmatprep.subr.mxu0 0.0
    %3026 = vmatpush1.msra.mxu0 0.0
    %3027 = vmatprep.subr.mxu0 0.0
    %3028 = vmatpush1.msra.mxu0 0.0
    %3029 = vmatprep.subr.mxu0 0.0
    %3030 = vmatpush1.msra.mxu0 0.0
    %3031 = vmatprep.subr.mxu0 0.0
    %3032 = vmatpush1.msra.mxu0 0.0
    %3033 = vmatprep.subr.mxu0 0.0
    %3034 = vmatpush1.msra.mxu0 0.0
    %3035 = vmatprep.mubr.f32.mxu0 0.0
    %3036 = vmatmul.mubr.f32.gmra.mrb[0].mxu0 %v2969
    %v3037 = vpop.f32.mrb[0].mxu0
    %v3038 = vadd.f32 0.0, %v3037
    %v3039 = vpop.f32.mrb[0].mxu0
    %3040 = vdwg.mxu0
    %v3042 = vrot.slane %v3038, 2
    %v3044 = vadd.f32 %v2967, %v3042
    %v3045 = vxor.u32 %v3044, 2147483648
    %v3046 = vmul.f32 %v3045, 1.442695
    %v3047 = vpow.pop %v3046
    %v3048 = vadd.f32 %v3047, 1.0
    %v3049 = vrcp.pop %v3048
    %v3050 = vmul.f32 1.0, %v3049
    %v3051 = vtanh.pop %v3044
    %v3053 = vrot.slane %v2847, 2
    %3054 = vrot.lane.b32.xlu0 %v3053, 32
    %v3055 = vpop.permute.xlu0 %3054
    %v3057 = vmul.f32 %v3050, %v3055
    %3059 = vrot.lane.b32.xlu0 %v3051, 64
    %v3060 = vpop.permute.xlu0 %3059
    %v3062 = vmul.f32 %v3050, %v3060
    %3064 = vrot.lane.b32.xlu0 %v3062, 32
    %v3065 = vpop.permute.xlu0 %3064
    %v3067 = vadd.f32 %v3057, %v3065
    %v3068 = vtanh.pop %v3067
    %3070 = vrot.lane.b32.xlu0 %v3068, 64
    %v3071 = vpop.permute.xlu0 %3070
    %v3073 = vmul.f32 %v3050, %v3071
    %v3075 = vrot.slane %v3073, 6
    %3076 = vrot.lane.b32.xlu0 %v3075, 32
    %v3077 = vpop.permute.xlu0 %3076
    %v3079 = vsel %vm1496, %v3077, %v2841
    %v3080 = vld [vmem:[#allocation3 + $0x8] sm:$0x3]
    %v3082 = vsel %vm314, %v2960, 0
    %3084 = vmatprep.subr.mxu0 0.0
    %3085 = vmatpush1.msra.mxu0 %v1381
    %3086 = vmatprep.subr.mxu0 0.0
    %3087 = vmatpush1.msra.mxu0 %v1382
    %3088 = vmatprep.subr.mxu0 0.0
    %3089 = vmatpush1.msra.mxu0 %v1383
    %3090 = vmatprep.subr.mxu0 0.0
    %3091 = vmatpush1.msra.mxu0 %v1384
    %3092 = vmatprep.subr.mxu0 0.0
    %3093 = vmatpush1.msra.mxu0 0.0
    %3094 = vmatprep.subr.mxu0 0.0
    %3095 = vmatpush1.msra.mxu0 0.0
    %3096 = vmatprep.subr.mxu0 0.0
    %3097 = vmatpush1.msra.mxu0 0.0
    %3098 = vmatprep.subr.mxu0 0.0
    %3099 = vmatpush1.msra.mxu0 0.0
    %3100 = vmatprep.subr.mxu0 0.0
    %3101 = vmatpush1.msra.mxu0 0.0
    %3102 = vmatprep.subr.mxu0 0.0
    %3103 = vmatpush1.msra.mxu0 0.0
    %3104 = vmatprep.subr.mxu0 0.0
    %3105 = vmatpush1.msra.mxu0 0.0
    %3106 = vmatprep.subr.mxu0 0.0
    %3107 = vmatpush1.msra.mxu0 0.0
    %3108 = vmatprep.subr.mxu0 0.0
    %3109 = vmatpush1.msra.mxu0 0.0
    %3110 = vmatprep.subr.mxu0 0.0
    %3111 = vmatpush1.msra.mxu0 0.0
    %3112 = vmatprep.subr.mxu0 0.0
    %3113 = vmatpush1.msra.mxu0 0.0
    %3114 = vmatprep.subr.mxu0 0.0
    %3115 = vmatpush1.msra.mxu0 0.0
    %3116 = vmatprep.subr.mxu0 0.0
    %3117 = vmatpush1.msra.mxu0 0.0
    %3118 = vmatprep.subr.mxu0 0.0
    %3119 = vmatpush1.msra.mxu0 0.0
    %3120 = vmatprep.subr.mxu0 0.0
    %3121 = vmatpush1.msra.mxu0 0.0
    %3122 = vmatprep.subr.mxu0 0.0
    %3123 = vmatpush1.msra.mxu0 0.0
    %3124 = vmatprep.subr.mxu0 0.0
    %3125 = vmatpush1.msra.mxu0 0.0
    %3126 = vmatprep.subr.mxu0 0.0
    %3127 = vmatpush1.msra.mxu0 0.0
    %3128 = vmatprep.subr.mxu0 0.0
    %3129 = vmatpush1.msra.mxu0 0.0
    %3130 = vmatprep.subr.mxu0 0.0
    %3131 = vmatpush1.msra.mxu0 0.0
    %3132 = vmatprep.subr.mxu0 0.0
    %3133 = vmatpush1.msra.mxu0 0.0
    %3134 = vmatprep.subr.mxu0 0.0
    %3135 = vmatpush1.msra.mxu0 0.0
    %3136 = vmatprep.subr.mxu0 0.0
    %3137 = vmatpush1.msra.mxu0 0.0
    %3138 = vmatprep.subr.mxu0 0.0
    %3139 = vmatpush1.msra.mxu0 0.0
    %3140 = vmatprep.subr.mxu0 0.0
    %3141 = vmatpush1.msra.mxu0 0.0
    %3142 = vmatprep.subr.mxu0 0.0
    %3143 = vmatpush1.msra.mxu0 0.0
    %3144 = vmatprep.subr.mxu0 0.0
    %3145 = vmatpush1.msra.mxu0 0.0
    %3146 = vmatprep.subr.mxu0 0.0
    %3147 = vmatpush1.msra.mxu0 0.0
    %3148 = vmatprep.mubr.f32.mxu0 0.0
    %3149 = vmatmul.mubr.f32.gmra.mrb[0].mxu0 %v3082
    %v3150 = vpop.f32.mrb[0].mxu0
    %v3151 = vadd.f32 0.0, %v3150
    %v3152 = vpop.f32.mrb[0].mxu0
    %3153 = vdwg.mxu0
    %v3154 = vadd.f32 %v3080, %v3151
    %v3155 = vxor.u32 %v3154, 2147483648
    %v3156 = vmul.f32 %v3155, 1.442695
    %v3157 = vpow.pop %v3156
    %v3158 = vadd.f32 %v3157, 1.0
    %v3159 = vrcp.pop %v3158
    %v3160 = vmul.f32 1.0, %v3159
    %v3161 = vtanh.pop %v3154
    %3163 = vrot.lane.b32.xlu0 %v2966, 32
    %v3164 = vpop.permute.xlu0 %3163
    %v3166 = vmul.f32 %v3160, %v3164
    %3168 = vrot.lane.b32.xlu0 %v3161, 64
    %v3169 = vpop.permute.xlu0 %3168
    %v3171 = vmul.f32 %v3160, %v3169
    %3173 = vrot.lane.b32.xlu0 %v3171, 32
    %v3174 = vpop.permute.xlu0 %3173
    %v3176 = vadd.f32 %v3166, %v3174
    %v3177 = vtanh.pop %v3176
    %3179 = vrot.lane.b32.xlu0 %v3177, 64
    %v3180 = vpop.permute.xlu0 %3179
    %v3182 = vmul.f32 %v3160, %v3180
    %3183 = vrot.lane.b32.xlu0 %v2960, 96
    %v3184 = vpop.permute.xlu0 %3183
    %v3186 = vsel %vm1373, %v3182, %v3184
    %v3187 = vld [vmem:[%s10] sm:$0xff]
    %v3188 = vld [vmem:[%s10 + $0x8] sm:$0xff]
    %v3189 = vld [vmem:[%s10 + $0x10] sm:$0xff]
    %v3190 = vld [vmem:[%s10 + $0x18] sm:$0xff]
    %v3191 = vld [vmem:[%s10 + $0x20] sm:$0xff]
    %v3192 = vld [vmem:[%s10 + $0x28] sm:$0xff]
    %v3193 = vld [vmem:[%s10 + $0x30] sm:$0xff]
    %v3194 = vld [vmem:[%s10 + $0x38] sm:$0xff]
    %3196 = vrot.lane.b32.xlu0 %v3186, 32
    %v3197 = vpop.permute.xlu0 %3196
    %v3198 = vsel %vm314, %v3197, 0
    %3200 = vmatprep.subr.mxu0 0.0
    %3201 = vmatpush1.msra.mxu0 %v3191
    %3202 = vmatprep.subr.mxu0 0.0
    %3203 = vmatpush1.msra.mxu0 %v3192
    %3204 = vmatprep.subr.mxu0 0.0
    %3205 = vmatpush1.msra.mxu0 %v3193
    %3206 = vmatprep.subr.mxu0 0.0
    %3207 = vmatpush1.msra.mxu0 %v3194
    %3208 = vmatprep.subr.mxu0 0.0
    %3209 = vmatpush1.msra.mxu0 0.0
    %3210 = vmatprep.subr.mxu0 0.0
    %3211 = vmatpush1.msra.mxu0 0.0
    %3212 = vmatprep.subr.mxu0 0.0
    %3213 = vmatpush1.msra.mxu0 0.0
    %3214 = vmatprep.subr.mxu0 0.0
    %3215 = vmatpush1.msra.mxu0 0.0
    %3216 = vmatprep.subr.mxu0 0.0
    %3217 = vmatpush1.msra.mxu0 0.0
    %3218 = vmatprep.subr.mxu0 0.0
    %3219 = vmatpush1.msra.mxu0 0.0
    %3220 = vmatprep.subr.mxu0 0.0
    %3221 = vmatpush1.msra.mxu0 0.0
    %3222 = vmatprep.subr.mxu0 0.0
    %3223 = vmatpush1.msra.mxu0 0.0
    %3224 = vmatprep.subr.mxu0 0.0
    %3225 = vmatpush1.msra.mxu0 0.0
    %3226 = vmatprep.subr.mxu0 0.0
    %3227 = vmatpush1.msra.mxu0 0.0
    %3228 = vmatprep.subr.mxu0 0.0
    %3229 = vmatpush1.msra.mxu0 0.0
    %3230 = vmatprep.subr.mxu0 0.0
    %3231 = vmatpush1.msra.mxu0 0.0
    %3232 = vmatprep.subr.mxu0 0.0
    %3233 = vmatpush1.msra.mxu0 0.0
    %3234 = vmatprep.subr.mxu0 0.0
    %3235 = vmatpush1.msra.mxu0 0.0
    %3236 = vmatprep.subr.mxu0 0.0
    %3237 = vmatpush1.msra.mxu0 0.0
    %3238 = vmatprep.subr.mxu0 0.0
    %3239 = vmatpush1.msra.mxu0 0.0
    %3240 = vmatprep.subr.mxu0 0.0
    %3241 = vmatpush1.msra.mxu0 0.0
    %3242 = vmatprep.subr.mxu0 0.0
    %3243 = vmatpush1.msra.mxu0 0.0
    %3244 = vmatprep.subr.mxu0 0.0
    %3245 = vmatpush1.msra.mxu0 0.0
    %3246 = vmatprep.subr.mxu0 0.0
    %3247 = vmatpush1.msra.mxu0 0.0
    %3248 = vmatprep.subr.mxu0 0.0
    %3249 = vmatpush1.msra.mxu0 0.0
    %3250 = vmatprep.subr.mxu0 0.0
    %3251 = vmatpush1.msra.mxu0 0.0
    %3252 = vmatprep.subr.mxu0 0.0
    %3253 = vmatpush1.msra.mxu0 0.0
    %3254 = vmatprep.subr.mxu0 0.0
    %3255 = vmatpush1.msra.mxu0 0.0
    %3256 = vmatprep.subr.mxu0 0.0
    %3257 = vmatpush1.msra.mxu0 0.0
    %3258 = vmatprep.subr.mxu0 0.0
    %3259 = vmatpush1.msra.mxu0 0.0
    %3260 = vmatprep.subr.mxu0 0.0
    %3261 = vmatpush1.msra.mxu0 0.0
    %3262 = vmatprep.subr.mxu0 0.0
    %3263 = vmatpush1.msra.mxu0 0.0
    %3264 = vmatprep.mubr.f32.mxu0 0.0
    %3265 = vmatmul.mubr.f32.gmra.mrb[0].mxu0 %v3198
    %v3266 = vpop.f32.mrb[0].mxu0
    %v3267 = vadd.f32 0.0, %v3266
    %v3268 = vpop.f32.mrb[0].mxu0
    %3269 = vdwg.mxu0
    %v3271 = vsel %vm314, %v3079, 0
    %3273 = vmatprep.subr.mxu0 0.0
    %3274 = vmatpush1.msra.mxu0 %v3187
    %3275 = vmatprep.subr.mxu0 0.0
    %3276 = vmatpush1.msra.mxu0 %v3188
    %3277 = vmatprep.subr.mxu0 0.0
    %3278 = vmatpush1.msra.mxu0 %v3189
    %3279 = vmatprep.subr.mxu0 0.0
    %3280 = vmatpush1.msra.mxu0 %v3190
    %3281 = vmatprep.subr.mxu0 0.0
    %3282 = vmatpush1.msra.mxu0 0.0
    %3283 = vmatprep.subr.mxu0 0.0
    %3284 = vmatpush1.msra.mxu0 0.0
    %3285 = vmatprep.subr.mxu0 0.0
    %3286 = vmatpush1.msra.mxu0 0.0
    %3287 = vmatprep.subr.mxu0 0.0
    %3288 = vmatpush1.msra.mxu0 0.0
    %3289 = vmatprep.subr.mxu0 0.0
    %3290 = vmatpush1.msra.mxu0 0.0
    %3291 = vmatprep.subr.mxu0 0.0
    %3292 = vmatpush1.msra.mxu0 0.0
    %3293 = vmatprep.subr.mxu0 0.0
    %3294 = vmatpush1.msra.mxu0 0.0
    %3295 = vmatprep.subr.mxu0 0.0
    %3296 = vmatpush1.msra.mxu0 0.0
    %3297 = vmatprep.subr.mxu0 0.0
    %3298 = vmatpush1.msra.mxu0 0.0
    %3299 = vmatprep.subr.mxu0 0.0
    %3300 = vmatpush1.msra.mxu0 0.0
    %3301 = vmatprep.subr.mxu0 0.0
    %3302 = vmatpush1.msra.mxu0 0.0
    %3303 = vmatprep.subr.mxu0 0.0
    %3304 = vmatpush1.msra.mxu0 0.0
    %3305 = vmatprep.subr.mxu0 0.0
    %3306 = vmatpush1.msra.mxu0 0.0
    %3307 = vmatprep.subr.mxu0 0.0
    %3308 = vmatpush1.msra.mxu0 0.0
    %3309 = vmatprep.subr.mxu0 0.0
    %3310 = vmatpush1.msra.mxu0 0.0
    %3311 = vmatprep.subr.mxu0 0.0
    %3312 = vmatpush1.msra.mxu0 0.0
    %3313 = vmatprep.subr.mxu0 0.0
    %3314 = vmatpush1.msra.mxu0 0.0
    %3315 = vmatprep.subr.mxu0 0.0
    %3316 = vmatpush1.msra.mxu0 0.0
    %3317 = vmatprep.subr.mxu0 0.0
    %3318 = vmatpush1.msra.mxu0 0.0
    %3319 = vmatprep.subr.mxu0 0.0
    %3320 = vmatpush1.msra.mxu0 0.0
    %3321 = vmatprep.subr.mxu0 0.0
    %3322 = vmatpush1.msra.mxu0 0.0
    %3323 = vmatprep.subr.mxu0 0.0
    %3324 = vmatpush1.msra.mxu0 0.0
    %3325 = vmatprep.subr.mxu0 0.0
    %3326 = vmatpush1.msra.mxu0 0.0
    %3327 = vmatprep.subr.mxu0 0.0
    %3328 = vmatpush1.msra.mxu0 0.0
    %3329 = vmatprep.subr.mxu0 0.0
    %3330 = vmatpush1.msra.mxu0 0.0
    %3331 = vmatprep.subr.mxu0 0.0
    %3332 = vmatpush1.msra.mxu0 0.0
    %3333 = vmatprep.subr.mxu0 0.0
    %3334 = vmatpush1.msra.mxu0 0.0
    %3335 = vmatprep.subr.mxu0 0.0
    %3336 = vmatpush1.msra.mxu0 0.0
    %3337 = vmatprep.mubr.f32.mxu0 0.0
    %3338 = vmatmul.mubr.f32.gmra.mrb[0].mxu0 %v3271
    %v3339 = vpop.f32.mrb[0].mxu0
    %v3340 = vadd.f32 %v3267, %v3339
    %v3341 = vpop.f32.mrb[0].mxu0
    %3342 = vdwg.mxu0
    %v3343 = vld [vmem:[%s11] sm:$0x1]
    %v3345 = vlaneseq
    %v3346 = vshrl.u32 %v3345, 7
    %v3347 = vsub.s32 0, %v3346
    %v3348 = vrot.slane %v3343, %v3347
    %v3350 = vadd.f32 %v3340, %v3348
    %v3351 = vtanh.pop %v3350
    %vm3352 = vcmask 17408
    %v3353 = vsel %vm3352, %v3351, -inf
    %3354 = vmax.xlane.f32.xlu0 %v3353
    %v3355 = vpop.xlane.xlu0 %3354
    %v3356 = vsub.f32 %v3351, %v3355
    %v3357 = vmul.f32 %v3356, 1.442695
    %v3358 = vpow.pop %v3357
    %v3359 = vsel %vm3352, %v3358, 0.0
    %3360 = vadd.xlane.f32.xlu0 %v3359
    %v3361 = vpop.xlane.xlu0 %3360
    %v3362 = vrcp.pop %v3361
    %v3363 = vmul.f32 %v3358, %v3362
    %3364 = vst.msk [vmem:[#allocation10] sm:$0x3] %vm3352, %v3363
    // Predicated region
    $region62: #{tpu_custom_call.1} parent=1 // pred_check
      _
    $region63: #{tpu_custom_call.1} parent=1 // pred_check_branch
      %3366 = sbr.rel (0) target = $region65
    $region64: #{tpu_custom_call.1} parent=1 // pred_region
      %s3368 = ssub.s32 32, 32
      %3369 = vsyncadd [#allocation6], %s3368
      %s3371 = sshll.u32 [#allocation10], 4
      %s3372 = int_to_ptr.vmem [resolvable:$true] %s3371
      %3374 = dma.vmem_to_hbm [thread:$0]  %s3372, 32, %s12, [#allocation6]
    $region65: #{tpu_custom_call.1} parent=1 // pred_fallthru
      _
    // Predicated region
    $region66: #{tpu_custom_call.1} parent=1 // pred_check
      _
    $region67: #{tpu_custom_call.1} parent=1 // pred_check_branch
      %3376 = sbr.rel (0) target = $region69
    $region68: #{tpu_custom_call.1} parent=1 // pred_region
      %3377 = dma.done [#allocation6], 32
    $region69: #{tpu_custom_call.1} parent=1 // pred_fallthru
      _
    %3378 = vsyncpa [#allocation5], 1
    %3379 = vsyncpa [#allocation8], 1
    %3380 = vsyncpa [#allocation6], 1

</llo_original>
